<compile_context>
chip_gen: v5e
topology: v5e:2x2
jax: 0.10.0
libtpu: 0.0.40
codegen_flags: <defaults>
</compile_context>

<pallas_src>
import functools

import jax
import jax.numpy as jnp
from jax.experimental import pallas as pl
from jax.experimental.pallas import tpu as pltpu


# ----------------------------- helpers ------------------------------------ #

def _round_up(x, m):
    return (x + m - 1) // m * m


def _pick_tile_m(M, K, N):
    """Largest M tile (<=512, multiple of 8) whose double-buffered bf16 x/out tiles
    stay within ~8 MiB, so the plan fits v7x (64 MiB VMEM) and v5e scoped defaults."""
    m8 = _round_up(M, 8)
    if m8 <= 512:
        return m8
    budget = 8 * 1024 * 1024
    per_row = 2 * 2 * (K + N)          # bf16 x-row + bf16 out-row, double buffered
    tm = (budget // per_row) // 128 * 128
    return int(max(128, min(512, tm)))


# ------------------- Pallas kernel 1: tiled matmul+bias+act ---------------- #

def _mm_bias_act_kernel(x_ref, w_ref, b_ref, o_ref, *, act):
    # bf16 MXU matmul with f32 accumulation; epilogue stays in f32.
    y = jnp.dot(x_ref[...], w_ref[...], preferred_element_type=jnp.float32)
    y = y + b_ref[...]
    if act == "relu":
        y = jnp.maximum(y, 0.0)
    elif act == "elu":
        # exp(y)-1 == expm1(y) far below the bf16 storage precision of the activations.
        y = jnp.where(y > 0.0, y, jnp.exp(jnp.minimum(y, 0.0)) - 1.0)
    o_ref[...] = y.astype(o_ref.dtype)


def matmul_bias_act(x, w, b, act="none", out_dtype=jnp.bfloat16):
    """y = act(x @ w + b).  x: [M, K], w: [K, N], b: [N].  Tiled & pipelined over M."""
    M, K = x.shape
    K2, N = w.shape
    assert K == K2, (x.shape, w.shape)

    xb = x.astype(jnp.bfloat16)
    wb = w.astype(jnp.bfloat16)
    bb = b.reshape(1, N).astype(jnp.float32)

    tm = _pick_tile_m(M, K, N)
    Mp = _round_up(M, tm)
    if Mp != M:
        xb = jnp.pad(xb, ((0, Mp - M), (0, 0)))

    out = pl.pallas_call(
        functools.partial(_mm_bias_act_kernel, act=act),
        out_shape=jax.ShapeDtypeStruct((Mp, N), out_dtype),
        grid=(Mp // tm,),
        in_specs=[
            pl.BlockSpec((tm, K), lambda i: (i, 0)),   # pipelined over M
            pl.BlockSpec((K, N), lambda i: (0, 0)),    # weight: DMA'd once, resident
            pl.BlockSpec((1, N), lambda i: (0, 0)),    # bias: resident
        ],
        out_specs=pl.BlockSpec((tm, N), lambda i: (i, 0)),
        compiler_params=pltpu.CompilerParams(
            dimension_semantics=("parallel",),         # v7x: shard M tiles over 2 TCs
            vmem_limit_bytes=48 * 1024 * 1024,
        ),
    )(xb, wb, bb)
    return out[:M] if Mp != M else out


# --------------- Pallas kernel 2: fused dense heads + sampling ------------- #

def _head_kernel(gumbel_ref, flat_ref, tflat_ref,
                 fcw_ref, fcb_ref, chw_ref, chb_ref, cow_ref, cob_ref,
                 ahw_ref, ahb_ref, aow_ref, aob_ref, tfw_ref, tfb_ref,
                 feat_ref, value_ref, action_ref, probs_ref):
    f32 = jnp.float32
    bf16 = jnp.bfloat16

    def dense(x_bf16, w_ref, b_ref, relu):
        y = jnp.dot(x_bf16, w_ref[...], preferred_element_type=f32) + b_ref[...]
        if relu:
            y = jnp.maximum(y, 0.0)
        return y

    # ---- PPO feature + critic + actor (everything stays in VMEM/vregs) ----
    flat = flat_ref[...]                                           # bf16 [B, fc_in]
    feat_pi = dense(flat, fcw_ref, fcb_ref, True)                  # f32  [B, F]
    feat_pi_b = feat_pi.astype(bf16)

    hc = dense(feat_pi_b, chw_ref, chb_ref, True).astype(bf16)
    value_ref[...] = dense(hc, cow_ref, cob_ref, False)            # [B, 2] ext/int heads

    ha = dense(feat_pi_b, ahw_ref, ahb_ref, True).astype(bf16)
    logits = dense(ha, aow_ref, aob_ref, False)                    # f32 [B, A]

    # ---- softmax epilogue (f32) ----
    m = jnp.max(logits, axis=-1, keepdims=True)
    e = jnp.exp(logits - m)
    s = jnp.sum(e, axis=-1, keepdims=True)
    probs = e / s
    probs_ref[...] = probs

    # ---- Categorical sample via Gumbel-max (noise supplied from host RNG), one-hot ----
    B, A = logits.shape
    pert = logits + gumbel_ref[...]                                # f32 [B, A]
    col = jax.lax.broadcasted_iota(jnp.int32, (B, A), 1)
    mx = jnp.max(pert, axis=-1, keepdims=True)
    first = jnp.min(jnp.where(pert >= mx, col, A), axis=-1, keepdims=True)
    action_ref[...] = (col == first).astype(action_ref.dtype)

    # ---- SND (VICReg) target-model feature head ----
    feat_ref[...] = dense(tflat_ref[...], tfw_ref, tfb_ref, False)


def fused_heads(params, flat, tflat, gumbel):
    B, _ = flat.shape
    F = params["fc_w"].shape[1]
    A = params["actor_o_w"].shape[1]
    assert A <= 128, "action_dim must fit in one vreg lane group"

    bf = lambda a: a.astype(jnp.bfloat16)
    rb = lambda a: a.reshape(1, -1).astype(jnp.float32)

    inputs = [
        gumbel.astype(jnp.float32),
        bf(flat), bf(tflat),
        bf(params["fc_w"]), rb(params["fc_b"]),
        bf(params["critic_h_w"]), rb(params["critic_h_b"]),
        bf(params["critic_o_w"]), rb(params["critic_o_b"]),
        bf(params["actor_h_w"]), rb(params["actor_h_b"]),
        bf(params["actor_o_w"]), rb(params["actor_o_b"]),
        bf(params["tfc_w"]), rb(params["tfc_b"]),
    ]

    def full(shape):
        return pl.BlockSpec(shape, lambda i: (0, 0))

    in_specs = [full(x.shape) for x in inputs]

    out_shape = (
        jax.ShapeDtypeStruct((B, F), jnp.float32),    # SND target features
        jax.ShapeDtypeStruct((B, 2), jnp.float32),    # value (ext / int)
        jax.ShapeDtypeStruct((B, A), jnp.float32),    # one-hot sampled action
        jax.ShapeDtypeStruct((B, A), jnp.float32),    # probs
    )
    out_specs = (full((B, F)), full((B, 2)), full((B, A)), full((B, A)))

    return pl.pallas_call(
        _head_kernel,
        out_shape=out_shape,
        grid=(1,),
        in_specs=in_specs,
        out_specs=out_specs,
        compiler_params=pltpu.CompilerParams(
            dimension_semantics=("arbitrary",),
            vmem_limit_bytes=48 * 1024 * 1024,
        ),
    )(*inputs)


# ------------------------------- JAX glue --------------------------------- #

def im2col_3x3_s2_p1(x_nhwc):
    """3x3 / stride 2 / pad 1 patch extraction (bf16). Returns ([B*Ho*Wo, 9*C], dims)."""
    B, H, W, C = x_nhwc.shape
    xp = jnp.pad(x_nhwc, ((0, 0), (1, 1), (1, 1), (0, 0)))
    Hp, Wp = H + 2, W + 2
    Ho = (Hp - 3) // 2 + 1
    Wo = (Wp - 3) // 2 + 1
    cols = []
    for i in range(3):
        for j in range(3):
            cols.append(xp[:, i:i + 2 * (Ho - 1) + 1:2, j:j + 2 * (Wo - 1) + 1:2, :])
    patches = jnp.stack(cols, axis=3)            # [B, Ho, Wo, 9, C]
    return patches.reshape(B * Ho * Wo, 9 * C), (B, Ho, Wo)


def _conv_trunk(x_nchw, params, prefix, act):
    x = jnp.transpose(x_nchw, (0, 2, 3, 1)).astype(jnp.bfloat16)   # NCHW -> NHWC, bf16
    for i in range(4):
        cols, (b, ho, wo) = im2col_3x3_s2_p1(x)
        y = matmul_bias_act(cols, params[f"{prefix}{i}_w"], params[f"{prefix}{i}_b"],
                            act, out_dtype=jnp.bfloat16)
        x = y.reshape(b, ho, wo, -1)
    return x.reshape(x.shape[0], -1)             # [B, 128 * (H/16) * (W/16)]


def _init_linear(key, k_in, n_out):
    kw, kb = jax.random.split(key)
    scale = 1.0 / jnp.sqrt(jnp.float32(k_in))
    w = jax.random.uniform(kw, (k_in, n_out), jnp.float32, -scale, scale)
    b = jax.random.uniform(kb, (n_out,), jnp.float32, -scale, scale)
    return w, b


def init_params(key, c_in, h, w, action_dim, feature_dim):
    assert h % 16 == 0 and w % 16 == 0, "4 stride-2 convs need spatial % 16 == 0"
    params = {}
    k = key

    def nxt():
        nonlocal k
        k, sub = jax.random.split(k)
        return sub

    # PPO conv trunk (ReLU): Cin -> 32 -> 64 -> 64 -> 128
    for i, (ci, co) in enumerate([(c_in, 32), (32, 64), (64, 64), (64, 128)]):
        params[f"conv{i}_w"], params[f"conv{i}_b"] = _init_linear(nxt(), 9 * ci, co)
    fc_in = 128 * (h // 16) * (w // 16)
    params["fc_w"], params["fc_b"] = _init_linear(nxt(), fc_in, feature_dim)
    # critic: Linear -> ReLU -> 2 heads (ext / int)
    params["critic_h_w"], params["critic_h_b"] = _init_linear(nxt(), feature_dim, feature_dim)
    params["critic_o_w"], params["critic_o_b"] = _init_linear(nxt(), feature_dim, 2)
    # actor: Linear -> ReLU -> discrete head
    params["actor_h_w"], params["actor_h_b"] = _init_linear(nxt(), feature_dim, feature_dim)
    params["actor_o_w"], params["actor_o_b"] = _init_linear(nxt(), feature_dim, action_dim)
    # SND (VICReg) target conv trunk (ELU), input is the single preprocessed frame
    for i, (ci, co) in enumerate([(1, 32), (32, 64), (64, 64), (64, 128)]):
        params[f"tconv{i}_w"], params[f"tconv{i}_b"] = _init_linear(nxt(), 9 * ci, co)
    params["tfc_w"], params["tfc_b"] = _init_linear(nxt(), fc_in, feature_dim)
    return params


def cast_params_for_inference(params):
    """One-time cast outside the jitted forward: bf16 weights, f32 biases."""
    return {k: (v.astype(jnp.bfloat16) if k.endswith("_w") else v.astype(jnp.float32))
            for k, v in params.items()}


def ppo_atari_snd_forward(params, state, rng_key):
    """state: [B, C, H, W] float32 (NCHW), rng_key: jax PRNG key for action sampling.
    Returns (features, value, action, probs)."""
    B = state.shape[0]
    A = params["actor_o_w"].shape[1]

    # The two trunks are independent chains of pallas_calls sharing only `state`;
    # XLA may overlap their DMA/compute.
    flat = _conv_trunk(state, params, "conv", "relu")                 # [B, fc_in] bf16
    tflat = _conv_trunk(state[:, 0:1, :, :], params, "tconv", "elu")  # [B, fc_in] bf16

    # Categorical(probs) sampling == argmax(logits + Gumbel noise); noise generated
    # outside the kernel (works on TPU and under interpret mode).
    gumbel = jax.random.gumbel(rng_key, (B, A), jnp.float32)

    features, value, action, probs = fused_heads(params, flat, tflat, gumbel)

    return (jax.lax.stop_gradient(features),
            jax.lax.stop_gradient(value),
            action,
            jax.lax.stop_gradient(probs))


# --------------------------------- main ------------------------------------ #

if __name__ == "__main__":
    B, C, H, W = 2, 4, 16, 16
    action_dim = 4
    feature_dim = 512

    key = jax.random.PRNGKey(0)
    kparams, kstate, ksample = jax.random.split(key, 3)
    params = cast_params_for_inference(init_params(kparams, C, H, W, action_dim, feature_dim))
    state = jax.random.uniform(kstate, (B, C, H, W), jnp.float32)

    fwd = jax.jit(ppo_atari_snd_forward)
    features, value, action, probs = fwd(params, state, ksample)
    jax.block_until_ready((features, value, action, probs))

    assert features.shape == (B, feature_dim)
    assert value.shape == (B, 2)                         # ext / int value heads
    assert action.shape == (B, action_dim)               # one-hot sampled discrete action
    assert probs.shape == (B, action_dim)
    assert bool(jnp.all(jnp.isfinite(features)))
    assert bool(jnp.all(jnp.isfinite(value)))
    assert bool(jnp.allclose(jnp.sum(probs, axis=-1), 1.0, atol=1e-4))
    assert bool(jnp.allclose(jnp.sum(action, axis=-1), 1.0, atol=1e-6))   # valid one-hot

    print("KERNEL_OK")
</pallas_src>

<mosaic_0001>
module attributes {stable_mosaic.version = 11 : i64} {
  func.func @_mm_bias_act_kernel(%arg0: i32, %arg1: memref<128x9xbf16, #tpu.memory_space<vmem>>, %arg2: memref<9x32xbf16, #tpu.memory_space<vmem>>, %arg3: memref<1x32xf32, #tpu.memory_space<vmem>>, %arg4: memref<128x32xbf16, #tpu.memory_space<vmem>>) attributes {dimension_semantics = [#tpu.dimension_semantics<parallel>], iteration_bounds = array<i64: 1>, scalar_prefetch = 0 : i64, scratch_operands = 0 : i64, tpu.core_type = #tpu.core_type<tc>, window_params = [{transform_indices = @transform_0, window_bounds = array<i64: 128, 9>}, {pipeline_mode = #tpu.pipeline_mode<synchronous>, transform_indices = @transform_1, window_bounds = array<i64: 9, 32>}, {pipeline_mode = #tpu.pipeline_mode<synchronous>, transform_indices = @transform_2, window_bounds = array<i64: 1, 32>}, {transform_indices = @transform_3, window_bounds = array<i64: 128, 32>}]} {
    %c0 = arith.constant 0 : index
    %c0_0 = arith.constant 0 : index
    %0 = vector.load %arg1[%c0, %c0_0] : memref<128x9xbf16, #tpu.memory_space<vmem>>, vector<128x9xbf16>
    %c0_1 = arith.constant 0 : index
    %c0_2 = arith.constant 0 : index
    %1 = vector.load %arg2[%c0_1, %c0_2] : memref<9x32xbf16, #tpu.memory_space<vmem>>, vector<9x32xbf16>
    %cst = arith.constant dense<0.000000e+00> : vector<128x32xf32>
    %2 = tpu.matmul %0, %1, %cst {dimension_numbers = #tpu.dot_dimension_numbers<[1], [0], [0], [1], [0, 0, 1, 1], [], []>} : vector<128x9xbf16>, vector<9x32xbf16>, vector<128x32xf32> -> vector<128x32xf32>
    %c0_3 = arith.constant 0 : index
    %c0_4 = arith.constant 0 : index
    %3 = vector.load %arg3[%c0_3, %c0_4] : memref<1x32xf32, #tpu.memory_space<vmem>>, vector<1x32xf32>
    %4 = vector.broadcast %3 : vector<1x32xf32> to vector<128x32xf32>
    %5 = arith.addf %2, %4 : vector<128x32xf32>
    %cst_5 = arith.constant 0.000000e+00 : f32
    %6 = vector.broadcast %cst_5 : f32 to vector<128x32xf32>
    %7 = arith.cmpf ogt, %5, %6 : vector<128x32xf32>
    %cst_6 = arith.constant 0.000000e+00 : f32
    %8 = vector.broadcast %cst_6 : f32 to vector<128x32xf32>
    %9 = arith.minimumf %5, %8 : vector<128x32xf32>
    %10 = math.exp %9 : vector<128x32xf32>
    %cst_7 = arith.constant 1.000000e+00 : f32
    %11 = vector.broadcast %cst_7 : f32 to vector<128x32xf32>
    %12 = arith.subf %10, %11 : vector<128x32xf32>
    %13 = arith.select %7, %5, %12 : vector<128x32xi1>, vector<128x32xf32>
    %14 = arith.truncf %13 : vector<128x32xf32> to vector<128x32xbf16>
    %c0_8 = arith.constant 0 : index
    %c0_9 = arith.constant 0 : index
    %15 = vector.load %arg4[%c0_8, %c0_9] : memref<128x32xbf16, #tpu.memory_space<vmem>>, vector<128x32xbf16>
    tpu.vector_store %arg4[%c0_8, %c0_9], %14 {strides = array<i32>} : memref<128x32xbf16, #tpu.memory_space<vmem>>, vector<128x32xbf16>,
    return
  }
  func.func @transform_0(%arg0: i32) -> (i32, i32) {
    %c0_i32 = arith.constant 0 : i32
    %c0_i32_0 = arith.constant 0 : i32
    return %arg0, %c0_i32 : i32, i32
  }
  func.func @transform_1(%arg0: i32) -> (i32, i32) {
    %c0_i32 = arith.constant 0 : i32
    %c0_i32_0 = arith.constant 0 : i32
    %c0_i32_1 = arith.constant 0 : i32
    return %c0_i32, %c0_i32_0 : i32, i32
  }
  func.func @transform_2(%arg0: i32) -> (i32, i32) {
    %c0_i32 = arith.constant 0 : i32
    %c0_i32_0 = arith.constant 0 : i32
    %c0_i32_1 = arith.constant 0 : i32
    return %c0_i32, %c0_i32_0 : i32, i32
  }
  func.func @transform_3(%arg0: i32) -> (i32, i32) {
    %c0_i32 = arith.constant 0 : i32
    %c0_i32_0 = arith.constant 0 : i32
    return %arg0, %c0_i32 : i32, i32
  }
}

module attributes {stable_mosaic.version = 11 : i64} {
  func.func @_mm_bias_act_kernel(%arg0: i32, %arg1: memref<32x288xbf16, #tpu.memory_space<vmem>>, %arg2: memref<288x64xbf16, #tpu.memory_space<vmem>>, %arg3: memref<1x64xf32, #tpu.memory_space<vmem>>, %arg4: memref<32x64xbf16, #tpu.memory_space<vmem>>) attributes {dimension_semantics = [#tpu.dimension_semantics<parallel>], iteration_bounds = array<i64: 1>, scalar_prefetch = 0 : i64, scratch_operands = 0 : i64, tpu.core_type = #tpu.core_type<tc>, window_params = [{transform_indices = @transform_0, window_bounds = array<i64: 32, 288>}, {pipeline_mode = #tpu.pipeline_mode<synchronous>, transform_indices = @transform_1, window_bounds = array<i64: 288, 64>}, {pipeline_mode = #tpu.pipeline_mode<synchronous>, transform_indices = @transform_2, window_bounds = array<i64: 1, 64>}, {transform_indices = @transform_3, window_bounds = array<i64: 32, 64>}]} {
    %c0 = arith.constant 0 : index
    %c0_0 = arith.constant 0 : index
    %0 = vector.load %arg1[%c0, %c0_0] : memref<32x288xbf16, #tpu.memory_space<vmem>>, vector<32x288xbf16>
    %c0_1 = arith.constant 0 : index
    %c0_2 = arith.constant 0 : index
    %1 = vector.load %arg2[%c0_1, %c0_2] : memref<288x64xbf16, #tpu.memory_space<vmem>>, vector<288x64xbf16>
    %cst = arith.constant dense<0.000000e+00> : vector<32x64xf32>
    %2 = tpu.matmul %0, %1, %cst {dimension_numbers = #tpu.dot_dimension_numbers<[1], [0], [0], [1], [0, 0, 1, 1], [], []>} : vector<32x288xbf16>, vector<288x64xbf16>, vector<32x64xf32> -> vector<32x64xf32>
    %c0_3 = arith.constant 0 : index
    %c0_4 = arith.constant 0 : index
    %3 = vector.load %arg3[%c0_3, %c0_4] : memref<1x64xf32, #tpu.memory_space<vmem>>, vector<1x64xf32>
    %4 = vector.broadcast %3 : vector<1x64xf32> to vector<32x64xf32>
    %5 = arith.addf %2, %4 : vector<32x64xf32>
    %cst_5 = arith.constant 0.000000e+00 : f32
    %6 = vector.broadcast %cst_5 : f32 to vector<32x64xf32>
    %7 = arith.cmpf ogt, %5, %6 : vector<32x64xf32>
    %cst_6 = arith.constant 0.000000e+00 : f32
    %8 = vector.broadcast %cst_6 : f32 to vector<32x64xf32>
    %9 = arith.minimumf %5, %8 : vector<32x64xf32>
    %10 = math.exp %9 : vector<32x64xf32>
    %cst_7 = arith.constant 1.000000e+00 : f32
    %11 = vector.broadcast %cst_7 : f32 to vector<32x64xf32>
    %12 = arith.subf %10, %11 : vector<32x64xf32>
    %13 = arith.select %7, %5, %12 : vector<32x64xi1>, vector<32x64xf32>
    %14 = arith.truncf %13 : vector<32x64xf32> to vector<32x64xbf16>
    %c0_8 = arith.constant 0 : index
    %c0_9 = arith.constant 0 : index
    %15 = vector.load %arg4[%c0_8, %c0_9] : memref<32x64xbf16, #tpu.memory_space<vmem>>, vector<32x64xbf16>
    tpu.vector_store %arg4[%c0_8, %c0_9], %14 {strides = array<i32>} : memref<32x64xbf16, #tpu.memory_space<vmem>>, vector<32x64xbf16>,
    return
  }
  func.func @transform_0(%arg0: i32) -> (i32, i32) {
    %c0_i32 = arith.constant 0 : i32
    %c0_i32_0 = arith.constant 0 : i32
    return %arg0, %c0_i32 : i32, i32
  }
  func.func @transform_1(%arg0: i32) -> (i32, i32) {
    %c0_i32 = arith.constant 0 : i32
    %c0_i32_0 = arith.constant 0 : i32
    %c0_i32_1 = arith.constant 0 : i32
    return %c0_i32, %c0_i32_0 : i32, i32
  }
  func.func @transform_2(%arg0: i32) -> (i32, i32) {
    %c0_i32 = arith.constant 0 : i32
    %c0_i32_0 = arith.constant 0 : i32
    %c0_i32_1 = arith.constant 0 : i32
    return %c0_i32, %c0_i32_0 : i32, i32
  }
  func.func @transform_3(%arg0: i32) -> (i32, i32) {
    %c0_i32 = arith.constant 0 : i32
    %c0_i32_0 = arith.constant 0 : i32
    return %arg0, %c0_i32 : i32, i32
  }
}

module attributes {stable_mosaic.version = 11 : i64} {
  func.func @_mm_bias_act_kernel(%arg0: i32, %arg1: memref<8x576xbf16, #tpu.memory_space<vmem>>, %arg2: memref<576x64xbf16, #tpu.memory_space<vmem>>, %arg3: memref<1x64xf32, #tpu.memory_space<vmem>>, %arg4: memref<8x64xbf16, #tpu.memory_space<vmem>>) attributes {dimension_semantics = [#tpu.dimension_semantics<parallel>], iteration_bounds = array<i64: 1>, scalar_prefetch = 0 : i64, scratch_operands = 0 : i64, tpu.core_type = #tpu.core_type<tc>, window_params = [{transform_indices = @transform_0, window_bounds = array<i64: 8, 576>}, {pipeline_mode = #tpu.pipeline_mode<synchronous>, transform_indices = @transform_1, window_bounds = array<i64: 576, 64>}, {pipeline_mode = #tpu.pipeline_mode<synchronous>, transform_indices = @transform_2, window_bounds = array<i64: 1, 64>}, {transform_indices = @transform_3, window_bounds = array<i64: 8, 64>}]} {
    %c0 = arith.constant 0 : index
    %c0_0 = arith.constant 0 : index
    %0 = vector.load %arg1[%c0, %c0_0] : memref<8x576xbf16, #tpu.memory_space<vmem>>, vector<8x576xbf16>
    %c0_1 = arith.constant 0 : index
    %c0_2 = arith.constant 0 : index
    %1 = vector.load %arg2[%c0_1, %c0_2] : memref<576x64xbf16, #tpu.memory_space<vmem>>, vector<576x64xbf16>
    %cst = arith.constant dense<0.000000e+00> : vector<8x64xf32>
    %2 = tpu.matmul %0, %1, %cst {dimension_numbers = #tpu.dot_dimension_numbers<[1], [0], [0], [1], [0, 0, 1, 1], [], []>} : vector<8x576xbf16>, vector<576x64xbf16>, vector<8x64xf32> -> vector<8x64xf32>
    %c0_3 = arith.constant 0 : index
    %c0_4 = arith.constant 0 : index
    %3 = vector.load %arg3[%c0_3, %c0_4] : memref<1x64xf32, #tpu.memory_space<vmem>>, vector<1x64xf32>
    %4 = vector.broadcast %3 : vector<1x64xf32> to vector<8x64xf32>
    %5 = arith.addf %2, %4 : vector<8x64xf32>
    %cst_5 = arith.constant 0.000000e+00 : f32
    %6 = vector.broadcast %cst_5 : f32 to vector<8x64xf32>
    %7 = arith.cmpf ogt, %5, %6 : vector<8x64xf32>
    %cst_6 = arith.constant 0.000000e+00 : f32
    %8 = vector.broadcast %cst_6 : f32 to vector<8x64xf32>
    %9 = arith.minimumf %5, %8 : vector<8x64xf32>
    %10 = math.exp %9 : vector<8x64xf32>
    %cst_7 = arith.constant 1.000000e+00 : f32
    %11 = vector.broadcast %cst_7 : f32 to vector<8x64xf32>
    %12 = arith.subf %10, %11 : vector<8x64xf32>
    %13 = arith.select %7, %5, %12 : vector<8x64xi1>, vector<8x64xf32>
    %14 = arith.truncf %13 : vector<8x64xf32> to vector<8x64xbf16>
    %c0_8 = arith.constant 0 : index
    %c0_9 = arith.constant 0 : index
    %15 = vector.load %arg4[%c0_8, %c0_9] : memref<8x64xbf16, #tpu.memory_space<vmem>>, vector<8x64xbf16>
    tpu.vector_store %arg4[%c0_8, %c0_9], %14 {strides = array<i32>} : memref<8x64xbf16, #tpu.memory_space<vmem>>, vector<8x64xbf16>,
    return
  }
  func.func @transform_0(%arg0: i32) -> (i32, i32) {
    %c0_i32 = arith.constant 0 : i32
    %c0_i32_0 = arith.constant 0 : i32
    return %arg0, %c0_i32 : i32, i32
  }
  func.func @transform_1(%arg0: i32) -> (i32, i32) {
    %c0_i32 = arith.constant 0 : i32
    %c0_i32_0 = arith.constant 0 : i32
    %c0_i32_1 = arith.constant 0 : i32
    return %c0_i32, %c0_i32_0 : i32, i32
  }
  func.func @transform_2(%arg0: i32) -> (i32, i32) {
    %c0_i32 = arith.constant 0 : i32
    %c0_i32_0 = arith.constant 0 : i32
    %c0_i32_1 = arith.constant 0 : i32
    return %c0_i32, %c0_i32_0 : i32, i32
  }
  func.func @transform_3(%arg0: i32) -> (i32, i32) {
    %c0_i32 = arith.constant 0 : i32
    %c0_i32_0 = arith.constant 0 : i32
    return %arg0, %c0_i32 : i32, i32
  }
}

module attributes {stable_mosaic.version = 11 : i64} {
  func.func @_mm_bias_act_kernel(%arg0: i32, %arg1: memref<8x576xbf16, #tpu.memory_space<vmem>>, %arg2: memref<576x128xbf16, #tpu.memory_space<vmem>>, %arg3: memref<1x128xf32, #tpu.memory_space<vmem>>, %arg4: memref<8x128xbf16, #tpu.memory_space<vmem>>) attributes {dimension_semantics = [#tpu.dimension_semantics<parallel>], iteration_bounds = array<i64: 1>, scalar_prefetch = 0 : i64, scratch_operands = 0 : i64, tpu.core_type = #tpu.core_type<tc>, window_params = [{transform_indices = @transform_0, window_bounds = array<i64: 8, 576>}, {pipeline_mode = #tpu.pipeline_mode<synchronous>, transform_indices = @transform_1, window_bounds = array<i64: 576, 128>}, {pipeline_mode = #tpu.pipeline_mode<synchronous>, transform_indices = @transform_2, window_bounds = array<i64: 1, 128>}, {transform_indices = @transform_3, window_bounds = array<i64: 8, 128>}]} {
    %c0 = arith.constant 0 : index
    %c0_0 = arith.constant 0 : index
    %0 = vector.load %arg1[%c0, %c0_0] : memref<8x576xbf16, #tpu.memory_space<vmem>>, vector<8x576xbf16>
    %c0_1 = arith.constant 0 : index
    %c0_2 = arith.constant 0 : index
    %1 = vector.load %arg2[%c0_1, %c0_2] : memref<576x128xbf16, #tpu.memory_space<vmem>>, vector<576x128xbf16>
    %cst = arith.constant dense<0.000000e+00> : vector<8x128xf32>
    %2 = tpu.matmul %0, %1, %cst {dimension_numbers = #tpu.dot_dimension_numbers<[1], [0], [0], [1], [0, 0, 1, 1], [], []>} : vector<8x576xbf16>, vector<576x128xbf16>, vector<8x128xf32> -> vector<8x128xf32>
    %c0_3 = arith.constant 0 : index
    %c0_4 = arith.constant 0 : index
    %3 = vector.load %arg3[%c0_3, %c0_4] : memref<1x128xf32, #tpu.memory_space<vmem>>, vector<1x128xf32>
    %4 = vector.broadcast %3 : vector<1x128xf32> to vector<8x128xf32>
    %5 = arith.addf %2, %4 : vector<8x128xf32>
    %cst_5 = arith.constant 0.000000e+00 : f32
    %6 = vector.broadcast %cst_5 : f32 to vector<8x128xf32>
    %7 = arith.cmpf ogt, %5, %6 : vector<8x128xf32>
    %cst_6 = arith.constant 0.000000e+00 : f32
    %8 = vector.broadcast %cst_6 : f32 to vector<8x128xf32>
    %9 = arith.minimumf %5, %8 : vector<8x128xf32>
    %10 = math.exp %9 : vector<8x128xf32>
    %cst_7 = arith.constant 1.000000e+00 : f32
    %11 = vector.broadcast %cst_7 : f32 to vector<8x128xf32>
    %12 = arith.subf %10, %11 : vector<8x128xf32>
    %13 = arith.select %7, %5, %12 : vector<8x128xi1>, vector<8x128xf32>
    %14 = arith.truncf %13 : vector<8x128xf32> to vector<8x128xbf16>
    %c0_8 = arith.constant 0 : index
    %c0_9 = arith.constant 0 : index
    %15 = vector.load %arg4[%c0_8, %c0_9] : memref<8x128xbf16, #tpu.memory_space<vmem>>, vector<8x128xbf16>
    tpu.vector_store %arg4[%c0_8, %c0_9], %14 {strides = array<i32>} : memref<8x128xbf16, #tpu.memory_space<vmem>>, vector<8x128xbf16>,
    return
  }
  func.func @transform_0(%arg0: i32) -> (i32, i32) {
    %c0_i32 = arith.constant 0 : i32
    %c0_i32_0 = arith.constant 0 : i32
    return %arg0, %c0_i32 : i32, i32
  }
  func.func @transform_1(%arg0: i32) -> (i32, i32) {
    %c0_i32 = arith.constant 0 : i32
    %c0_i32_0 = arith.constant 0 : i32
    %c0_i32_1 = arith.constant 0 : i32
    return %c0_i32, %c0_i32_0 : i32, i32
  }
  func.func @transform_2(%arg0: i32) -> (i32, i32) {
    %c0_i32 = arith.constant 0 : i32
    %c0_i32_0 = arith.constant 0 : i32
    %c0_i32_1 = arith.constant 0 : i32
    return %c0_i32, %c0_i32_0 : i32, i32
  }
  func.func @transform_3(%arg0: i32) -> (i32, i32) {
    %c0_i32 = arith.constant 0 : i32
    %c0_i32_0 = arith.constant 0 : i32
    return %arg0, %c0_i32 : i32, i32
  }
}

module attributes {stable_mosaic.version = 11 : i64} {
  func.func @_mm_bias_act_kernel(%arg0: i32, %arg1: memref<128x36xbf16, #tpu.memory_space<vmem>>, %arg2: memref<36x32xbf16, #tpu.memory_space<vmem>>, %arg3: memref<1x32xf32, #tpu.memory_space<vmem>>, %arg4: memref<128x32xbf16, #tpu.memory_space<vmem>>) attributes {dimension_semantics = [#tpu.dimension_semantics<parallel>], iteration_bounds = array<i64: 1>, scalar_prefetch = 0 : i64, scratch_operands = 0 : i64, tpu.core_type = #tpu.core_type<tc>, window_params = [{transform_indices = @transform_0, window_bounds = array<i64: 128, 36>}, {pipeline_mode = #tpu.pipeline_mode<synchronous>, transform_indices = @transform_1, window_bounds = array<i64: 36, 32>}, {pipeline_mode = #tpu.pipeline_mode<synchronous>, transform_indices = @transform_2, window_bounds = array<i64: 1, 32>}, {transform_indices = @transform_3, window_bounds = array<i64: 128, 32>}]} {
    %c0 = arith.constant 0 : index
    %c0_0 = arith.constant 0 : index
    %0 = vector.load %arg1[%c0, %c0_0] : memref<128x36xbf16, #tpu.memory_space<vmem>>, vector<128x36xbf16>
    %c0_1 = arith.constant 0 : index
    %c0_2 = arith.constant 0 : index
    %1 = vector.load %arg2[%c0_1, %c0_2] : memref<36x32xbf16, #tpu.memory_space<vmem>>, vector<36x32xbf16>
    %cst = arith.constant dense<0.000000e+00> : vector<128x32xf32>
    %2 = tpu.matmul %0, %1, %cst {dimension_numbers = #tpu.dot_dimension_numbers<[1], [0], [0], [1], [0, 0, 1, 1], [], []>} : vector<128x36xbf16>, vector<36x32xbf16>, vector<128x32xf32> -> vector<128x32xf32>
    %c0_3 = arith.constant 0 : index
    %c0_4 = arith.constant 0 : index
    %3 = vector.load %arg3[%c0_3, %c0_4] : memref<1x32xf32, #tpu.memory_space<vmem>>, vector<1x32xf32>
    %4 = vector.broadcast %3 : vector<1x32xf32> to vector<128x32xf32>
    %5 = arith.addf %2, %4 : vector<128x32xf32>
    %cst_5 = arith.constant 0.000000e+00 : f32
    %6 = vector.broadcast %cst_5 : f32 to vector<128x32xf32>
    %7 = arith.maximumf %5, %6 : vector<128x32xf32>
    %8 = arith.truncf %7 : vector<128x32xf32> to vector<128x32xbf16>
    %c0_6 = arith.constant 0 : index
    %c0_7 = arith.constant 0 : index
    %9 = vector.load %arg4[%c0_6, %c0_7] : memref<128x32xbf16, #tpu.memory_space<vmem>>, vector<128x32xbf16>
    tpu.vector_store %arg4[%c0_6, %c0_7], %8 {strides = array<i32>} : memref<128x32xbf16, #tpu.memory_space<vmem>>, vector<128x32xbf16>,
    return
  }
  func.func @transform_0(%arg0: i32) -> (i32, i32) {
    %c0_i32 = arith.constant 0 : i32
    %c0_i32_0 = arith.constant 0 : i32
    return %arg0, %c0_i32 : i32, i32
  }
  func.func @transform_1(%arg0: i32) -> (i32, i32) {
    %c0_i32 = arith.constant 0 : i32
    %c0_i32_0 = arith.constant 0 : i32
    %c0_i32_1 = arith.constant 0 : i32
    return %c0_i32, %c0_i32_0 : i32, i32
  }
  func.func @transform_2(%arg0: i32) -> (i32, i32) {
    %c0_i32 = arith.constant 0 : i32
    %c0_i32_0 = arith.constant 0 : i32
    %c0_i32_1 = arith.constant 0 : i32
    return %c0_i32, %c0_i32_0 : i32, i32
  }
  func.func @transform_3(%arg0: i32) -> (i32, i32) {
    %c0_i32 = arith.constant 0 : i32
    %c0_i32_0 = arith.constant 0 : i32
    return %arg0, %c0_i32 : i32, i32
  }
}

module attributes {stable_mosaic.version = 11 : i64} {
  func.func @_mm_bias_act_kernel(%arg0: i32, %arg1: memref<8x576xbf16, #tpu.memory_space<vmem>>, %arg2: memref<576x64xbf16, #tpu.memory_space<vmem>>, %arg3: memref<1x64xf32, #tpu.memory_space<vmem>>, %arg4: memref<8x64xbf16, #tpu.memory_space<vmem>>) attributes {dimension_semantics = [#tpu.dimension_semantics<parallel>], iteration_bounds = array<i64: 1>, scalar_prefetch = 0 : i64, scratch_operands = 0 : i64, tpu.core_type = #tpu.core_type<tc>, window_params = [{transform_indices = @transform_0, window_bounds = array<i64: 8, 576>}, {pipeline_mode = #tpu.pipeline_mode<synchronous>, transform_indices = @transform_1, window_bounds = array<i64: 576, 64>}, {pipeline_mode = #tpu.pipeline_mode<synchronous>, transform_indices = @transform_2, window_bounds = array<i64: 1, 64>}, {transform_indices = @transform_3, window_bounds = array<i64: 8, 64>}]} {
    %c0 = arith.constant 0 : index
    %c0_0 = arith.constant 0 : index
    %0 = vector.load %arg1[%c0, %c0_0] : memref<8x576xbf16, #tpu.memory_space<vmem>>, vector<8x576xbf16>
    %c0_1 = arith.constant 0 : index
    %c0_2 = arith.constant 0 : index
    %1 = vector.load %arg2[%c0_1, %c0_2] : memref<576x64xbf16, #tpu.memory_space<vmem>>, vector<576x64xbf16>
    %cst = arith.constant dense<0.000000e+00> : vector<8x64xf32>
    %2 = tpu.matmul %0, %1, %cst {dimension_numbers = #tpu.dot_dimension_numbers<[1], [0], [0], [1], [0, 0, 1, 1], [], []>} : vector<8x576xbf16>, vector<576x64xbf16>, vector<8x64xf32> -> vector<8x64xf32>
    %c0_3 = arith.constant 0 : index
    %c0_4 = arith.constant 0 : index
    %3 = vector.load %arg3[%c0_3, %c0_4] : memref<1x64xf32, #tpu.memory_space<vmem>>, vector<1x64xf32>
    %4 = vector.broadcast %3 : vector<1x64xf32> to vector<8x64xf32>
    %5 = arith.addf %2, %4 : vector<8x64xf32>
    %cst_5 = arith.constant 0.000000e+00 : f32
    %6 = vector.broadcast %cst_5 : f32 to vector<8x64xf32>
    %7 = arith.maximumf %5, %6 : vector<8x64xf32>
    %8 = arith.truncf %7 : vector<8x64xf32> to vector<8x64xbf16>
    %c0_6 = arith.constant 0 : index
    %c0_7 = arith.constant 0 : index
    %9 = vector.load %arg4[%c0_6, %c0_7] : memref<8x64xbf16, #tpu.memory_space<vmem>>, vector<8x64xbf16>
    tpu.vector_store %arg4[%c0_6, %c0_7], %8 {strides = array<i32>} : memref<8x64xbf16, #tpu.memory_space<vmem>>, vector<8x64xbf16>,
    return
  }
  func.func @transform_0(%arg0: i32) -> (i32, i32) {
    %c0_i32 = arith.constant 0 : i32
    %c0_i32_0 = arith.constant 0 : i32
    return %arg0, %c0_i32 : i32, i32
  }
  func.func @transform_1(%arg0: i32) -> (i32, i32) {
    %c0_i32 = arith.constant 0 : i32
    %c0_i32_0 = arith.constant 0 : i32
    %c0_i32_1 = arith.constant 0 : i32
    return %c0_i32, %c0_i32_0 : i32, i32
  }
  func.func @transform_2(%arg0: i32) -> (i32, i32) {
    %c0_i32 = arith.constant 0 : i32
    %c0_i32_0 = arith.constant 0 : i32
    %c0_i32_1 = arith.constant 0 : i32
    return %c0_i32, %c0_i32_0 : i32, i32
  }
  func.func @transform_3(%arg0: i32) -> (i32, i32) {
    %c0_i32 = arith.constant 0 : i32
    %c0_i32_0 = arith.constant 0 : i32
    return %arg0, %c0_i32 : i32, i32
  }
}

module attributes {stable_mosaic.version = 11 : i64} {
  func.func @_mm_bias_act_kernel(%arg0: i32, %arg1: memref<32x288xbf16, #tpu.memory_space<vmem>>, %arg2: memref<288x64xbf16, #tpu.memory_space<vmem>>, %arg3: memref<1x64xf32, #tpu.memory_space<vmem>>, %arg4: memref<32x64xbf16, #tpu.memory_space<vmem>>) attributes {dimension_semantics = [#tpu.dimension_semantics<parallel>], iteration_bounds = array<i64: 1>, scalar_prefetch = 0 : i64, scratch_operands = 0 : i64, tpu.core_type = #tpu.core_type<tc>, window_params = [{transform_indices = @transform_0, window_bounds = array<i64: 32, 288>}, {pipeline_mode = #tpu.pipeline_mode<synchronous>, transform_indices = @transform_1, window_bounds = array<i64: 288, 64>}, {pipeline_mode = #tpu.pipeline_mode<synchronous>, transform_indices = @transform_2, window_bounds = array<i64: 1, 64>}, {transform_indices = @transform_3, window_bounds = array<i64: 32, 64>}]} {
    %c0 = arith.constant 0 : index
    %c0_0 = arith.constant 0 : index
    %0 = vector.load %arg1[%c0, %c0_0] : memref<32x288xbf16, #tpu.memory_space<vmem>>, vector<32x288xbf16>
    %c0_1 = arith.constant 0 : index
    %c0_2 = arith.constant 0 : index
    %1 = vector.load %arg2[%c0_1, %c0_2] : memref<288x64xbf16, #tpu.memory_space<vmem>>, vector<288x64xbf16>
    %cst = arith.constant dense<0.000000e+00> : vector<32x64xf32>
    %2 = tpu.matmul %0, %1, %cst {dimension_numbers = #tpu.dot_dimension_numbers<[1], [0], [0], [1], [0, 0, 1, 1], [], []>} : vector<32x288xbf16>, vector<288x64xbf16>, vector<32x64xf32> -> vector<32x64xf32>
    %c0_3 = arith.constant 0 : index
    %c0_4 = arith.constant 0 : index
    %3 = vector.load %arg3[%c0_3, %c0_4] : memref<1x64xf32, #tpu.memory_space<vmem>>, vector<1x64xf32>
    %4 = vector.broadcast %3 : vector<1x64xf32> to vector<32x64xf32>
    %5 = arith.addf %2, %4 : vector<32x64xf32>
    %cst_5 = arith.constant 0.000000e+00 : f32
    %6 = vector.broadcast %cst_5 : f32 to vector<32x64xf32>
    %7 = arith.maximumf %5, %6 : vector<32x64xf32>
    %8 = arith.truncf %7 : vector<32x64xf32> to vector<32x64xbf16>
    %c0_6 = arith.constant 0 : index
    %c0_7 = arith.constant 0 : index
    %9 = vector.load %arg4[%c0_6, %c0_7] : memref<32x64xbf16, #tpu.memory_space<vmem>>, vector<32x64xbf16>
    tpu.vector_store %arg4[%c0_6, %c0_7], %8 {strides = array<i32>} : memref<32x64xbf16, #tpu.memory_space<vmem>>, vector<32x64xbf16>,
    return
  }
  func.func @transform_0(%arg0: i32) -> (i32, i32) {
    %c0_i32 = arith.constant 0 : i32
    %c0_i32_0 = arith.constant 0 : i32
    return %arg0, %c0_i32 : i32, i32
  }
  func.func @transform_1(%arg0: i32) -> (i32, i32) {
    %c0_i32 = arith.constant 0 : i32
    %c0_i32_0 = arith.constant 0 : i32
    %c0_i32_1 = arith.constant 0 : i32
    return %c0_i32, %c0_i32_0 : i32, i32
  }
  func.func @transform_2(%arg0: i32) -> (i32, i32) {
    %c0_i32 = arith.constant 0 : i32
    %c0_i32_0 = arith.constant 0 : i32
    %c0_i32_1 = arith.constant 0 : i32
    return %c0_i32, %c0_i32_0 : i32, i32
  }
  func.func @transform_3(%arg0: i32) -> (i32, i32) {
    %c0_i32 = arith.constant 0 : i32
    %c0_i32_0 = arith.constant 0 : i32
    return %arg0, %c0_i32 : i32, i32
  }
}

module attributes {stable_mosaic.version = 11 : i64} {
  func.func @_mm_bias_act_kernel(%arg0: i32, %arg1: memref<8x576xbf16, #tpu.memory_space<vmem>>, %arg2: memref<576x128xbf16, #tpu.memory_space<vmem>>, %arg3: memref<1x128xf32, #tpu.memory_space<vmem>>, %arg4: memref<8x128xbf16, #tpu.memory_space<vmem>>) attributes {dimension_semantics = [#tpu.dimension_semantics<parallel>], iteration_bounds = array<i64: 1>, scalar_prefetch = 0 : i64, scratch_operands = 0 : i64, tpu.core_type = #tpu.core_type<tc>, window_params = [{transform_indices = @transform_0, window_bounds = array<i64: 8, 576>}, {pipeline_mode = #tpu.pipeline_mode<synchronous>, transform_indices = @transform_1, window_bounds = array<i64: 576, 128>}, {pipeline_mode = #tpu.pipeline_mode<synchronous>, transform_indices = @transform_2, window_bounds = array<i64: 1, 128>}, {transform_indices = @transform_3, window_bounds = array<i64: 8, 128>}]} {
    %c0 = arith.constant 0 : index
    %c0_0 = arith.constant 0 : index
    %0 = vector.load %arg1[%c0, %c0_0] : memref<8x576xbf16, #tpu.memory_space<vmem>>, vector<8x576xbf16>
    %c0_1 = arith.constant 0 : index
    %c0_2 = arith.constant 0 : index
    %1 = vector.load %arg2[%c0_1, %c0_2] : memref<576x128xbf16, #tpu.memory_space<vmem>>, vector<576x128xbf16>
    %cst = arith.constant dense<0.000000e+00> : vector<8x128xf32>
    %2 = tpu.matmul %0, %1, %cst {dimension_numbers = #tpu.dot_dimension_numbers<[1], [0], [0], [1], [0, 0, 1, 1], [], []>} : vector<8x576xbf16>, vector<576x128xbf16>, vector<8x128xf32> -> vector<8x128xf32>
    %c0_3 = arith.constant 0 : index
    %c0_4 = arith.constant 0 : index
    %3 = vector.load %arg3[%c0_3, %c0_4] : memref<1x128xf32, #tpu.memory_space<vmem>>, vector<1x128xf32>
    %4 = vector.broadcast %3 : vector<1x128xf32> to vector<8x128xf32>
    %5 = arith.addf %2, %4 : vector<8x128xf32>
    %cst_5 = arith.constant 0.000000e+00 : f32
    %6 = vector.broadcast %cst_5 : f32 to vector<8x128xf32>
    %7 = arith.maximumf %5, %6 : vector<8x128xf32>
    %8 = arith.truncf %7 : vector<8x128xf32> to vector<8x128xbf16>
    %c0_6 = arith.constant 0 : index
    %c0_7 = arith.constant 0 : index
    %9 = vector.load %arg4[%c0_6, %c0_7] : memref<8x128xbf16, #tpu.memory_space<vmem>>, vector<8x128xbf16>
    tpu.vector_store %arg4[%c0_6, %c0_7], %8 {strides = array<i32>} : memref<8x128xbf16, #tpu.memory_space<vmem>>, vector<8x128xbf16>,
    return
  }
  func.func @transform_0(%arg0: i32) -> (i32, i32) {
    %c0_i32 = arith.constant 0 : i32
    %c0_i32_0 = arith.constant 0 : i32
    return %arg0, %c0_i32 : i32, i32
  }
  func.func @transform_1(%arg0: i32) -> (i32, i32) {
    %c0_i32 = arith.constant 0 : i32
    %c0_i32_0 = arith.constant 0 : i32
    %c0_i32_1 = arith.constant 0 : i32
    return %c0_i32, %c0_i32_0 : i32, i32
  }
  func.func @transform_2(%arg0: i32) -> (i32, i32) {
    %c0_i32 = arith.constant 0 : i32
    %c0_i32_0 = arith.constant 0 : i32
    %c0_i32_1 = arith.constant 0 : i32
    return %c0_i32, %c0_i32_0 : i32, i32
  }
  func.func @transform_3(%arg0: i32) -> (i32, i32) {
    %c0_i32 = arith.constant 0 : i32
    %c0_i32_0 = arith.constant 0 : i32
    return %arg0, %c0_i32 : i32, i32
  }
}

module attributes {stable_mosaic.version = 11 : i64} {
  func.func @_head_kernel(%arg0: i32, %arg1: memref<2x4xf32, #tpu.memory_space<vmem>>, %arg2: memref<2x128xbf16, #tpu.memory_space<vmem>>, %arg3: memref<2x128xbf16, #tpu.memory_space<vmem>>, %arg4: memref<128x512xbf16, #tpu.memory_space<vmem>>, %arg5: memref<1x512xf32, #tpu.memory_space<vmem>>, %arg6: memref<512x512xbf16, #tpu.memory_space<vmem>>, %arg7: memref<1x512xf32, #tpu.memory_space<vmem>>, %arg8: memref<512x2xbf16, #tpu.memory_space<vmem>>, %arg9: memref<1x2xf32, #tpu.memory_space<vmem>>, %arg10: memref<512x512xbf16, #tpu.memory_space<vmem>>, %arg11: memref<1x512xf32, #tpu.memory_space<vmem>>, %arg12: memref<512x4xbf16, #tpu.memory_space<vmem>>, %arg13: memref<1x4xf32, #tpu.memory_space<vmem>>, %arg14: memref<128x512xbf16, #tpu.memory_space<vmem>>, %arg15: memref<1x512xf32, #tpu.memory_space<vmem>>, %arg16: memref<2x512xf32, #tpu.memory_space<vmem>>, %arg17: memref<2x2xf32, #tpu.memory_space<vmem>>, %arg18: memref<2x4xf32, #tpu.memory_space<vmem>>, %arg19: memref<2x4xf32, #tpu.memory_space<vmem>>) attributes {dimension_semantics = [#tpu.dimension_semantics<arbitrary>], iteration_bounds = array<i64: 1>, scalar_prefetch = 0 : i64, scratch_operands = 0 : i64, tpu.core_type = #tpu.core_type<tc>, window_params = [{pipeline_mode = #tpu.pipeline_mode<synchronous>, transform_indices = @transform_0, window_bounds = array<i64: 2, 4>}, {pipeline_mode = #tpu.pipeline_mode<synchronous>, transform_indices = @transform_1, window_bounds = array<i64: 2, 128>}, {pipeline_mode = #tpu.pipeline_mode<synchronous>, transform_indices = @transform_2, window_bounds = array<i64: 2, 128>}, {pipeline_mode = #tpu.pipeline_mode<synchronous>, transform_indices = @transform_3, window_bounds = array<i64: 128, 512>}, {pipeline_mode = #tpu.pipeline_mode<synchronous>, transform_indices = @transform_4, window_bounds = array<i64: 1, 512>}, {pipeline_mode = #tpu.pipeline_mode<synchronous>, transform_indices = @transform_5, window_bounds = array<i64: 512, 512>}, {pipeline_mode = #tpu.pipeline_mode<synchronous>, transform_indices = @transform_6, window_bounds = array<i64: 1, 512>}, {pipeline_mode = #tpu.pipeline_mode<synchronous>, transform_indices = @transform_7, window_bounds = array<i64: 512, 2>}, {pipeline_mode = #tpu.pipeline_mode<synchronous>, transform_indices = @transform_8, window_bounds = array<i64: 1, 2>}, {pipeline_mode = #tpu.pipeline_mode<synchronous>, transform_indices = @transform_9, window_bounds = array<i64: 512, 512>}, {pipeline_mode = #tpu.pipeline_mode<synchronous>, transform_indices = @transform_10, window_bounds = array<i64: 1, 512>}, {pipeline_mode = #tpu.pipeline_mode<synchronous>, transform_indices = @transform_11, window_bounds = array<i64: 512, 4>}, {pipeline_mode = #tpu.pipeline_mode<synchronous>, transform_indices = @transform_12, window_bounds = array<i64: 1, 4>}, {pipeline_mode = #tpu.pipeline_mode<synchronous>, transform_indices = @transform_13, window_bounds = array<i64: 128, 512>}, {pipeline_mode = #tpu.pipeline_mode<synchronous>, transform_indices = @transform_14, window_bounds = array<i64: 1, 512>}, {pipeline_mode = #tpu.pipeline_mode<synchronous>, transform_indices = @transform_15, window_bounds = array<i64: 2, 512>}, {pipeline_mode = #tpu.pipeline_mode<synchronous>, transform_indices = @transform_16, window_bounds = array<i64: 2, 2>}, {pipeline_mode = #tpu.pipeline_mode<synchronous>, transform_indices = @transform_17, window_bounds = array<i64: 2, 4>}, {pipeline_mode = #tpu.pipeline_mode<synchronous>, transform_indices = @transform_18, window_bounds = array<i64: 2, 4>}]} {
    %c0 = arith.constant 0 : index
    %c0_0 = arith.constant 0 : index
    %0 = vector.load %arg2[%c0, %c0_0] : memref<2x128xbf16, #tpu.memory_space<vmem>>, vector<2x128xbf16>
    %c0_1 = arith.constant 0 : index
    %c0_2 = arith.constant 0 : index
    %1 = vector.load %arg4[%c0_1, %c0_2] : memref<128x512xbf16, #tpu.memory_space<vmem>>, vector<128x512xbf16>
    %cst = arith.constant dense<0.000000e+00> : vector<2x512xf32>
    %2 = tpu.matmul %0, %1, %cst {dimension_numbers = #tpu.dot_dimension_numbers<[1], [0], [0], [1], [0, 0, 1, 1], [], []>} : vector<2x128xbf16>, vector<128x512xbf16>, vector<2x512xf32> -> vector<2x512xf32>
    %c0_3 = arith.constant 0 : index
    %c0_4 = arith.constant 0 : index
    %3 = vector.load %arg5[%c0_3, %c0_4] : memref<1x512xf32, #tpu.memory_space<vmem>>, vector<1x512xf32>
    %4 = vector.broadcast %3 : vector<1x512xf32> to vector<2x512xf32>
    %5 = arith.addf %2, %4 : vector<2x512xf32>
    %cst_5 = arith.constant 0.000000e+00 : f32
    %6 = vector.broadcast %cst_5 : f32 to vector<2x512xf32>
    %7 = arith.maximumf %5, %6 : vector<2x512xf32>
    %8 = arith.truncf %7 : vector<2x512xf32> to vector<2x512xbf16>
    %c0_6 = arith.constant 0 : index
    %c0_7 = arith.constant 0 : index
    %9 = vector.load %arg6[%c0_6, %c0_7] : memref<512x512xbf16, #tpu.memory_space<vmem>>, vector<512x512xbf16>
    %cst_8 = arith.constant dense<0.000000e+00> : vector<2x512xf32>
    %10 = tpu.matmul %8, %9, %cst_8 {dimension_numbers = #tpu.dot_dimension_numbers<[1], [0], [0], [1], [0, 0, 1, 1], [], []>} : vector<2x512xbf16>, vector<512x512xbf16>, vector<2x512xf32> -> vector<2x512xf32>
    %c0_9 = arith.constant 0 : index
    %c0_10 = arith.constant 0 : index
    %11 = vector.load %arg7[%c0_9, %c0_10] : memref<1x512xf32, #tpu.memory_space<vmem>>, vector<1x512xf32>
    %12 = vector.broadcast %11 : vector<1x512xf32> to vector<2x512xf32>
    %13 = arith.addf %10, %12 : vector<2x512xf32>
    %cst_11 = arith.constant 0.000000e+00 : f32
    %14 = vector.broadcast %cst_11 : f32 to vector<2x512xf32>
    %15 = arith.maximumf %13, %14 : vector<2x512xf32>
    %16 = arith.truncf %15 : vector<2x512xf32> to vector<2x512xbf16>
    %c0_12 = arith.constant 0 : index
    %c0_13 = arith.constant 0 : index
    %17 = vector.load %arg8[%c0_12, %c0_13] : memref<512x2xbf16, #tpu.memory_space<vmem>>, vector<512x2xbf16>
    %cst_14 = arith.constant dense<0.000000e+00> : vector<2x2xf32>
    %18 = tpu.matmul %16, %17, %cst_14 {dimension_numbers = #tpu.dot_dimension_numbers<[1], [0], [0], [1], [0, 0, 1, 1], [], []>} : vector<2x512xbf16>, vector<512x2xbf16>, vector<2x2xf32> -> vector<2x2xf32>
    %c0_15 = arith.constant 0 : index
    %c0_16 = arith.constant 0 : index
    %19 = vector.load %arg9[%c0_15, %c0_16] : memref<1x2xf32, #tpu.memory_space<vmem>>, vector<1x2xf32>
    %20 = vector.broadcast %19 : vector<1x2xf32> to vector<2x2xf32>
    %21 = arith.addf %18, %20 : vector<2x2xf32>
    %c0_17 = arith.constant 0 : index
    %c0_18 = arith.constant 0 : index
    %22 = vector.load %arg17[%c0_17, %c0_18] : memref<2x2xf32, #tpu.memory_space<vmem>>, vector<2x2xf32>
    tpu.vector_store %arg17[%c0_17, %c0_18], %21 {strides = array<i32>} : memref<2x2xf32, #tpu.memory_space<vmem>>, vector<2x2xf32>,
    %c0_19 = arith.constant 0 : index
    %c0_20 = arith.constant 0 : index
    %23 = vector.load %arg10[%c0_19, %c0_20] : memref<512x512xbf16, #tpu.memory_space<vmem>>, vector<512x512xbf16>
    %cst_21 = arith.constant dense<0.000000e+00> : vector<2x512xf32>
    %24 = tpu.matmul %8, %23, %cst_21 {dimension_numbers = #tpu.dot_dimension_numbers<[1], [0], [0], [1], [0, 0, 1, 1], [], []>} : vector<2x512xbf16>, vector<512x512xbf16>, vector<2x512xf32> -> vector<2x512xf32>
    %c0_22 = arith.constant 0 : index
    %c0_23 = arith.constant 0 : index
    %25 = vector.load %arg11[%c0_22, %c0_23] : memref<1x512xf32, #tpu.memory_space<vmem>>, vector<1x512xf32>
    %26 = vector.broadcast %25 : vector<1x512xf32> to vector<2x512xf32>
    %27 = arith.addf %24, %26 : vector<2x512xf32>
    %cst_24 = arith.constant 0.000000e+00 : f32
    %28 = vector.broadcast %cst_24 : f32 to vector<2x512xf32>
    %29 = arith.maximumf %27, %28 : vector<2x512xf32>
    %30 = arith.truncf %29 : vector<2x512xf32> to vector<2x512xbf16>
    %c0_25 = arith.constant 0 : index
    %c0_26 = arith.constant 0 : index
    %31 = vector.load %arg12[%c0_25, %c0_26] : memref<512x4xbf16, #tpu.memory_space<vmem>>, vector<512x4xbf16>
    %cst_27 = arith.constant dense<0.000000e+00> : vector<2x4xf32>
    %32 = tpu.matmul %30, %31, %cst_27 {dimension_numbers = #tpu.dot_dimension_numbers<[1], [0], [0], [1], [0, 0, 1, 1], [], []>} : vector<2x512xbf16>, vector<512x4xbf16>, vector<2x4xf32> -> vector<2x4xf32>
    %c0_28 = arith.constant 0 : index
    %c0_29 = arith.constant 0 : index
    %33 = vector.load %arg13[%c0_28, %c0_29] : memref<1x4xf32, #tpu.memory_space<vmem>>, vector<1x4xf32>
    %34 = vector.broadcast %33 : vector<1x4xf32> to vector<2x4xf32>
    %35 = arith.addf %32, %34 : vector<2x4xf32>
    %cst_30 = arith.constant dense<0xFF800000> : vector<2xf32>
    %36 = vector.multi_reduction <maximumf>, %35, %cst_30 [1] : vector<2x4xf32> to vector<2xf32>
    %37 = vector.shape_cast %36 : vector<2xf32> to vector<2x1xf32>
    %38 = vector.broadcast %37 : vector<2x1xf32> to vector<2x4xf32>
    %39 = arith.subf %35, %38 : vector<2x4xf32>
    %40 = math.exp %39 : vector<2x4xf32>
    %cst_31 = arith.constant dense<0.000000e+00> : vector<2xf32>
    %41 = vector.multi_reduction <add>, %40, %cst_31 [1] : vector<2x4xf32> to vector<2xf32>
    %42 = vector.shape_cast %41 : vector<2xf32> to vector<2x1xf32>
    %43 = vector.broadcast %42 : vector<2x1xf32> to vector<2x4xf32>
    %44 = arith.divf %40, %43 : vector<2x4xf32>
    %c0_32 = arith.constant 0 : index
    %c0_33 = arith.constant 0 : index
    %45 = vector.load %arg19[%c0_32, %c0_33] : memref<2x4xf32, #tpu.memory_space<vmem>>, vector<2x4xf32>
    tpu.vector_store %arg19[%c0_32, %c0_33], %44 {strides = array<i32>} : memref<2x4xf32, #tpu.memory_space<vmem>>, vector<2x4xf32>,
    %c0_34 = arith.constant 0 : index
    %c0_35 = arith.constant 0 : index
    %46 = vector.load %arg1[%c0_34, %c0_35] : memref<2x4xf32, #tpu.memory_space<vmem>>, vector<2x4xf32>
    %47 = arith.addf %35, %46 : vector<2x4xf32>
    %48 = tpu.iota {dimensions = array<i32: 1>} : vector<2x4xi32>
    %cst_36 = arith.constant dense<0xFF800000> : vector<2xf32>
    %49 = vector.multi_reduction <maximumf>, %47, %cst_36 [1] : vector<2x4xf32> to vector<2xf32>
    %50 = vector.shape_cast %49 : vector<2xf32> to vector<2x1xf32>
    %51 = vector.broadcast %50 : vector<2x1xf32> to vector<2x4xf32>
    %52 = arith.cmpf oge, %47, %51 : vector<2x4xf32>
    %c4_i32 = arith.constant 4 : i32
    %53 = vector.broadcast %c4_i32 : i32 to vector<2x4xi32>
    %54 = arith.select %52, %48, %53 : vector<2x4xi1>, vector<2x4xi32>
    %cst_37 = arith.constant dense<2147483647> : vector<2xi32>
    %55 = vector.multi_reduction <minsi>, %54, %cst_37 [1] : vector<2x4xi32> to vector<2xi32>
    %56 = vector.shape_cast %55 : vector<2xi32> to vector<2x1xi32>
    %57 = vector.broadcast %56 : vector<2x1xi32> to vector<2x4xi32>
    %58 = arith.cmpi eq, %48, %57 : vector<2x4xi32>
    %59 = arith.extui %58 : vector<2x4xi1> to vector<2x4xi32>
    %60 = arith.sitofp %59 : vector<2x4xi32> to vector<2x4xf32>
    %c0_38 = arith.constant 0 : index
    %c0_39 = arith.constant 0 : index
    %61 = vector.load %arg18[%c0_38, %c0_39] : memref<2x4xf32, #tpu.memory_space<vmem>>, vector<2x4xf32>
    tpu.vector_store %arg18[%c0_38, %c0_39], %60 {strides = array<i32>} : memref<2x4xf32, #tpu.memory_space<vmem>>, vector<2x4xf32>,
    %c0_40 = arith.constant 0 : index
    %c0_41 = arith.constant 0 : index
    %62 = vector.load %arg3[%c0_40, %c0_41] : memref<2x128xbf16, #tpu.memory_space<vmem>>, vector<2x128xbf16>
    %c0_42 = arith.constant 0 : index
    %c0_43 = arith.constant 0 : index
    %63 = vector.load %arg14[%c0_42, %c0_43] : memref<128x512xbf16, #tpu.memory_space<vmem>>, vector<128x512xbf16>
    %cst_44 = arith.constant dense<0.000000e+00> : vector<2x512xf32>
    %64 = tpu.matmul %62, %63, %cst_44 {dimension_numbers = #tpu.dot_dimension_numbers<[1], [0], [0], [1], [0, 0, 1, 1], [], []>} : vector<2x128xbf16>, vector<128x512xbf16>, vector<2x512xf32> -> vector<2x512xf32>
    %c0_45 = arith.constant 0 : index
    %c0_46 = arith.constant 0 : index
    %65 = vector.load %arg15[%c0_45, %c0_46] : memref<1x512xf32, #tpu.memory_space<vmem>>, vector<1x512xf32>
    %66 = vector.broadcast %65 : vector<1x512xf32> to vector<2x512xf32>
    %67 = arith.addf %64, %66 : vector<2x512xf32>
    %c0_47 = arith.constant 0 : index
    %c0_48 = arith.constant 0 : index
    %68 = vector.load %arg16[%c0_47, %c0_48] : memref<2x512xf32, #tpu.memory_space<vmem>>, vector<2x512xf32>
    tpu.vector_store %arg16[%c0_47, %c0_48], %67 {strides = array<i32>} : memref<2x512xf32, #tpu.memory_space<vmem>>, vector<2x512xf32>,
    return
  }
  func.func @transform_0(%arg0: i32) -> (i32, i32) {
    %c0_i32 = arith.constant 0 : i32
    %c0_i32_0 = arith.constant 0 : i32
    %c0_i32_1 = arith.constant 0 : i32
    return %c0_i32, %c0_i32_0 : i32, i32
  }
  func.func @transform_1(%arg0: i32) -> (i32, i32) {
    %c0_i32 = arith.constant 0 : i32
    %c0_i32_0 = arith.constant 0 : i32
    %c0_i32_1 = arith.constant 0 : i32
    return %c0_i32, %c0_i32_0 : i32, i32
  }
  func.func @transform_2(%arg0: i32) -> (i32, i32) {
    %c0_i32 = arith.constant 0 : i32
    %c0_i32_0 = arith.constant 0 : i32
    %c0_i32_1 = arith.constant 0 : i32
    return %c0_i32, %c0_i32_0 : i32, i32
  }
  func.func @transform_3(%arg0: i32) -> (i32, i32) {
    %c0_i32 = arith.constant 0 : i32
    %c0_i32_0 = arith.constant 0 : i32
    %c0_i32_1 = arith.constant 0 : i32
    return %c0_i32, %c0_i32_0 : i32, i32
  }
  func.func @transform_4(%arg0: i32) -> (i32, i32) {
    %c0_i32 = arith.constant 0 : i32
    %c0_i32_0 = arith.constant 0 : i32
    %c0_i32_1 = arith.constant 0 : i32
    return %c0_i32, %c0_i32_0 : i32, i32
  }
  func.func @transform_5(%arg0: i32) -> (i32, i32) {
    %c0_i32 = arith.constant 0 : i32
    %c0_i32_0 = arith.constant 0 : i32
    %c0_i32_1 = arith.constant 0 : i32
    return %c0_i32, %c0_i32_0 : i32, i32
  }
  func.func @transform_6(%arg0: i32) -> (i32, i32) {
    %c0_i32 = arith.constant 0 : i32
    %c0_i32_0 = arith.constant 0 : i32
    %c0_i32_1 = arith.constant 0 : i32
    return %c0_i32, %c0_i32_0 : i32, i32
  }
  func.func @transform_7(%arg0: i32) -> (i32, i32) {
    %c0_i32 = arith.constant 0 : i32
    %c0_i32_0 = arith.constant 0 : i32
    %c0_i32_1 = arith.constant 0 : i32
    return %c0_i32, %c0_i32_0 : i32, i32
  }
  func.func @transform_8(%arg0: i32) -> (i32, i32) {
    %c0_i32 = arith.constant 0 : i32
    %c0_i32_0 = arith.constant 0 : i32
    %c0_i32_1 = arith.constant 0 : i32
    return %c0_i32, %c0_i32_0 : i32, i32
  }
  func.func @transform_9(%arg0: i32) -> (i32, i32) {
    %c0_i32 = arith.constant 0 : i32
    %c0_i32_0 = arith.constant 0 : i32
    %c0_i32_1 = arith.constant 0 : i32
    return %c0_i32, %c0_i32_0 : i32, i32
  }
  func.func @transform_10(%arg0: i32) -> (i32, i32) {
    %c0_i32 = arith.constant 0 : i32
    %c0_i32_0 = arith.constant 0 : i32
    %c0_i32_1 = arith.constant 0 : i32
    return %c0_i32, %c0_i32_0 : i32, i32
  }
  func.func @transform_11(%arg0: i32) -> (i32, i32) {
    %c0_i32 = arith.constant 0 : i32
    %c0_i32_0 = arith.constant 0 : i32
    %c0_i32_1 = arith.constant 0 : i32
    return %c0_i32, %c0_i32_0 : i32, i32
  }
  func.func @transform_12(%arg0: i32) -> (i32, i32) {
    %c0_i32 = arith.constant 0 : i32
    %c0_i32_0 = arith.constant 0 : i32
    %c0_i32_1 = arith.constant 0 : i32
    return %c0_i32, %c0_i32_0 : i32, i32
  }
  func.func @transform_13(%arg0: i32) -> (i32, i32) {
    %c0_i32 = arith.constant 0 : i32
    %c0_i32_0 = arith.constant 0 : i32
    %c0_i32_1 = arith.constant 0 : i32
    return %c0_i32, %c0_i32_0 : i32, i32
  }
  func.func @transform_14(%arg0: i32) -> (i32, i32) {
    %c0_i32 = arith.constant 0 : i32
    %c0_i32_0 = arith.constant 0 : i32
    %c0_i32_1 = arith.constant 0 : i32
    return %c0_i32, %c0_i32_0 : i32, i32
  }
  func.func @transform_15(%arg0: i32) -> (i32, i32) {
    %c0_i32 = arith.constant 0 : i32
    %c0_i32_0 = arith.constant 0 : i32
    %c0_i32_1 = arith.constant 0 : i32
    return %c0_i32, %c0_i32_0 : i32, i32
  }
  func.func @transform_16(%arg0: i32) -> (i32, i32) {
    %c0_i32 = arith.constant 0 : i32
    %c0_i32_0 = arith.constant 0 : i32
    %c0_i32_1 = arith.constant 0 : i32
    return %c0_i32, %c0_i32_0 : i32, i32
  }
  func.func @transform_17(%arg0: i32) -> (i32, i32) {
    %c0_i32 = arith.constant 0 : i32
    %c0_i32_0 = arith.constant 0 : i32
    %c0_i32_1 = arith.constant 0 : i32
    return %c0_i32, %c0_i32_0 : i32, i32
  }
  func.func @transform_18(%arg0: i32) -> (i32, i32) {
    %c0_i32 = arith.constant 0 : i32
    %c0_i32_0 = arith.constant 0 : i32
    %c0_i32_1 = arith.constant 0 : i32
    return %c0_i32, %c0_i32_0 : i32, i32
  }
}

</mosaic_0001>

<llo_original>
// kernel: ppo_atari_snd_forward.13
$region0: #{ppo_atari_snd_forward.13}
  #allocation0 [shape = 'u32[]', space=smem, size = 0x4, offset = 0x4, fixed_abs, tag = 'smem constant byte address 0x4 - core index']
  #allocation1 [shape = 'u32[72,128]{1,0:T(1,128)}', space=vmem, size = 0x9000, scoped, tag = 'internal scratch']
  %s0 = inlined_call_operand.vmem [shape: bf16[128,9], index: 0, kind: input, shape index: {}]
  %s1 = inlined_call_operand.vmem [shape: bf16[9,32], index: 1, kind: input, shape index: {}]
  %s2 = inlined_call_operand.vmem [shape: f32[1,32], index: 2, kind: input, shape index: {}]
  %s3 = inlined_call_operand.vmem [shape: bf16[128,32], index: 3, kind: output, shape index: {}]
  %s4 = sld [smem:[#allocation0]]
  $region22: #{ppo_atari_snd_forward.13} parent=0
    _
  %s6 = ssub.s32 1, %s4
  %s7 = scalar_select 0, %s6, %s4
  // Predicated region
  $region2: #{ppo_atari_snd_forward.13} parent=0 // pred_check
    _
  $region3: #{ppo_atari_snd_forward.13} parent=0 // pred_check_branch
    %9 = sbr.rel (0) target = $region5
  $region4: #{ppo_atari_snd_forward.13} parent=0 // pred_region
    _
  $region5: #{ppo_atari_snd_forward.13} parent=0 // pred_fallthru
    _
  // Predicated region
  $region6: #{ppo_atari_snd_forward.13} parent=0 // pred_check
    _
  $region7: #{ppo_atari_snd_forward.13} parent=0 // pred_check_branch
    %11 = sbr.rel (0) target = $region9
  $region8: #{ppo_atari_snd_forward.13} parent=0 // pred_region
    _
  $region9: #{ppo_atari_snd_forward.13} parent=0 // pred_fallthru
    _
  // Predicated region
  $region10: #{ppo_atari_snd_forward.13} parent=0 // pred_check
    _
  $region11: #{ppo_atari_snd_forward.13} parent=0 // pred_check_branch
    %13 = sbr.rel (0) target = $region13
  $region12: #{ppo_atari_snd_forward.13} parent=0 // pred_region
    _
  $region13: #{ppo_atari_snd_forward.13} parent=0 // pred_fallthru
    _
  %v15 = vld [vmem:[%s0] sm:$0xf]
  %v16 = vld [vmem:[%s0 + $0x4] sm:$0xf]
  %v17 = vld [vmem:[%s0 + $0x8] sm:$0xf]
  %v18 = vld [vmem:[%s0 + $0xc] sm:$0xf]
  %v19 = vld [vmem:[%s0 + $0x10] sm:$0xf]
  %v20 = vld [vmem:[%s0 + $0x14] sm:$0xf]
  %v21 = vld [vmem:[%s0 + $0x18] sm:$0xf]
  %v22 = vld [vmem:[%s0 + $0x1c] sm:$0xf]
  %v23 = vld [vmem:[%s0 + $0x20] sm:$0xf]
  %v24 = vld [vmem:[%s0 + $0x24] sm:$0xf]
  %v25 = vld [vmem:[%s0 + $0x28] sm:$0xf]
  %v26 = vld [vmem:[%s0 + $0x2c] sm:$0xf]
  %v27 = vld [vmem:[%s0 + $0x30] sm:$0xf]
  %v28 = vld [vmem:[%s0 + $0x34] sm:$0xf]
  %v29 = vld [vmem:[%s0 + $0x38] sm:$0xf]
  %v30 = vld [vmem:[%s0 + $0x3c] sm:$0xf]
  %v31 = vld [vmem:[%s1] sm:$0xf]
  %v32 = vld [vmem:[%s1 + $0x4] sm:$0x1]
  %v33 = vld [vmem:[%s2] sm:$0x1]
  %v35 = vperm.slane %v33, 0
  %v53 = vunpack.c.l.b16 %v15
  %v54 = vunpack.c.l.b16 %v16
  %v55 = vunpack.c.l.b16 %v17
  %v56 = vunpack.c.l.b16 %v18
  %v57 = vunpack.c.l.b16 %v19
  %v58 = vunpack.c.l.b16 %v20
  %v59 = vunpack.c.l.b16 %v21
  %v60 = vunpack.c.l.b16 %v22
  %v61 = vunpack.c.l.b16 %v23
  %v62 = vunpack.c.l.b16 %v24
  %v63 = vunpack.c.l.b16 %v25
  %v64 = vunpack.c.l.b16 %v26
  %v65 = vunpack.c.l.b16 %v27
  %v66 = vunpack.c.l.b16 %v28
  %v67 = vunpack.c.l.b16 %v29
  %v68 = vunpack.c.l.b16 %v30
  %v69 = vpack.c.b16 %v54, %v53
  %v70 = vpack.c.b16 %v56, %v55
  %v71 = vpack.c.b16 %v58, %v57
  %v72 = vpack.c.b16 %v60, %v59
  %v73 = vpack.c.b16 %v62, %v61
  %v74 = vpack.c.b16 %v64, %v63
  %v75 = vpack.c.b16 %v66, %v65
  %v76 = vpack.c.b16 %v68, %v67
  %v79 = vunpack.c.l.b16 %v31
  %v80 = vunpack.c.l.b16 %v32
  %v81 = vpack.c.b16 %v80, %v79
  %vm82 = vcmask 72704
  %v84 = vsel %vm82, %v69, 0
  %v87 = vsel %vm82, %v70, 0
  %v90 = vsel %vm82, %v71, 0
  %v93 = vsel %vm82, %v72, 0
  %v96 = vsel %vm82, %v73, 0
  %v99 = vsel %vm82, %v74, 0
  %v102 = vsel %vm82, %v75, 0
  %v105 = vsel %vm82, %v76, 0
  %vm107 = vcmask 1043456
  %vm108 = vcmask 1044480
  %v109 = vsel %vm107, 4294967295, 65535
  %v110 = vsel %vm108, %v109, 0
  %v112 = vand.u32 %v81, %v110
  %114 = vmatpush.bf16.msra.mxu0 0
  %115 = vmatpush.bf16.msra.mxu0 0
  %116 = vmatpush.bf16.msra.mxu0 0
  %117 = vmatpush.bf16.msra.mxu0 0
  %118 = vmatpush.bf16.msra.mxu0 0
  %119 = vmatpush.bf16.msra.mxu0 0
  %120 = vmatpush.bf16.msra.mxu0 0
  %121 = vmatpush.bf16.msra.mxu0 %v112
  %122 = vmatmul.bf16.gmra.mxu0 %v84
  %v123 = vpop.f32.mrf.mxu0
  %v124 = vadd.f32 %v35, %v123
  %v125 = vpop.f32.mrf.mxu0
  %v126 = vadd.f32 %v35, %v125
  %127 = vmatmul.bf16.gmra.mxu0 %v87
  %v128 = vpop.f32.mrf.mxu0
  %v129 = vadd.f32 %v35, %v128
  %v130 = vpop.f32.mrf.mxu0
  %v131 = vadd.f32 %v35, %v130
  %132 = vmatmul.bf16.gmra.mxu0 %v90
  %v133 = vpop.f32.mrf.mxu0
  %v134 = vadd.f32 %v35, %v133
  %v135 = vpop.f32.mrf.mxu0
  %v136 = vadd.f32 %v35, %v135
  %137 = vmatmul.bf16.gmra.mxu0 %v93
  %v138 = vpop.f32.mrf.mxu0
  %v139 = vadd.f32 %v35, %v138
  %v140 = vpop.f32.mrf.mxu0
  %v141 = vadd.f32 %v35, %v140
  %142 = vmatmul.bf16.gmra.mxu0 %v96
  %v143 = vpop.f32.mrf.mxu0
  %v144 = vadd.f32 %v35, %v143
  %v145 = vpop.f32.mrf.mxu0
  %v146 = vadd.f32 %v35, %v145
  %147 = vmatmul.bf16.gmra.mxu0 %v99
  %v148 = vpop.f32.mrf.mxu0
  %v149 = vadd.f32 %v35, %v148
  %v150 = vpop.f32.mrf.mxu0
  %v151 = vadd.f32 %v35, %v150
  %152 = vmatmul.bf16.gmra.mxu0 %v102
  %v153 = vpop.f32.mrf.mxu0
  %v154 = vadd.f32 %v35, %v153
  %v155 = vpop.f32.mrf.mxu0
  %v156 = vadd.f32 %v35, %v155
  %157 = vmatmul.bf16.gmra.mxu0 %v105
  %v158 = vpop.f32.mrf.mxu0
  %v159 = vadd.f32 %v35, %v158
  %v160 = vpop.f32.mrf.mxu0
  %v161 = vadd.f32 %v35, %v160
  %162 = vdwg.mxu0
  %vm163 = vcmp.gt.f32.partialorder %v124, 0.0
  %vm164 = vcmp.gt.f32.partialorder %v126, 0.0
  %vm165 = vcmp.gt.f32.partialorder %v129, 0.0
  %vm166 = vcmp.gt.f32.partialorder %v131, 0.0
  %vm167 = vcmp.gt.f32.partialorder %v134, 0.0
  %vm168 = vcmp.gt.f32.partialorder %v136, 0.0
  %vm169 = vcmp.gt.f32.partialorder %v139, 0.0
  %vm170 = vcmp.gt.f32.partialorder %v141, 0.0
  %vm171 = vcmp.gt.f32.partialorder %v144, 0.0
  %vm172 = vcmp.gt.f32.partialorder %v146, 0.0
  %vm173 = vcmp.gt.f32.partialorder %v149, 0.0
  %vm174 = vcmp.gt.f32.partialorder %v151, 0.0
  %vm175 = vcmp.gt.f32.partialorder %v154, 0.0
  %vm176 = vcmp.gt.f32.partialorder %v156, 0.0
  %vm177 = vcmp.gt.f32.partialorder %v159, 0.0
  %vm178 = vcmp.gt.f32.partialorder %v161, 0.0
  %v179 = vmin.f32 %v124, 0.0
  %v180 = vmin.f32 %v126, 0.0
  %v181 = vmin.f32 %v129, 0.0
  %v182 = vmin.f32 %v131, 0.0
  %v183 = vmin.f32 %v134, 0.0
  %v184 = vmin.f32 %v136, 0.0
  %v185 = vmin.f32 %v139, 0.0
  %v186 = vmin.f32 %v141, 0.0
  %v187 = vmin.f32 %v144, 0.0
  %v188 = vmin.f32 %v146, 0.0
  %v189 = vmin.f32 %v149, 0.0
  %v190 = vmin.f32 %v151, 0.0
  %v191 = vmin.f32 %v154, 0.0
  %v192 = vmin.f32 %v156, 0.0
  %v193 = vmin.f32 %v159, 0.0
  %v194 = vmin.f32 %v161, 0.0
  %v195 = vmul.f32 %v179, 1.442695
  %v196 = vpow.pop %v195
  %v197 = vmul.f32 %v180, 1.442695
  %v198 = vpow.pop %v197
  %v199 = vmul.f32 %v181, 1.442695
  %v200 = vpow.pop %v199
  %v201 = vmul.f32 %v182, 1.442695
  %v202 = vpow.pop %v201
  %v203 = vmul.f32 %v183, 1.442695
  %v204 = vpow.pop %v203
  %v205 = vmul.f32 %v184, 1.442695
  %v206 = vpow.pop %v205
  %v207 = vmul.f32 %v185, 1.442695
  %v208 = vpow.pop %v207
  %v209 = vmul.f32 %v186, 1.442695
  %v210 = vpow.pop %v209
  %v211 = vmul.f32 %v187, 1.442695
  %v212 = vpow.pop %v211
  %v213 = vmul.f32 %v188, 1.442695
  %v214 = vpow.pop %v213
  %v215 = vmul.f32 %v189, 1.442695
  %v216 = vpow.pop %v215
  %v217 = vmul.f32 %v190, 1.442695
  %v218 = vpow.pop %v217
  %v219 = vmul.f32 %v191, 1.442695
  %v220 = vpow.pop %v219
  %v221 = vmul.f32 %v192, 1.442695
  %v222 = vpow.pop %v221
  %v223 = vmul.f32 %v193, 1.442695
  %v224 = vpow.pop %v223
  %v225 = vmul.f32 %v194, 1.442695
  %v226 = vpow.pop %v225
  %v227 = vsub.f32 %v196, 1.0
  %v228 = vsub.f32 %v198, 1.0
  %v229 = vsub.f32 %v200, 1.0
  %v230 = vsub.f32 %v202, 1.0
  %v231 = vsub.f32 %v204, 1.0
  %v232 = vsub.f32 %v206, 1.0
  %v233 = vsub.f32 %v208, 1.0
  %v234 = vsub.f32 %v210, 1.0
  %v235 = vsub.f32 %v212, 1.0
  %v236 = vsub.f32 %v214, 1.0
  %v237 = vsub.f32 %v216, 1.0
  %v238 = vsub.f32 %v218, 1.0
  %v239 = vsub.f32 %v220, 1.0
  %v240 = vsub.f32 %v222, 1.0
  %v241 = vsub.f32 %v224, 1.0
  %v242 = vsub.f32 %v226, 1.0
  %v243 = vsel %vm163, %v124, %v227
  %v244 = vsel %vm164, %v126, %v228
  %v245 = vsel %vm165, %v129, %v229
  %v246 = vsel %vm166, %v131, %v230
  %v247 = vsel %vm167, %v134, %v231
  %v248 = vsel %vm168, %v136, %v232
  %v249 = vsel %vm169, %v139, %v233
  %v250 = vsel %vm170, %v141, %v234
  %v251 = vsel %vm171, %v144, %v235
  %v252 = vsel %vm172, %v146, %v236
  %v253 = vsel %vm173, %v149, %v237
  %v254 = vsel %vm174, %v151, %v238
  %v255 = vsel %vm175, %v154, %v239
  %v256 = vsel %vm176, %v156, %v240
  %v257 = vsel %vm177, %v159, %v241
  %v258 = vsel %vm178, %v161, %v242
  %v259 = vpack.c.bf16 %v243, %v243
  %v260 = vpack.c.bf16 %v244, %v244
  %v261 = vpack.c.bf16 %v245, %v245
  %v262 = vpack.c.bf16 %v246, %v246
  %v263 = vpack.c.bf16 %v247, %v247
  %v264 = vpack.c.bf16 %v248, %v248
  %v265 = vpack.c.bf16 %v249, %v249
  %v266 = vpack.c.bf16 %v250, %v250
  %v267 = vpack.c.bf16 %v251, %v251
  %v268 = vpack.c.bf16 %v252, %v252
  %v269 = vpack.c.bf16 %v253, %v253
  %v270 = vpack.c.bf16 %v254, %v254
  %v271 = vpack.c.bf16 %v255, %v255
  %v272 = vpack.c.bf16 %v256, %v256
  %v273 = vpack.c.bf16 %v257, %v257
  %v274 = vpack.c.bf16 %v258, %v258
  %vm275 = vcmask 257024
  %276 = vst.msk [vmem:[%s3] sm:$0xf] %vm275, %v259
  %277 = vst.msk [vmem:[%s3 + $0x4] sm:$0xf] %vm275, %v260
  %278 = vst.msk [vmem:[%s3 + $0x8] sm:$0xf] %vm275, %v261
  %279 = vst.msk [vmem:[%s3 + $0xc] sm:$0xf] %vm275, %v262
  %280 = vst.msk [vmem:[%s3 + $0x10] sm:$0xf] %vm275, %v263
  %281 = vst.msk [vmem:[%s3 + $0x14] sm:$0xf] %vm275, %v264
  %282 = vst.msk [vmem:[%s3 + $0x18] sm:$0xf] %vm275, %v265
  %283 = vst.msk [vmem:[%s3 + $0x1c] sm:$0xf] %vm275, %v266
  %284 = vst.msk [vmem:[%s3 + $0x20] sm:$0xf] %vm275, %v267
  %285 = vst.msk [vmem:[%s3 + $0x24] sm:$0xf] %vm275, %v268
  %286 = vst.msk [vmem:[%s3 + $0x28] sm:$0xf] %vm275, %v269
  %287 = vst.msk [vmem:[%s3 + $0x2c] sm:$0xf] %vm275, %v270
  %288 = vst.msk [vmem:[%s3 + $0x30] sm:$0xf] %vm275, %v271
  %289 = vst.msk [vmem:[%s3 + $0x34] sm:$0xf] %vm275, %v272
  %290 = vst.msk [vmem:[%s3 + $0x38] sm:$0xf] %vm275, %v273
  %291 = vst.msk [vmem:[%s3 + $0x3c] sm:$0xf] %vm275, %v274
  // Predicated region
  $region14: #{ppo_atari_snd_forward.13} parent=0 // pred_check
    _
  $region15: #{ppo_atari_snd_forward.13} parent=0 // pred_check_branch
    %293 = sbr.rel (0) target = $region17
  $region16: #{ppo_atari_snd_forward.13} parent=0 // pred_region
    _
  $region17: #{ppo_atari_snd_forward.13} parent=0 // pred_fallthru
    _
  // Predicated region
  $region18: #{ppo_atari_snd_forward.13} parent=0 // pred_check
    _
  $region19: #{ppo_atari_snd_forward.13} parent=0 // pred_check_branch
    %295 = sbr.rel (0) target = $region21
  $region20: #{ppo_atari_snd_forward.13} parent=0 // pred_region
    _
  $region21: #{ppo_atari_snd_forward.13} parent=0 // pred_fallthru
    _

// kernel: ppo_atari_snd_forward.14
$region0: #{ppo_atari_snd_forward.14}
  #allocation0 [shape = 'u32[]', space=smem, size = 0x4, offset = 0x4, fixed_abs, tag = 'smem constant byte address 0x4 - core index']
  #allocation1 [shape = 'u32[72,128]{1,0:T(1,128)}', space=vmem, size = 0x9000, scoped, tag = 'internal scratch']
  %s0 = inlined_call_operand.vmem [shape: bf16[32,288], index: 0, kind: input, shape index: {}]
  %s1 = inlined_call_operand.vmem [shape: bf16[288,64], index: 1, kind: input, shape index: {}]
  %s2 = inlined_call_operand.vmem [shape: f32[1,64], index: 2, kind: input, shape index: {}]
  %s3 = inlined_call_operand.vmem [shape: bf16[32,64], index: 3, kind: output, shape index: {}]
  %s4 = sld [smem:[#allocation0]]
  $region22: #{ppo_atari_snd_forward.14} parent=0
    _
  %s6 = ssub.s32 1, %s4
  %s7 = scalar_select 0, %s6, %s4
  // Predicated region
  $region2: #{ppo_atari_snd_forward.14} parent=0 // pred_check
    _
  $region3: #{ppo_atari_snd_forward.14} parent=0 // pred_check_branch
    %9 = sbr.rel (0) target = $region5
  $region4: #{ppo_atari_snd_forward.14} parent=0 // pred_region
    _
  $region5: #{ppo_atari_snd_forward.14} parent=0 // pred_fallthru
    _
  // Predicated region
  $region6: #{ppo_atari_snd_forward.14} parent=0 // pred_check
    _
  $region7: #{ppo_atari_snd_forward.14} parent=0 // pred_check_branch
    %11 = sbr.rel (0) target = $region9
  $region8: #{ppo_atari_snd_forward.14} parent=0 // pred_region
    _
  $region9: #{ppo_atari_snd_forward.14} parent=0 // pred_fallthru
    _
  // Predicated region
  $region10: #{ppo_atari_snd_forward.14} parent=0 // pred_check
    _
  $region11: #{ppo_atari_snd_forward.14} parent=0 // pred_check_branch
    %13 = sbr.rel (0) target = $region13
  $region12: #{ppo_atari_snd_forward.14} parent=0 // pred_region
    _
  $region13: #{ppo_atari_snd_forward.14} parent=0 // pred_fallthru
    _
  %v15 = vld [vmem:[%s0] sm:$0xff]
  %v16 = vld [vmem:[%s0 + $0x8] sm:$0xf]
  %v17 = vld [vmem:[%s0 + $0xc] sm:$0xff]
  %v18 = vld [vmem:[%s0 + $0x14] sm:$0xf]
  %v19 = vld [vmem:[%s0 + $0x18] sm:$0xff]
  %v20 = vld [vmem:[%s0 + $0x20] sm:$0xf]
  %v21 = vld [vmem:[%s0 + $0x24] sm:$0xff]
  %v22 = vld [vmem:[%s0 + $0x2c] sm:$0xf]
  %v23 = vld [vmem:[%s1] sm:$0xf]
  %v24 = vld [vmem:[%s1 + $0x4] sm:$0xf]
  %v25 = vld [vmem:[%s1 + $0x8] sm:$0xf]
  %v26 = vld [vmem:[%s1 + $0xc] sm:$0xf]
  %v27 = vld [vmem:[%s1 + $0x10] sm:$0xf]
  %v28 = vld [vmem:[%s1 + $0x14] sm:$0xf]
  %v29 = vld [vmem:[%s1 + $0x18] sm:$0xf]
  %v30 = vld [vmem:[%s1 + $0x1c] sm:$0xf]
  %v31 = vld [vmem:[%s1 + $0x20] sm:$0xf]
  %v32 = vld [vmem:[%s1 + $0x24] sm:$0xf]
  %v33 = vld [vmem:[%s1 + $0x28] sm:$0xf]
  %v34 = vld [vmem:[%s1 + $0x2c] sm:$0xf]
  %v35 = vld [vmem:[%s1 + $0x30] sm:$0xf]
  %v36 = vld [vmem:[%s1 + $0x34] sm:$0xf]
  %v37 = vld [vmem:[%s1 + $0x38] sm:$0xf]
  %v38 = vld [vmem:[%s1 + $0x3c] sm:$0xf]
  %v39 = vld [vmem:[%s1 + $0x40] sm:$0xf]
  %v40 = vld [vmem:[%s1 + $0x44] sm:$0xf]
  %v41 = vld [vmem:[%s1 + $0x48] sm:$0xf]
  %v42 = vld [vmem:[%s1 + $0x4c] sm:$0xf]
  %v43 = vld [vmem:[%s1 + $0x50] sm:$0xf]
  %v44 = vld [vmem:[%s1 + $0x54] sm:$0xf]
  %v45 = vld [vmem:[%s1 + $0x58] sm:$0xf]
  %v46 = vld [vmem:[%s1 + $0x5c] sm:$0xf]
  %v47 = vld [vmem:[%s1 + $0x60] sm:$0xf]
  %v48 = vld [vmem:[%s1 + $0x64] sm:$0xf]
  %v49 = vld [vmem:[%s1 + $0x68] sm:$0xf]
  %v50 = vld [vmem:[%s1 + $0x6c] sm:$0xf]
  %v51 = vld [vmem:[%s1 + $0x70] sm:$0xf]
  %v52 = vld [vmem:[%s1 + $0x74] sm:$0xf]
  %v53 = vld [vmem:[%s1 + $0x78] sm:$0xf]
  %v54 = vld [vmem:[%s1 + $0x7c] sm:$0xf]
  %v55 = vld [vmem:[%s1 + $0x80] sm:$0xf]
  %v56 = vld [vmem:[%s1 + $0x84] sm:$0xf]
  %v57 = vld [vmem:[%s1 + $0x88] sm:$0xf]
  %v58 = vld [vmem:[%s1 + $0x8c] sm:$0xf]
  %v59 = vld [vmem:[%s2] sm:$0x1]
  %v61 = vperm.slane %v59, 0
  %v71 = vunpack.c.l.b16 %v15
  %v72 = vunpack.c.h.b16 %v15
  %v73 = vunpack.c.l.b16 %v16
  %v74 = vunpack.c.l.b16 %v17
  %v75 = vunpack.c.h.b16 %v17
  %v76 = vunpack.c.l.b16 %v18
  %v77 = vunpack.c.l.b16 %v19
  %v78 = vunpack.c.h.b16 %v19
  %v79 = vunpack.c.l.b16 %v20
  %v80 = vunpack.c.l.b16 %v21
  %v81 = vunpack.c.h.b16 %v21
  %v82 = vunpack.c.l.b16 %v22
  %v83 = vpack.c.b16 %v74, %v71
  %v84 = vpack.c.b16 %v75, %v72
  %v85 = vpack.c.b16 %v76, %v73
  %v86 = vpack.c.b16 %v80, %v77
  %v87 = vpack.c.b16 %v81, %v78
  %v88 = vpack.c.b16 %v82, %v79
  %v129 = vunpack.c.l.b16 %v23
  %v130 = vunpack.c.l.b16 %v24
  %v131 = vunpack.c.l.b16 %v25
  %v132 = vunpack.c.l.b16 %v26
  %v133 = vunpack.c.l.b16 %v27
  %v134 = vunpack.c.l.b16 %v28
  %v135 = vunpack.c.l.b16 %v29
  %v136 = vunpack.c.l.b16 %v30
  %v137 = vunpack.c.l.b16 %v31
  %v138 = vunpack.c.l.b16 %v32
  %v139 = vunpack.c.l.b16 %v33
  %v140 = vunpack.c.l.b16 %v34
  %v141 = vunpack.c.l.b16 %v35
  %v142 = vunpack.c.l.b16 %v36
  %v143 = vunpack.c.l.b16 %v37
  %v144 = vunpack.c.l.b16 %v38
  %v145 = vunpack.c.l.b16 %v39
  %v146 = vunpack.c.l.b16 %v40
  %v147 = vunpack.c.l.b16 %v41
  %v148 = vunpack.c.l.b16 %v42
  %v149 = vunpack.c.l.b16 %v43
  %v150 = vunpack.c.l.b16 %v44
  %v151 = vunpack.c.l.b16 %v45
  %v152 = vunpack.c.l.b16 %v46
  %v153 = vunpack.c.l.b16 %v47
  %v154 = vunpack.c.l.b16 %v48
  %v155 = vunpack.c.l.b16 %v49
  %v156 = vunpack.c.l.b16 %v50
  %v157 = vunpack.c.l.b16 %v51
  %v158 = vunpack.c.l.b16 %v52
  %v159 = vunpack.c.l.b16 %v53
  %v160 = vunpack.c.l.b16 %v54
  %v161 = vunpack.c.l.b16 %v55
  %v162 = vunpack.c.l.b16 %v56
  %v163 = vunpack.c.l.b16 %v57
  %v164 = vunpack.c.l.b16 %v58
  %v165 = vpack.c.b16 %v130, %v129
  %v166 = vpack.c.b16 %v132, %v131
  %v167 = vpack.c.b16 %v134, %v133
  %v168 = vpack.c.b16 %v136, %v135
  %v169 = vpack.c.b16 %v138, %v137
  %v170 = vpack.c.b16 %v140, %v139
  %v171 = vpack.c.b16 %v142, %v141
  %v172 = vpack.c.b16 %v144, %v143
  %v173 = vpack.c.b16 %v146, %v145
  %v174 = vpack.c.b16 %v148, %v147
  %v175 = vpack.c.b16 %v150, %v149
  %v176 = vpack.c.b16 %v152, %v151
  %v177 = vpack.c.b16 %v154, %v153
  %v178 = vpack.c.b16 %v156, %v155
  %v179 = vpack.c.b16 %v158, %v157
  %v180 = vpack.c.b16 %v160, %v159
  %v181 = vpack.c.b16 %v162, %v161
  %v182 = vpack.c.b16 %v164, %v163
  %vm201 = vcmask 261120
  %v203 = vsel %vm201, %v85, 0
  %v206 = vsel %vm201, %v88, 0
  %208 = vmatpush.bf16.msra.mxu0 %v172
  %209 = vmatpush.bf16.msra.mxu0 %v171
  %210 = vmatpush.bf16.msra.mxu0 %v170
  %211 = vmatpush.bf16.msra.mxu0 %v169
  %212 = vmatpush.bf16.msra.mxu0 %v168
  %213 = vmatpush.bf16.msra.mxu0 %v167
  %214 = vmatpush.bf16.msra.mxu0 %v166
  %215 = vmatpush.bf16.msra.mxu0 %v165
  %216 = vmatmul.bf16.gmra.mxu0 %v83
  %v217 = vpop.f32.mrf.mxu0
  %v218 = vadd.f32 %v61, %v217
  %v219 = vpop.f32.mrf.mxu0
  %v220 = vadd.f32 %v61, %v219
  %221 = vmatmul.bf16.gmra.mxu0 %v86
  %v222 = vpop.f32.mrf.mxu0
  %v223 = vadd.f32 %v61, %v222
  %v224 = vpop.f32.mrf.mxu0
  %v225 = vadd.f32 %v61, %v224
  %226 = vdwg.mxu0
  %227 = vmatpush.bf16.msra.mxu0 %v180
  %228 = vmatpush.bf16.msra.mxu0 %v179
  %229 = vmatpush.bf16.msra.mxu0 %v178
  %230 = vmatpush.bf16.msra.mxu0 %v177
  %231 = vmatpush.bf16.msra.mxu0 %v176
  %232 = vmatpush.bf16.msra.mxu0 %v175
  %233 = vmatpush.bf16.msra.mxu0 %v174
  %234 = vmatpush.bf16.msra.mxu0 %v173
  %235 = vmatmul.bf16.gmra.mxu0 %v84
  %v236 = vpop.f32.mrf.mxu0
  %v237 = vadd.f32 %v218, %v236
  %v238 = vpop.f32.mrf.mxu0
  %v239 = vadd.f32 %v220, %v238
  %240 = vmatmul.bf16.gmra.mxu0 %v87
  %v241 = vpop.f32.mrf.mxu0
  %v242 = vadd.f32 %v223, %v241
  %v243 = vpop.f32.mrf.mxu0
  %v244 = vadd.f32 %v225, %v243
  %245 = vdwg.mxu0
  %246 = vmatpush.bf16.msra.mxu0 0
  %247 = vmatpush.bf16.msra.mxu0 0
  %248 = vmatpush.bf16.msra.mxu0 0
  %249 = vmatpush.bf16.msra.mxu0 0
  %250 = vmatpush.bf16.msra.mxu0 0
  %251 = vmatpush.bf16.msra.mxu0 0
  %252 = vmatpush.bf16.msra.mxu0 %v182
  %253 = vmatpush.bf16.msra.mxu0 %v181
  %254 = vmatmul.bf16.gmra.mxu0 %v203
  %v255 = vpop.f32.mrf.mxu0
  %v256 = vadd.f32 %v237, %v255
  %v257 = vpop.f32.mrf.mxu0
  %v258 = vadd.f32 %v239, %v257
  %259 = vmatmul.bf16.gmra.mxu0 %v206
  %v260 = vpop.f32.mrf.mxu0
  %v261 = vadd.f32 %v242, %v260
  %v262 = vpop.f32.mrf.mxu0
  %v263 = vadd.f32 %v244, %v262
  %264 = vdwg.mxu0
  %vm265 = vcmp.gt.f32.partialorder %v256, 0.0
  %vm266 = vcmp.gt.f32.partialorder %v258, 0.0
  %vm267 = vcmp.gt.f32.partialorder %v261, 0.0
  %vm268 = vcmp.gt.f32.partialorder %v263, 0.0
  %v269 = vmin.f32 %v256, 0.0
  %v270 = vmin.f32 %v258, 0.0
  %v271 = vmin.f32 %v261, 0.0
  %v272 = vmin.f32 %v263, 0.0
  %v273 = vmul.f32 %v269, 1.442695
  %v274 = vpow.pop %v273
  %v275 = vmul.f32 %v270, 1.442695
  %v276 = vpow.pop %v275
  %v277 = vmul.f32 %v271, 1.442695
  %v278 = vpow.pop %v277
  %v279 = vmul.f32 %v272, 1.442695
  %v280 = vpow.pop %v279
  %v281 = vsub.f32 %v274, 1.0
  %v282 = vsub.f32 %v276, 1.0
  %v283 = vsub.f32 %v278, 1.0
  %v284 = vsub.f32 %v280, 1.0
  %v285 = vsel %vm265, %v256, %v281
  %v286 = vsel %vm266, %v258, %v282
  %v287 = vsel %vm267, %v261, %v283
  %v288 = vsel %vm268, %v263, %v284
  %v289 = vpack.c.bf16 %v285, %v285
  %v290 = vpack.c.bf16 %v286, %v286
  %v291 = vpack.c.bf16 %v287, %v287
  %v292 = vpack.c.bf16 %v288, %v288
  %vm293 = vcmask 519168
  %294 = vst.msk [vmem:[%s3] sm:$0xf] %vm293, %v289
  %295 = vst.msk [vmem:[%s3 + $0x4] sm:$0xf] %vm293, %v290
  %296 = vst.msk [vmem:[%s3 + $0x8] sm:$0xf] %vm293, %v291
  %297 = vst.msk [vmem:[%s3 + $0xc] sm:$0xf] %vm293, %v292
  // Predicated region
  $region14: #{ppo_atari_snd_forward.14} parent=0 // pred_check
    _
  $region15: #{ppo_atari_snd_forward.14} parent=0 // pred_check_branch
    %299 = sbr.rel (0) target = $region17
  $region16: #{ppo_atari_snd_forward.14} parent=0 // pred_region
    _
  $region17: #{ppo_atari_snd_forward.14} parent=0 // pred_fallthru
    _
  // Predicated region
  $region18: #{ppo_atari_snd_forward.14} parent=0 // pred_check
    _
  $region19: #{ppo_atari_snd_forward.14} parent=0 // pred_check_branch
    %301 = sbr.rel (0) target = $region21
  $region20: #{ppo_atari_snd_forward.14} parent=0 // pred_region
    _
  $region21: #{ppo_atari_snd_forward.14} parent=0 // pred_fallthru
    _

// kernel: ppo_atari_snd_forward.15
$region0: #{ppo_atari_snd_forward.15}
  #allocation0 [shape = 'u32[]', space=smem, size = 0x4, offset = 0x4, fixed_abs, tag = 'smem constant byte address 0x4 - core index']
  #allocation1 [shape = 'u32[72,128]{1,0:T(1,128)}', space=vmem, size = 0x9000, scoped, tag = 'internal scratch']
  %s0 = inlined_call_operand.vmem [shape: bf16[8,576], index: 0, kind: input, shape index: {}]
  %s1 = inlined_call_operand.vmem [shape: bf16[576,64], index: 1, kind: input, shape index: {}]
  %s2 = inlined_call_operand.vmem [shape: f32[1,64], index: 2, kind: input, shape index: {}]
  %s3 = inlined_call_operand.vmem [shape: bf16[8,64], index: 3, kind: output, shape index: {}]
  %s4 = sld [smem:[#allocation0]]
  $region22: #{ppo_atari_snd_forward.15} parent=0
    _
  %s6 = ssub.s32 1, %s4
  %s7 = scalar_select 0, %s6, %s4
  // Predicated region
  $region2: #{ppo_atari_snd_forward.15} parent=0 // pred_check
    _
  $region3: #{ppo_atari_snd_forward.15} parent=0 // pred_check_branch
    %9 = sbr.rel (0) target = $region5
  $region4: #{ppo_atari_snd_forward.15} parent=0 // pred_region
    _
  $region5: #{ppo_atari_snd_forward.15} parent=0 // pred_fallthru
    _
  // Predicated region
  $region6: #{ppo_atari_snd_forward.15} parent=0 // pred_check
    _
  $region7: #{ppo_atari_snd_forward.15} parent=0 // pred_check_branch
    %11 = sbr.rel (0) target = $region9
  $region8: #{ppo_atari_snd_forward.15} parent=0 // pred_region
    _
  $region9: #{ppo_atari_snd_forward.15} parent=0 // pred_fallthru
    _
  // Predicated region
  $region10: #{ppo_atari_snd_forward.15} parent=0 // pred_check
    _
  $region11: #{ppo_atari_snd_forward.15} parent=0 // pred_check_branch
    %13 = sbr.rel (0) target = $region13
  $region12: #{ppo_atari_snd_forward.15} parent=0 // pred_region
    _
  $region13: #{ppo_atari_snd_forward.15} parent=0 // pred_fallthru
    _
  %v15 = vld [vmem:[%s0] sm:$0xff]
  %v16 = vld [vmem:[%s0 + $0x8] sm:$0xff]
  %v17 = vld [vmem:[%s0 + $0x10] sm:$0xf]
  %v18 = vld [vmem:[%s1] sm:$0xf]
  %v19 = vld [vmem:[%s1 + $0x4] sm:$0xf]
  %v20 = vld [vmem:[%s1 + $0x8] sm:$0xf]
  %v21 = vld [vmem:[%s1 + $0xc] sm:$0xf]
  %v22 = vld [vmem:[%s1 + $0x10] sm:$0xf]
  %v23 = vld [vmem:[%s1 + $0x14] sm:$0xf]
  %v24 = vld [vmem:[%s1 + $0x18] sm:$0xf]
  %v25 = vld [vmem:[%s1 + $0x1c] sm:$0xf]
  %v26 = vld [vmem:[%s1 + $0x20] sm:$0xf]
  %v27 = vld [vmem:[%s1 + $0x24] sm:$0xf]
  %v28 = vld [vmem:[%s1 + $0x28] sm:$0xf]
  %v29 = vld [vmem:[%s1 + $0x2c] sm:$0xf]
  %v30 = vld [vmem:[%s1 + $0x30] sm:$0xf]
  %v31 = vld [vmem:[%s1 + $0x34] sm:$0xf]
  %v32 = vld [vmem:[%s1 + $0x38] sm:$0xf]
  %v33 = vld [vmem:[%s1 + $0x3c] sm:$0xf]
  %v34 = vld [vmem:[%s1 + $0x40] sm:$0xf]
  %v35 = vld [vmem:[%s1 + $0x44] sm:$0xf]
  %v36 = vld [vmem:[%s1 + $0x48] sm:$0xf]
  %v37 = vld [vmem:[%s1 + $0x4c] sm:$0xf]
  %v38 = vld [vmem:[%s1 + $0x50] sm:$0xf]
  %v39 = vld [vmem:[%s1 + $0x54] sm:$0xf]
  %v40 = vld [vmem:[%s1 + $0x58] sm:$0xf]
  %v41 = vld [vmem:[%s1 + $0x5c] sm:$0xf]
  %v42 = vld [vmem:[%s1 + $0x60] sm:$0xf]
  %v43 = vld [vmem:[%s1 + $0x64] sm:$0xf]
  %v44 = vld [vmem:[%s1 + $0x68] sm:$0xf]
  %v45 = vld [vmem:[%s1 + $0x6c] sm:$0xf]
  %v46 = vld [vmem:[%s1 + $0x70] sm:$0xf]
  %v47 = vld [vmem:[%s1 + $0x74] sm:$0xf]
  %v48 = vld [vmem:[%s1 + $0x78] sm:$0xf]
  %v49 = vld [vmem:[%s1 + $0x7c] sm:$0xf]
  %v50 = vld [vmem:[%s1 + $0x80] sm:$0xf]
  %v51 = vld [vmem:[%s1 + $0x84] sm:$0xf]
  %v52 = vld [vmem:[%s1 + $0x88] sm:$0xf]
  %v53 = vld [vmem:[%s1 + $0x8c] sm:$0xf]
  %v54 = vld [vmem:[%s1 + $0x90] sm:$0xf]
  %v55 = vld [vmem:[%s1 + $0x94] sm:$0xf]
  %v56 = vld [vmem:[%s1 + $0x98] sm:$0xf]
  %v57 = vld [vmem:[%s1 + $0x9c] sm:$0xf]
  %v58 = vld [vmem:[%s1 + $0xa0] sm:$0xf]
  %v59 = vld [vmem:[%s1 + $0xa4] sm:$0xf]
  %v60 = vld [vmem:[%s1 + $0xa8] sm:$0xf]
  %v61 = vld [vmem:[%s1 + $0xac] sm:$0xf]
  %v62 = vld [vmem:[%s1 + $0xb0] sm:$0xf]
  %v63 = vld [vmem:[%s1 + $0xb4] sm:$0xf]
  %v64 = vld [vmem:[%s1 + $0xb8] sm:$0xf]
  %v65 = vld [vmem:[%s1 + $0xbc] sm:$0xf]
  %v66 = vld [vmem:[%s1 + $0xc0] sm:$0xf]
  %v67 = vld [vmem:[%s1 + $0xc4] sm:$0xf]
  %v68 = vld [vmem:[%s1 + $0xc8] sm:$0xf]
  %v69 = vld [vmem:[%s1 + $0xcc] sm:$0xf]
  %v70 = vld [vmem:[%s1 + $0xd0] sm:$0xf]
  %v71 = vld [vmem:[%s1 + $0xd4] sm:$0xf]
  %v72 = vld [vmem:[%s1 + $0xd8] sm:$0xf]
  %v73 = vld [vmem:[%s1 + $0xdc] sm:$0xf]
  %v74 = vld [vmem:[%s1 + $0xe0] sm:$0xf]
  %v75 = vld [vmem:[%s1 + $0xe4] sm:$0xf]
  %v76 = vld [vmem:[%s1 + $0xe8] sm:$0xf]
  %v77 = vld [vmem:[%s1 + $0xec] sm:$0xf]
  %v78 = vld [vmem:[%s1 + $0xf0] sm:$0xf]
  %v79 = vld [vmem:[%s1 + $0xf4] sm:$0xf]
  %v80 = vld [vmem:[%s1 + $0xf8] sm:$0xf]
  %v81 = vld [vmem:[%s1 + $0xfc] sm:$0xf]
  %v82 = vld [vmem:[%s1 + $0x100] sm:$0xf]
  %v83 = vld [vmem:[%s1 + $0x104] sm:$0xf]
  %v84 = vld [vmem:[%s1 + $0x108] sm:$0xf]
  %v85 = vld [vmem:[%s1 + $0x10c] sm:$0xf]
  %v86 = vld [vmem:[%s1 + $0x110] sm:$0xf]
  %v87 = vld [vmem:[%s1 + $0x114] sm:$0xf]
  %v88 = vld [vmem:[%s1 + $0x118] sm:$0xf]
  %v89 = vld [vmem:[%s1 + $0x11c] sm:$0xf]
  %v90 = vld [vmem:[%s2] sm:$0x1]
  %v92 = vperm.slane %v90, 0
  %v97 = vunpack.c.l.b16 %v15
  %v98 = vunpack.c.h.b16 %v15
  %v99 = vunpack.c.l.b16 %v16
  %v100 = vunpack.c.h.b16 %v16
  %v101 = vunpack.c.l.b16 %v17
  %v102 = vpack.c.b16 %v97, %v97
  %v103 = vpack.c.b16 %v98, %v98
  %v104 = vpack.c.b16 %v99, %v99
  %v105 = vpack.c.b16 %v100, %v100
  %v106 = vpack.c.b16 %v101, %v101
  %v183 = vunpack.c.l.b16 %v18
  %v184 = vunpack.c.l.b16 %v19
  %v185 = vunpack.c.l.b16 %v20
  %v186 = vunpack.c.l.b16 %v21
  %v187 = vunpack.c.l.b16 %v22
  %v188 = vunpack.c.l.b16 %v23
  %v189 = vunpack.c.l.b16 %v24
  %v190 = vunpack.c.l.b16 %v25
  %v191 = vunpack.c.l.b16 %v26
  %v192 = vunpack.c.l.b16 %v27
  %v193 = vunpack.c.l.b16 %v28
  %v194 = vunpack.c.l.b16 %v29
  %v195 = vunpack.c.l.b16 %v30
  %v196 = vunpack.c.l.b16 %v31
  %v197 = vunpack.c.l.b16 %v32
  %v198 = vunpack.c.l.b16 %v33
  %v199 = vunpack.c.l.b16 %v34
  %v200 = vunpack.c.l.b16 %v35
  %v201 = vunpack.c.l.b16 %v36
  %v202 = vunpack.c.l.b16 %v37
  %v203 = vunpack.c.l.b16 %v38
  %v204 = vunpack.c.l.b16 %v39
  %v205 = vunpack.c.l.b16 %v40
  %v206 = vunpack.c.l.b16 %v41
  %v207 = vunpack.c.l.b16 %v42
  %v208 = vunpack.c.l.b16 %v43
  %v209 = vunpack.c.l.b16 %v44
  %v210 = vunpack.c.l.b16 %v45
  %v211 = vunpack.c.l.b16 %v46
  %v212 = vunpack.c.l.b16 %v47
  %v213 = vunpack.c.l.b16 %v48
  %v214 = vunpack.c.l.b16 %v49
  %v215 = vunpack.c.l.b16 %v50
  %v216 = vunpack.c.l.b16 %v51
  %v217 = vunpack.c.l.b16 %v52
  %v218 = vunpack.c.l.b16 %v53
  %v219 = vunpack.c.l.b16 %v54
  %v220 = vunpack.c.l.b16 %v55
  %v221 = vunpack.c.l.b16 %v56
  %v222 = vunpack.c.l.b16 %v57
  %v223 = vunpack.c.l.b16 %v58
  %v224 = vunpack.c.l.b16 %v59
  %v225 = vunpack.c.l.b16 %v60
  %v226 = vunpack.c.l.b16 %v61
  %v227 = vunpack.c.l.b16 %v62
  %v228 = vunpack.c.l.b16 %v63
  %v229 = vunpack.c.l.b16 %v64
  %v230 = vunpack.c.l.b16 %v65
  %v231 = vunpack.c.l.b16 %v66
  %v232 = vunpack.c.l.b16 %v67
  %v233 = vunpack.c.l.b16 %v68
  %v234 = vunpack.c.l.b16 %v69
  %v235 = vunpack.c.l.b16 %v70
  %v236 = vunpack.c.l.b16 %v71
  %v237 = vunpack.c.l.b16 %v72
  %v238 = vunpack.c.l.b16 %v73
  %v239 = vunpack.c.l.b16 %v74
  %v240 = vunpack.c.l.b16 %v75
  %v241 = vunpack.c.l.b16 %v76
  %v242 = vunpack.c.l.b16 %v77
  %v243 = vunpack.c.l.b16 %v78
  %v244 = vunpack.c.l.b16 %v79
  %v245 = vunpack.c.l.b16 %v80
  %v246 = vunpack.c.l.b16 %v81
  %v247 = vunpack.c.l.b16 %v82
  %v248 = vunpack.c.l.b16 %v83
  %v249 = vunpack.c.l.b16 %v84
  %v250 = vunpack.c.l.b16 %v85
  %v251 = vunpack.c.l.b16 %v86
  %v252 = vunpack.c.l.b16 %v87
  %v253 = vunpack.c.l.b16 %v88
  %v254 = vunpack.c.l.b16 %v89
  %v255 = vpack.c.b16 %v184, %v183
  %v256 = vpack.c.b16 %v186, %v185
  %v257 = vpack.c.b16 %v188, %v187
  %v258 = vpack.c.b16 %v190, %v189
  %v259 = vpack.c.b16 %v192, %v191
  %v260 = vpack.c.b16 %v194, %v193
  %v261 = vpack.c.b16 %v196, %v195
  %v262 = vpack.c.b16 %v198, %v197
  %v263 = vpack.c.b16 %v200, %v199
  %v264 = vpack.c.b16 %v202, %v201
  %v265 = vpack.c.b16 %v204, %v203
  %v266 = vpack.c.b16 %v206, %v205
  %v267 = vpack.c.b16 %v208, %v207
  %v268 = vpack.c.b16 %v210, %v209
  %v269 = vpack.c.b16 %v212, %v211
  %v270 = vpack.c.b16 %v214, %v213
  %v271 = vpack.c.b16 %v216, %v215
  %v272 = vpack.c.b16 %v218, %v217
  %v273 = vpack.c.b16 %v220, %v219
  %v274 = vpack.c.b16 %v222, %v221
  %v275 = vpack.c.b16 %v224, %v223
  %v276 = vpack.c.b16 %v226, %v225
  %v277 = vpack.c.b16 %v228, %v227
  %v278 = vpack.c.b16 %v230, %v229
  %v279 = vpack.c.b16 %v232, %v231
  %v280 = vpack.c.b16 %v234, %v233
  %v281 = vpack.c.b16 %v236, %v235
  %v282 = vpack.c.b16 %v238, %v237
  %v283 = vpack.c.b16 %v240, %v239
  %v284 = vpack.c.b16 %v242, %v241
  %v285 = vpack.c.b16 %v244, %v243
  %v286 = vpack.c.b16 %v246, %v245
  %v287 = vpack.c.b16 %v248, %v247
  %v288 = vpack.c.b16 %v250, %v249
  %v289 = vpack.c.b16 %v252, %v251
  %v290 = vpack.c.b16 %v254, %v253
  %vm327 = vcmask 523264
  %v329 = vsel %vm327, %v106, 0
  %331 = vmatpush.bf16.msra.mxu0 %v262
  %332 = vmatpush.bf16.msra.mxu0 %v261
  %333 = vmatpush.bf16.msra.mxu0 %v260
  %334 = vmatpush.bf16.msra.mxu0 %v259
  %335 = vmatpush.bf16.msra.mxu0 %v258
  %336 = vmatpush.bf16.msra.mxu0 %v257
  %337 = vmatpush.bf16.msra.mxu0 %v256
  %338 = vmatpush.bf16.msra.mxu0 %v255
  %339 = vmatmul.bf16.gmra.mxu0 %v102
  %v340 = vpop.f32.mrf.mxu0
  %v341 = vadd.f32 %v92, %v340
  %v342 = vpop.f32.mrf.mxu0
  %343 = vdwg.mxu0
  %344 = vmatpush.bf16.msra.mxu0 %v270
  %345 = vmatpush.bf16.msra.mxu0 %v269
  %346 = vmatpush.bf16.msra.mxu0 %v268
  %347 = vmatpush.bf16.msra.mxu0 %v267
  %348 = vmatpush.bf16.msra.mxu0 %v266
  %349 = vmatpush.bf16.msra.mxu0 %v265
  %350 = vmatpush.bf16.msra.mxu0 %v264
  %351 = vmatpush.bf16.msra.mxu0 %v263
  %352 = vmatmul.bf16.gmra.mxu0 %v103
  %v353 = vpop.f32.mrf.mxu0
  %v354 = vadd.f32 %v341, %v353
  %v355 = vpop.f32.mrf.mxu0
  %356 = vdwg.mxu0
  %357 = vmatpush.bf16.msra.mxu0 %v278
  %358 = vmatpush.bf16.msra.mxu0 %v277
  %359 = vmatpush.bf16.msra.mxu0 %v276
  %360 = vmatpush.bf16.msra.mxu0 %v275
  %361 = vmatpush.bf16.msra.mxu0 %v274
  %362 = vmatpush.bf16.msra.mxu0 %v273
  %363 = vmatpush.bf16.msra.mxu0 %v272
  %364 = vmatpush.bf16.msra.mxu0 %v271
  %365 = vmatmul.bf16.gmra.mxu0 %v104
  %v366 = vpop.f32.mrf.mxu0
  %v367 = vadd.f32 %v354, %v366
  %v368 = vpop.f32.mrf.mxu0
  %369 = vdwg.mxu0
  %370 = vmatpush.bf16.msra.mxu0 %v286
  %371 = vmatpush.bf16.msra.mxu0 %v285
  %372 = vmatpush.bf16.msra.mxu0 %v284
  %373 = vmatpush.bf16.msra.mxu0 %v283
  %374 = vmatpush.bf16.msra.mxu0 %v282
  %375 = vmatpush.bf16.msra.mxu0 %v281
  %376 = vmatpush.bf16.msra.mxu0 %v280
  %377 = vmatpush.bf16.msra.mxu0 %v279
  %378 = vmatmul.bf16.gmra.mxu0 %v105
  %v379 = vpop.f32.mrf.mxu0
  %v380 = vadd.f32 %v367, %v379
  %v381 = vpop.f32.mrf.mxu0
  %382 = vdwg.mxu0
  %383 = vmatpush.bf16.msra.mxu0 0
  %384 = vmatpush.bf16.msra.mxu0 0
  %385 = vmatpush.bf16.msra.mxu0 0
  %386 = vmatpush.bf16.msra.mxu0 0
  %387 = vmatpush.bf16.msra.mxu0 %v290
  %388 = vmatpush.bf16.msra.mxu0 %v289
  %389 = vmatpush.bf16.msra.mxu0 %v288
  %390 = vmatpush.bf16.msra.mxu0 %v287
  %391 = vmatmul.bf16.gmra.mxu0 %v329
  %v392 = vpop.f32.mrf.mxu0
  %v393 = vadd.f32 %v380, %v392
  %v394 = vpop.f32.mrf.mxu0
  %395 = vdwg.mxu0
  %vm396 = vcmp.gt.f32.partialorder %v393, 0.0
  %v397 = vmin.f32 %v393, 0.0
  %v398 = vmul.f32 %v397, 1.442695
  %v399 = vpow.pop %v398
  %v400 = vsub.f32 %v399, 1.0
  %v401 = vsel %vm396, %v393, %v400
  %v402 = vpack.c.bf16 %v401, %v401
  %vm403 = vcmask 519168
  %404 = vst.msk [vmem:[%s3] sm:$0xf] %vm403, %v402
  // Predicated region
  $region14: #{ppo_atari_snd_forward.15} parent=0 // pred_check
    _
  $region15: #{ppo_atari_snd_forward.15} parent=0 // pred_check_branch
    %406 = sbr.rel (0) target = $region17
  $region16: #{ppo_atari_snd_forward.15} parent=0 // pred_region
    _
  $region17: #{ppo_atari_snd_forward.15} parent=0 // pred_fallthru
    _
  // Predicated region
  $region18: #{ppo_atari_snd_forward.15} parent=0 // pred_check
    _
  $region19: #{ppo_atari_snd_forward.15} parent=0 // pred_check_branch
    %408 = sbr.rel (0) target = $region21
  $region20: #{ppo_atari_snd_forward.15} parent=0 // pred_region
    _
  $region21: #{ppo_atari_snd_forward.15} parent=0 // pred_fallthru
    _

// kernel: ppo_atari_snd_forward.16
$region0: #{ppo_atari_snd_forward.16}
  #allocation0 [shape = 'u32[]', space=smem, size = 0x4, offset = 0x4, fixed_abs, tag = 'smem constant byte address 0x4 - core index']
  #allocation1 [shape = 'u32[72,128]{1,0:T(1,128)}', space=vmem, size = 0x9000, scoped, tag = 'internal scratch']
  %s0 = inlined_call_operand.vmem [shape: bf16[8,576], index: 0, kind: input, shape index: {}]
  %s1 = inlined_call_operand.vmem [shape: bf16[576,128], index: 1, kind: input, shape index: {}]
  %s2 = inlined_call_operand.vmem [shape: f32[1,128], index: 2, kind: input, shape index: {}]
  %s3 = inlined_call_operand.vmem [shape: bf16[8,128], index: 3, kind: output, shape index: {}]
  %s4 = sld [smem:[#allocation0]]
  $region22: #{ppo_atari_snd_forward.16} parent=0
    _
  %s6 = ssub.s32 1, %s4
  %s7 = scalar_select 0, %s6, %s4
  // Predicated region
  $region2: #{ppo_atari_snd_forward.16} parent=0 // pred_check
    _
  $region3: #{ppo_atari_snd_forward.16} parent=0 // pred_check_branch
    %9 = sbr.rel (0) target = $region5
  $region4: #{ppo_atari_snd_forward.16} parent=0 // pred_region
    _
  $region5: #{ppo_atari_snd_forward.16} parent=0 // pred_fallthru
    _
  // Predicated region
  $region6: #{ppo_atari_snd_forward.16} parent=0 // pred_check
    _
  $region7: #{ppo_atari_snd_forward.16} parent=0 // pred_check_branch
    %11 = sbr.rel (0) target = $region9
  $region8: #{ppo_atari_snd_forward.16} parent=0 // pred_region
    _
  $region9: #{ppo_atari_snd_forward.16} parent=0 // pred_fallthru
    _
  // Predicated region
  $region10: #{ppo_atari_snd_forward.16} parent=0 // pred_check
    _
  $region11: #{ppo_atari_snd_forward.16} parent=0 // pred_check_branch
    %13 = sbr.rel (0) target = $region13
  $region12: #{ppo_atari_snd_forward.16} parent=0 // pred_region
    _
  $region13: #{ppo_atari_snd_forward.16} parent=0 // pred_fallthru
    _
  %v15 = vld [vmem:[%s0] sm:$0xff]
  %v16 = vld [vmem:[%s0 + $0x8] sm:$0xff]
  %v17 = vld [vmem:[%s0 + $0x10] sm:$0xf]
  %v18 = vld [vmem:[%s1] sm:$0xf]
  %v19 = vld [vmem:[%s1 + $0x4] sm:$0xf]
  %v20 = vld [vmem:[%s1 + $0x8] sm:$0xf]
  %v21 = vld [vmem:[%s1 + $0xc] sm:$0xf]
  %v22 = vld [vmem:[%s1 + $0x10] sm:$0xf]
  %v23 = vld [vmem:[%s1 + $0x14] sm:$0xf]
  %v24 = vld [vmem:[%s1 + $0x18] sm:$0xf]
  %v25 = vld [vmem:[%s1 + $0x1c] sm:$0xf]
  %v26 = vld [vmem:[%s1 + $0x20] sm:$0xf]
  %v27 = vld [vmem:[%s1 + $0x24] sm:$0xf]
  %v28 = vld [vmem:[%s1 + $0x28] sm:$0xf]
  %v29 = vld [vmem:[%s1 + $0x2c] sm:$0xf]
  %v30 = vld [vmem:[%s1 + $0x30] sm:$0xf]
  %v31 = vld [vmem:[%s1 + $0x34] sm:$0xf]
  %v32 = vld [vmem:[%s1 + $0x38] sm:$0xf]
  %v33 = vld [vmem:[%s1 + $0x3c] sm:$0xf]
  %v34 = vld [vmem:[%s1 + $0x40] sm:$0xf]
  %v35 = vld [vmem:[%s1 + $0x44] sm:$0xf]
  %v36 = vld [vmem:[%s1 + $0x48] sm:$0xf]
  %v37 = vld [vmem:[%s1 + $0x4c] sm:$0xf]
  %v38 = vld [vmem:[%s1 + $0x50] sm:$0xf]
  %v39 = vld [vmem:[%s1 + $0x54] sm:$0xf]
  %v40 = vld [vmem:[%s1 + $0x58] sm:$0xf]
  %v41 = vld [vmem:[%s1 + $0x5c] sm:$0xf]
  %v42 = vld [vmem:[%s1 + $0x60] sm:$0xf]
  %v43 = vld [vmem:[%s1 + $0x64] sm:$0xf]
  %v44 = vld [vmem:[%s1 + $0x68] sm:$0xf]
  %v45 = vld [vmem:[%s1 + $0x6c] sm:$0xf]
  %v46 = vld [vmem:[%s1 + $0x70] sm:$0xf]
  %v47 = vld [vmem:[%s1 + $0x74] sm:$0xf]
  %v48 = vld [vmem:[%s1 + $0x78] sm:$0xf]
  %v49 = vld [vmem:[%s1 + $0x7c] sm:$0xf]
  %v50 = vld [vmem:[%s1 + $0x80] sm:$0xf]
  %v51 = vld [vmem:[%s1 + $0x84] sm:$0xf]
  %v52 = vld [vmem:[%s1 + $0x88] sm:$0xf]
  %v53 = vld [vmem:[%s1 + $0x8c] sm:$0xf]
  %v54 = vld [vmem:[%s1 + $0x90] sm:$0xf]
  %v55 = vld [vmem:[%s1 + $0x94] sm:$0xf]
  %v56 = vld [vmem:[%s1 + $0x98] sm:$0xf]
  %v57 = vld [vmem:[%s1 + $0x9c] sm:$0xf]
  %v58 = vld [vmem:[%s1 + $0xa0] sm:$0xf]
  %v59 = vld [vmem:[%s1 + $0xa4] sm:$0xf]
  %v60 = vld [vmem:[%s1 + $0xa8] sm:$0xf]
  %v61 = vld [vmem:[%s1 + $0xac] sm:$0xf]
  %v62 = vld [vmem:[%s1 + $0xb0] sm:$0xf]
  %v63 = vld [vmem:[%s1 + $0xb4] sm:$0xf]
  %v64 = vld [vmem:[%s1 + $0xb8] sm:$0xf]
  %v65 = vld [vmem:[%s1 + $0xbc] sm:$0xf]
  %v66 = vld [vmem:[%s1 + $0xc0] sm:$0xf]
  %v67 = vld [vmem:[%s1 + $0xc4] sm:$0xf]
  %v68 = vld [vmem:[%s1 + $0xc8] sm:$0xf]
  %v69 = vld [vmem:[%s1 + $0xcc] sm:$0xf]
  %v70 = vld [vmem:[%s1 + $0xd0] sm:$0xf]
  %v71 = vld [vmem:[%s1 + $0xd4] sm:$0xf]
  %v72 = vld [vmem:[%s1 + $0xd8] sm:$0xf]
  %v73 = vld [vmem:[%s1 + $0xdc] sm:$0xf]
  %v74 = vld [vmem:[%s1 + $0xe0] sm:$0xf]
  %v75 = vld [vmem:[%s1 + $0xe4] sm:$0xf]
  %v76 = vld [vmem:[%s1 + $0xe8] sm:$0xf]
  %v77 = vld [vmem:[%s1 + $0xec] sm:$0xf]
  %v78 = vld [vmem:[%s1 + $0xf0] sm:$0xf]
  %v79 = vld [vmem:[%s1 + $0xf4] sm:$0xf]
  %v80 = vld [vmem:[%s1 + $0xf8] sm:$0xf]
  %v81 = vld [vmem:[%s1 + $0xfc] sm:$0xf]
  %v82 = vld [vmem:[%s1 + $0x100] sm:$0xf]
  %v83 = vld [vmem:[%s1 + $0x104] sm:$0xf]
  %v84 = vld [vmem:[%s1 + $0x108] sm:$0xf]
  %v85 = vld [vmem:[%s1 + $0x10c] sm:$0xf]
  %v86 = vld [vmem:[%s1 + $0x110] sm:$0xf]
  %v87 = vld [vmem:[%s1 + $0x114] sm:$0xf]
  %v88 = vld [vmem:[%s1 + $0x118] sm:$0xf]
  %v89 = vld [vmem:[%s1 + $0x11c] sm:$0xf]
  %v90 = vld [vmem:[%s2] sm:$0x1]
  %v92 = vperm.slane %v90, 0
  %v97 = vunpack.c.l.b16 %v15
  %v98 = vunpack.c.h.b16 %v15
  %v99 = vunpack.c.l.b16 %v16
  %v100 = vunpack.c.h.b16 %v16
  %v101 = vunpack.c.l.b16 %v17
  %v102 = vpack.c.b16 %v97, %v97
  %v103 = vpack.c.b16 %v98, %v98
  %v104 = vpack.c.b16 %v99, %v99
  %v105 = vpack.c.b16 %v100, %v100
  %v106 = vpack.c.b16 %v101, %v101
  %v183 = vunpack.c.l.b16 %v18
  %v184 = vunpack.c.l.b16 %v19
  %v185 = vunpack.c.l.b16 %v20
  %v186 = vunpack.c.l.b16 %v21
  %v187 = vunpack.c.l.b16 %v22
  %v188 = vunpack.c.l.b16 %v23
  %v189 = vunpack.c.l.b16 %v24
  %v190 = vunpack.c.l.b16 %v25
  %v191 = vunpack.c.l.b16 %v26
  %v192 = vunpack.c.l.b16 %v27
  %v193 = vunpack.c.l.b16 %v28
  %v194 = vunpack.c.l.b16 %v29
  %v195 = vunpack.c.l.b16 %v30
  %v196 = vunpack.c.l.b16 %v31
  %v197 = vunpack.c.l.b16 %v32
  %v198 = vunpack.c.l.b16 %v33
  %v199 = vunpack.c.l.b16 %v34
  %v200 = vunpack.c.l.b16 %v35
  %v201 = vunpack.c.l.b16 %v36
  %v202 = vunpack.c.l.b16 %v37
  %v203 = vunpack.c.l.b16 %v38
  %v204 = vunpack.c.l.b16 %v39
  %v205 = vunpack.c.l.b16 %v40
  %v206 = vunpack.c.l.b16 %v41
  %v207 = vunpack.c.l.b16 %v42
  %v208 = vunpack.c.l.b16 %v43
  %v209 = vunpack.c.l.b16 %v44
  %v210 = vunpack.c.l.b16 %v45
  %v211 = vunpack.c.l.b16 %v46
  %v212 = vunpack.c.l.b16 %v47
  %v213 = vunpack.c.l.b16 %v48
  %v214 = vunpack.c.l.b16 %v49
  %v215 = vunpack.c.l.b16 %v50
  %v216 = vunpack.c.l.b16 %v51
  %v217 = vunpack.c.l.b16 %v52
  %v218 = vunpack.c.l.b16 %v53
  %v219 = vunpack.c.l.b16 %v54
  %v220 = vunpack.c.l.b16 %v55
  %v221 = vunpack.c.l.b16 %v56
  %v222 = vunpack.c.l.b16 %v57
  %v223 = vunpack.c.l.b16 %v58
  %v224 = vunpack.c.l.b16 %v59
  %v225 = vunpack.c.l.b16 %v60
  %v226 = vunpack.c.l.b16 %v61
  %v227 = vunpack.c.l.b16 %v62
  %v228 = vunpack.c.l.b16 %v63
  %v229 = vunpack.c.l.b16 %v64
  %v230 = vunpack.c.l.b16 %v65
  %v231 = vunpack.c.l.b16 %v66
  %v232 = vunpack.c.l.b16 %v67
  %v233 = vunpack.c.l.b16 %v68
  %v234 = vunpack.c.l.b16 %v69
  %v235 = vunpack.c.l.b16 %v70
  %v236 = vunpack.c.l.b16 %v71
  %v237 = vunpack.c.l.b16 %v72
  %v238 = vunpack.c.l.b16 %v73
  %v239 = vunpack.c.l.b16 %v74
  %v240 = vunpack.c.l.b16 %v75
  %v241 = vunpack.c.l.b16 %v76
  %v242 = vunpack.c.l.b16 %v77
  %v243 = vunpack.c.l.b16 %v78
  %v244 = vunpack.c.l.b16 %v79
  %v245 = vunpack.c.l.b16 %v80
  %v246 = vunpack.c.l.b16 %v81
  %v247 = vunpack.c.l.b16 %v82
  %v248 = vunpack.c.l.b16 %v83
  %v249 = vunpack.c.l.b16 %v84
  %v250 = vunpack.c.l.b16 %v85
  %v251 = vunpack.c.l.b16 %v86
  %v252 = vunpack.c.l.b16 %v87
  %v253 = vunpack.c.l.b16 %v88
  %v254 = vunpack.c.l.b16 %v89
  %v255 = vpack.c.b16 %v184, %v183
  %v256 = vpack.c.b16 %v186, %v185
  %v257 = vpack.c.b16 %v188, %v187
  %v258 = vpack.c.b16 %v190, %v189
  %v259 = vpack.c.b16 %v192, %v191
  %v260 = vpack.c.b16 %v194, %v193
  %v261 = vpack.c.b16 %v196, %v195
  %v262 = vpack.c.b16 %v198, %v197
  %v263 = vpack.c.b16 %v200, %v199
  %v264 = vpack.c.b16 %v202, %v201
  %v265 = vpack.c.b16 %v204, %v203
  %v266 = vpack.c.b16 %v206, %v205
  %v267 = vpack.c.b16 %v208, %v207
  %v268 = vpack.c.b16 %v210, %v209
  %v269 = vpack.c.b16 %v212, %v211
  %v270 = vpack.c.b16 %v214, %v213
  %v271 = vpack.c.b16 %v216, %v215
  %v272 = vpack.c.b16 %v218, %v217
  %v273 = vpack.c.b16 %v220, %v219
  %v274 = vpack.c.b16 %v222, %v221
  %v275 = vpack.c.b16 %v224, %v223
  %v276 = vpack.c.b16 %v226, %v225
  %v277 = vpack.c.b16 %v228, %v227
  %v278 = vpack.c.b16 %v230, %v229
  %v279 = vpack.c.b16 %v232, %v231
  %v280 = vpack.c.b16 %v234, %v233
  %v281 = vpack.c.b16 %v236, %v235
  %v282 = vpack.c.b16 %v238, %v237
  %v283 = vpack.c.b16 %v240, %v239
  %v284 = vpack.c.b16 %v242, %v241
  %v285 = vpack.c.b16 %v244, %v243
  %v286 = vpack.c.b16 %v246, %v245
  %v287 = vpack.c.b16 %v248, %v247
  %v288 = vpack.c.b16 %v250, %v249
  %v289 = vpack.c.b16 %v252, %v251
  %v290 = vpack.c.b16 %v254, %v253
  %vm327 = vcmask 523264
  %v329 = vsel %vm327, %v106, 0
  %331 = vmatpush.bf16.msra.mxu0 %v262
  %332 = vmatpush.bf16.msra.mxu0 %v261
  %333 = vmatpush.bf16.msra.mxu0 %v260
  %334 = vmatpush.bf16.msra.mxu0 %v259
  %335 = vmatpush.bf16.msra.mxu0 %v258
  %336 = vmatpush.bf16.msra.mxu0 %v257
  %337 = vmatpush.bf16.msra.mxu0 %v256
  %338 = vmatpush.bf16.msra.mxu0 %v255
  %339 = vmatmul.bf16.gmra.mxu0 %v102
  %v340 = vpop.f32.mrf.mxu0
  %v341 = vadd.f32 %v92, %v340
  %v342 = vpop.f32.mrf.mxu0
  %343 = vdwg.mxu0
  %344 = vmatpush.bf16.msra.mxu0 %v270
  %345 = vmatpush.bf16.msra.mxu0 %v269
  %346 = vmatpush.bf16.msra.mxu0 %v268
  %347 = vmatpush.bf16.msra.mxu0 %v267
  %348 = vmatpush.bf16.msra.mxu0 %v266
  %349 = vmatpush.bf16.msra.mxu0 %v265
  %350 = vmatpush.bf16.msra.mxu0 %v264
  %351 = vmatpush.bf16.msra.mxu0 %v263
  %352 = vmatmul.bf16.gmra.mxu0 %v103
  %v353 = vpop.f32.mrf.mxu0
  %v354 = vadd.f32 %v341, %v353
  %v355 = vpop.f32.mrf.mxu0
  %356 = vdwg.mxu0
  %357 = vmatpush.bf16.msra.mxu0 %v278
  %358 = vmatpush.bf16.msra.mxu0 %v277
  %359 = vmatpush.bf16.msra.mxu0 %v276
  %360 = vmatpush.bf16.msra.mxu0 %v275
  %361 = vmatpush.bf16.msra.mxu0 %v274
  %362 = vmatpush.bf16.msra.mxu0 %v273
  %363 = vmatpush.bf16.msra.mxu0 %v272
  %364 = vmatpush.bf16.msra.mxu0 %v271
  %365 = vmatmul.bf16.gmra.mxu0 %v104
  %v366 = vpop.f32.mrf.mxu0
  %v367 = vadd.f32 %v354, %v366
  %v368 = vpop.f32.mrf.mxu0
  %369 = vdwg.mxu0
  %370 = vmatpush.bf16.msra.mxu0 %v286
  %371 = vmatpush.bf16.msra.mxu0 %v285
  %372 = vmatpush.bf16.msra.mxu0 %v284
  %373 = vmatpush.bf16.msra.mxu0 %v283
  %374 = vmatpush.bf16.msra.mxu0 %v282
  %375 = vmatpush.bf16.msra.mxu0 %v281
  %376 = vmatpush.bf16.msra.mxu0 %v280
  %377 = vmatpush.bf16.msra.mxu0 %v279
  %378 = vmatmul.bf16.gmra.mxu0 %v105
  %v379 = vpop.f32.mrf.mxu0
  %v380 = vadd.f32 %v367, %v379
  %v381 = vpop.f32.mrf.mxu0
  %382 = vdwg.mxu0
  %383 = vmatpush.bf16.msra.mxu0 0
  %384 = vmatpush.bf16.msra.mxu0 0
  %385 = vmatpush.bf16.msra.mxu0 0
  %386 = vmatpush.bf16.msra.mxu0 0
  %387 = vmatpush.bf16.msra.mxu0 %v290
  %388 = vmatpush.bf16.msra.mxu0 %v289
  %389 = vmatpush.bf16.msra.mxu0 %v288
  %390 = vmatpush.bf16.msra.mxu0 %v287
  %391 = vmatmul.bf16.gmra.mxu0 %v329
  %v392 = vpop.f32.mrf.mxu0
  %v393 = vadd.f32 %v380, %v392
  %v394 = vpop.f32.mrf.mxu0
  %395 = vdwg.mxu0
  %vm396 = vcmp.gt.f32.partialorder %v393, 0.0
  %v397 = vmin.f32 %v393, 0.0
  %v398 = vmul.f32 %v397, 1.442695
  %v399 = vpow.pop %v398
  %v400 = vsub.f32 %v399, 1.0
  %v401 = vsel %vm396, %v393, %v400
  %v402 = vpack.c.bf16 %v401, %v401
  %403 = vst [vmem:[%s3] sm:$0xf] %v402
  // Predicated region
  $region14: #{ppo_atari_snd_forward.16} parent=0 // pred_check
    _
  $region15: #{ppo_atari_snd_forward.16} parent=0 // pred_check_branch
    %405 = sbr.rel (0) target = $region17
  $region16: #{ppo_atari_snd_forward.16} parent=0 // pred_region
    _
  $region17: #{ppo_atari_snd_forward.16} parent=0 // pred_fallthru
    _
  // Predicated region
  $region18: #{ppo_atari_snd_forward.16} parent=0 // pred_check
    _
  $region19: #{ppo_atari_snd_forward.16} parent=0 // pred_check_branch
    %407 = sbr.rel (0) target = $region21
  $region20: #{ppo_atari_snd_forward.16} parent=0 // pred_region
    _
  $region21: #{ppo_atari_snd_forward.16} parent=0 // pred_fallthru
    _

// kernel: ppo_atari_snd_forward.9
$region0: #{ppo_atari_snd_forward.9}
  #allocation0 [shape = 'u32[]', space=smem, size = 0x4, offset = 0x4, fixed_abs, tag = 'smem constant byte address 0x4 - core index']
  #allocation1 [shape = 'u32[72,128]{1,0:T(1,128)}', space=vmem, size = 0x9000, scoped, tag = 'internal scratch']
  %s0 = inlined_call_operand.vmem [shape: bf16[128,36], index: 0, kind: input, shape index: {}]
  %s1 = inlined_call_operand.vmem [shape: bf16[36,32], index: 1, kind: input, shape index: {}]
  %s2 = inlined_call_operand.vmem [shape: f32[1,32], index: 2, kind: input, shape index: {}]
  %s3 = inlined_call_operand.vmem [shape: bf16[128,32], index: 3, kind: output, shape index: {}]
  %s4 = sld [smem:[#allocation0]]
  $region22: #{ppo_atari_snd_forward.9} parent=0
    _
  %s6 = ssub.s32 1, %s4
  %s7 = scalar_select 0, %s6, %s4
  // Predicated region
  $region2: #{ppo_atari_snd_forward.9} parent=0 // pred_check
    _
  $region3: #{ppo_atari_snd_forward.9} parent=0 // pred_check_branch
    %9 = sbr.rel (0) target = $region5
  $region4: #{ppo_atari_snd_forward.9} parent=0 // pred_region
    _
  $region5: #{ppo_atari_snd_forward.9} parent=0 // pred_fallthru
    _
  // Predicated region
  $region6: #{ppo_atari_snd_forward.9} parent=0 // pred_check
    _
  $region7: #{ppo_atari_snd_forward.9} parent=0 // pred_check_branch
    %11 = sbr.rel (0) target = $region9
  $region8: #{ppo_atari_snd_forward.9} parent=0 // pred_region
    _
  $region9: #{ppo_atari_snd_forward.9} parent=0 // pred_fallthru
    _
  // Predicated region
  $region10: #{ppo_atari_snd_forward.9} parent=0 // pred_check
    _
  $region11: #{ppo_atari_snd_forward.9} parent=0 // pred_check_branch
    %13 = sbr.rel (0) target = $region13
  $region12: #{ppo_atari_snd_forward.9} parent=0 // pred_region
    _
  $region13: #{ppo_atari_snd_forward.9} parent=0 // pred_fallthru
    _
  %v15 = vld [vmem:[%s0] sm:$0xf]
  %v16 = vld [vmem:[%s0 + $0x4] sm:$0xf]
  %v17 = vld [vmem:[%s0 + $0x8] sm:$0xf]
  %v18 = vld [vmem:[%s0 + $0xc] sm:$0xf]
  %v19 = vld [vmem:[%s0 + $0x10] sm:$0xf]
  %v20 = vld [vmem:[%s0 + $0x14] sm:$0xf]
  %v21 = vld [vmem:[%s0 + $0x18] sm:$0xf]
  %v22 = vld [vmem:[%s0 + $0x1c] sm:$0xf]
  %v23 = vld [vmem:[%s0 + $0x20] sm:$0xf]
  %v24 = vld [vmem:[%s0 + $0x24] sm:$0xf]
  %v25 = vld [vmem:[%s0 + $0x28] sm:$0xf]
  %v26 = vld [vmem:[%s0 + $0x2c] sm:$0xf]
  %v27 = vld [vmem:[%s0 + $0x30] sm:$0xf]
  %v28 = vld [vmem:[%s0 + $0x34] sm:$0xf]
  %v29 = vld [vmem:[%s0 + $0x38] sm:$0xf]
  %v30 = vld [vmem:[%s0 + $0x3c] sm:$0xf]
  %v31 = vld [vmem:[%s1] sm:$0xf]
  %v32 = vld [vmem:[%s1 + $0x4] sm:$0xf]
  %v33 = vld [vmem:[%s1 + $0x8] sm:$0xf]
  %v34 = vld [vmem:[%s1 + $0xc] sm:$0xf]
  %v35 = vld [vmem:[%s1 + $0x10] sm:$0x3]
  %v36 = vld [vmem:[%s2] sm:$0x1]
  %v38 = vperm.slane %v36, 0
  %v56 = vunpack.c.l.b16 %v15
  %v57 = vunpack.c.l.b16 %v16
  %v58 = vunpack.c.l.b16 %v17
  %v59 = vunpack.c.l.b16 %v18
  %v60 = vunpack.c.l.b16 %v19
  %v61 = vunpack.c.l.b16 %v20
  %v62 = vunpack.c.l.b16 %v21
  %v63 = vunpack.c.l.b16 %v22
  %v64 = vunpack.c.l.b16 %v23
  %v65 = vunpack.c.l.b16 %v24
  %v66 = vunpack.c.l.b16 %v25
  %v67 = vunpack.c.l.b16 %v26
  %v68 = vunpack.c.l.b16 %v27
  %v69 = vunpack.c.l.b16 %v28
  %v70 = vunpack.c.l.b16 %v29
  %v71 = vunpack.c.l.b16 %v30
  %v72 = vpack.c.b16 %v57, %v56
  %v73 = vpack.c.b16 %v59, %v58
  %v74 = vpack.c.b16 %v61, %v60
  %v75 = vpack.c.b16 %v63, %v62
  %v76 = vpack.c.b16 %v65, %v64
  %v77 = vpack.c.b16 %v67, %v66
  %v78 = vpack.c.b16 %v69, %v68
  %v79 = vpack.c.b16 %v71, %v70
  %v85 = vunpack.c.l.b16 %v31
  %v86 = vunpack.c.l.b16 %v32
  %v87 = vunpack.c.l.b16 %v33
  %v88 = vunpack.c.l.b16 %v34
  %v89 = vunpack.c.l.b16 %v35
  %v90 = vpack.c.b16 %v86, %v85
  %v91 = vpack.c.b16 %v88, %v87
  %v92 = vpack.c.b16 %v89, %v89
  %vm95 = vcmask 293888
  %v97 = vsel %vm95, %v72, 0
  %v100 = vsel %vm95, %v73, 0
  %v103 = vsel %vm95, %v74, 0
  %v106 = vsel %vm95, %v75, 0
  %v109 = vsel %vm95, %v76, 0
  %v112 = vsel %vm95, %v77, 0
  %v115 = vsel %vm95, %v78, 0
  %v118 = vsel %vm95, %v79, 0
  %vm120 = vcmask 1041408
  %v122 = vsel %vm120, %v92, 0
  %124 = vmatpush.bf16.msra.mxu0 0
  %125 = vmatpush.bf16.msra.mxu0 0
  %126 = vmatpush.bf16.msra.mxu0 0
  %127 = vmatpush.bf16.msra.mxu0 0
  %128 = vmatpush.bf16.msra.mxu0 0
  %129 = vmatpush.bf16.msra.mxu0 %v122
  %130 = vmatpush.bf16.msra.mxu0 %v91
  %131 = vmatpush.bf16.msra.mxu0 %v90
  %132 = vmatmul.bf16.gmra.mxu0 %v97
  %v133 = vpop.f32.mrf.mxu0
  %v134 = vadd.f32 %v38, %v133
  %v135 = vpop.f32.mrf.mxu0
  %v136 = vadd.f32 %v38, %v135
  %137 = vmatmul.bf16.gmra.mxu0 %v100
  %v138 = vpop.f32.mrf.mxu0
  %v139 = vadd.f32 %v38, %v138
  %v140 = vpop.f32.mrf.mxu0
  %v141 = vadd.f32 %v38, %v140
  %142 = vmatmul.bf16.gmra.mxu0 %v103
  %v143 = vpop.f32.mrf.mxu0
  %v144 = vadd.f32 %v38, %v143
  %v145 = vpop.f32.mrf.mxu0
  %v146 = vadd.f32 %v38, %v145
  %147 = vmatmul.bf16.gmra.mxu0 %v106
  %v148 = vpop.f32.mrf.mxu0
  %v149 = vadd.f32 %v38, %v148
  %v150 = vpop.f32.mrf.mxu0
  %v151 = vadd.f32 %v38, %v150
  %152 = vmatmul.bf16.gmra.mxu0 %v109
  %v153 = vpop.f32.mrf.mxu0
  %v154 = vadd.f32 %v38, %v153
  %v155 = vpop.f32.mrf.mxu0
  %v156 = vadd.f32 %v38, %v155
  %157 = vmatmul.bf16.gmra.mxu0 %v112
  %v158 = vpop.f32.mrf.mxu0
  %v159 = vadd.f32 %v38, %v158
  %v160 = vpop.f32.mrf.mxu0
  %v161 = vadd.f32 %v38, %v160
  %162 = vmatmul.bf16.gmra.mxu0 %v115
  %v163 = vpop.f32.mrf.mxu0
  %v164 = vadd.f32 %v38, %v163
  %v165 = vpop.f32.mrf.mxu0
  %v166 = vadd.f32 %v38, %v165
  %167 = vmatmul.bf16.gmra.mxu0 %v118
  %v168 = vpop.f32.mrf.mxu0
  %v169 = vadd.f32 %v38, %v168
  %v170 = vpop.f32.mrf.mxu0
  %v171 = vadd.f32 %v38, %v170
  %172 = vdwg.mxu0
  %v173 = vmax.f32 %v134, 0.0
  %v174 = vmax.f32 %v136, 0.0
  %v175 = vmax.f32 %v139, 0.0
  %v176 = vmax.f32 %v141, 0.0
  %v177 = vmax.f32 %v144, 0.0
  %v178 = vmax.f32 %v146, 0.0
  %v179 = vmax.f32 %v149, 0.0
  %v180 = vmax.f32 %v151, 0.0
  %v181 = vmax.f32 %v154, 0.0
  %v182 = vmax.f32 %v156, 0.0
  %v183 = vmax.f32 %v159, 0.0
  %v184 = vmax.f32 %v161, 0.0
  %v185 = vmax.f32 %v164, 0.0
  %v186 = vmax.f32 %v166, 0.0
  %v187 = vmax.f32 %v169, 0.0
  %v188 = vmax.f32 %v171, 0.0
  %v189 = vpack.c.bf16 %v173, %v173
  %v190 = vpack.c.bf16 %v174, %v174
  %v191 = vpack.c.bf16 %v175, %v175
  %v192 = vpack.c.bf16 %v176, %v176
  %v193 = vpack.c.bf16 %v177, %v177
  %v194 = vpack.c.bf16 %v178, %v178
  %v195 = vpack.c.bf16 %v179, %v179
  %v196 = vpack.c.bf16 %v180, %v180
  %v197 = vpack.c.bf16 %v181, %v181
  %v198 = vpack.c.bf16 %v182, %v182
  %v199 = vpack.c.bf16 %v183, %v183
  %v200 = vpack.c.bf16 %v184, %v184
  %v201 = vpack.c.bf16 %v185, %v185
  %v202 = vpack.c.bf16 %v186, %v186
  %v203 = vpack.c.bf16 %v187, %v187
  %v204 = vpack.c.bf16 %v188, %v188
  %vm205 = vcmask 257024
  %206 = vst.msk [vmem:[%s3] sm:$0xf] %vm205, %v189
  %207 = vst.msk [vmem:[%s3 + $0x4] sm:$0xf] %vm205, %v190
  %208 = vst.msk [vmem:[%s3 + $0x8] sm:$0xf] %vm205, %v191
  %209 = vst.msk [vmem:[%s3 + $0xc] sm:$0xf] %vm205, %v192
  %210 = vst.msk [vmem:[%s3 + $0x10] sm:$0xf] %vm205, %v193
  %211 = vst.msk [vmem:[%s3 + $0x14] sm:$0xf] %vm205, %v194
  %212 = vst.msk [vmem:[%s3 + $0x18] sm:$0xf] %vm205, %v195
  %213 = vst.msk [vmem:[%s3 + $0x1c] sm:$0xf] %vm205, %v196
  %214 = vst.msk [vmem:[%s3 + $0x20] sm:$0xf] %vm205, %v197
  %215 = vst.msk [vmem:[%s3 + $0x24] sm:$0xf] %vm205, %v198
  %216 = vst.msk [vmem:[%s3 + $0x28] sm:$0xf] %vm205, %v199
  %217 = vst.msk [vmem:[%s3 + $0x2c] sm:$0xf] %vm205, %v200
  %218 = vst.msk [vmem:[%s3 + $0x30] sm:$0xf] %vm205, %v201
  %219 = vst.msk [vmem:[%s3 + $0x34] sm:$0xf] %vm205, %v202
  %220 = vst.msk [vmem:[%s3 + $0x38] sm:$0xf] %vm205, %v203
  %221 = vst.msk [vmem:[%s3 + $0x3c] sm:$0xf] %vm205, %v204
  // Predicated region
  $region14: #{ppo_atari_snd_forward.9} parent=0 // pred_check
    _
  $region15: #{ppo_atari_snd_forward.9} parent=0 // pred_check_branch
    %223 = sbr.rel (0) target = $region17
  $region16: #{ppo_atari_snd_forward.9} parent=0 // pred_region
    _
  $region17: #{ppo_atari_snd_forward.9} parent=0 // pred_fallthru
    _
  // Predicated region
  $region18: #{ppo_atari_snd_forward.9} parent=0 // pred_check
    _
  $region19: #{ppo_atari_snd_forward.9} parent=0 // pred_check_branch
    %225 = sbr.rel (0) target = $region21
  $region20: #{ppo_atari_snd_forward.9} parent=0 // pred_region
    _
  $region21: #{ppo_atari_snd_forward.9} parent=0 // pred_fallthru
    _

// kernel: ppo_atari_snd_forward.11
$region0: #{ppo_atari_snd_forward.11}
  #allocation0 [shape = 'u32[]', space=smem, size = 0x4, offset = 0x4, fixed_abs, tag = 'smem constant byte address 0x4 - core index']
  #allocation1 [shape = 'u32[72,128]{1,0:T(1,128)}', space=vmem, size = 0x9000, scoped, tag = 'internal scratch']
  %s0 = inlined_call_operand.vmem [shape: bf16[8,576], index: 0, kind: input, shape index: {}]
  %s1 = inlined_call_operand.vmem [shape: bf16[576,64], index: 1, kind: input, shape index: {}]
  %s2 = inlined_call_operand.vmem [shape: f32[1,64], index: 2, kind: input, shape index: {}]
  %s3 = inlined_call_operand.vmem [shape: bf16[8,64], index: 3, kind: output, shape index: {}]
  %s4 = sld [smem:[#allocation0]]
  $region22: #{ppo_atari_snd_forward.11} parent=0
    _
  %s6 = ssub.s32 1, %s4
  %s7 = scalar_select 0, %s6, %s4
  // Predicated region
  $region2: #{ppo_atari_snd_forward.11} parent=0 // pred_check
    _
  $region3: #{ppo_atari_snd_forward.11} parent=0 // pred_check_branch
    %9 = sbr.rel (0) target = $region5
  $region4: #{ppo_atari_snd_forward.11} parent=0 // pred_region
    _
  $region5: #{ppo_atari_snd_forward.11} parent=0 // pred_fallthru
    _
  // Predicated region
  $region6: #{ppo_atari_snd_forward.11} parent=0 // pred_check
    _
  $region7: #{ppo_atari_snd_forward.11} parent=0 // pred_check_branch
    %11 = sbr.rel (0) target = $region9
  $region8: #{ppo_atari_snd_forward.11} parent=0 // pred_region
    _
  $region9: #{ppo_atari_snd_forward.11} parent=0 // pred_fallthru
    _
  // Predicated region
  $region10: #{ppo_atari_snd_forward.11} parent=0 // pred_check
    _
  $region11: #{ppo_atari_snd_forward.11} parent=0 // pred_check_branch
    %13 = sbr.rel (0) target = $region13
  $region12: #{ppo_atari_snd_forward.11} parent=0 // pred_region
    _
  $region13: #{ppo_atari_snd_forward.11} parent=0 // pred_fallthru
    _
  %v15 = vld [vmem:[%s0] sm:$0xff]
  %v16 = vld [vmem:[%s0 + $0x8] sm:$0xff]
  %v17 = vld [vmem:[%s0 + $0x10] sm:$0xf]
  %v18 = vld [vmem:[%s1] sm:$0xf]
  %v19 = vld [vmem:[%s1 + $0x4] sm:$0xf]
  %v20 = vld [vmem:[%s1 + $0x8] sm:$0xf]
  %v21 = vld [vmem:[%s1 + $0xc] sm:$0xf]
  %v22 = vld [vmem:[%s1 + $0x10] sm:$0xf]
  %v23 = vld [vmem:[%s1 + $0x14] sm:$0xf]
  %v24 = vld [vmem:[%s1 + $0x18] sm:$0xf]
  %v25 = vld [vmem:[%s1 + $0x1c] sm:$0xf]
  %v26 = vld [vmem:[%s1 + $0x20] sm:$0xf]
  %v27 = vld [vmem:[%s1 + $0x24] sm:$0xf]
  %v28 = vld [vmem:[%s1 + $0x28] sm:$0xf]
  %v29 = vld [vmem:[%s1 + $0x2c] sm:$0xf]
  %v30 = vld [vmem:[%s1 + $0x30] sm:$0xf]
  %v31 = vld [vmem:[%s1 + $0x34] sm:$0xf]
  %v32 = vld [vmem:[%s1 + $0x38] sm:$0xf]
  %v33 = vld [vmem:[%s1 + $0x3c] sm:$0xf]
  %v34 = vld [vmem:[%s1 + $0x40] sm:$0xf]
  %v35 = vld [vmem:[%s1 + $0x44] sm:$0xf]
  %v36 = vld [vmem:[%s1 + $0x48] sm:$0xf]
  %v37 = vld [vmem:[%s1 + $0x4c] sm:$0xf]
  %v38 = vld [vmem:[%s1 + $0x50] sm:$0xf]
  %v39 = vld [vmem:[%s1 + $0x54] sm:$0xf]
  %v40 = vld [vmem:[%s1 + $0x58] sm:$0xf]
  %v41 = vld [vmem:[%s1 + $0x5c] sm:$0xf]
  %v42 = vld [vmem:[%s1 + $0x60] sm:$0xf]
  %v43 = vld [vmem:[%s1 + $0x64] sm:$0xf]
  %v44 = vld [vmem:[%s1 + $0x68] sm:$0xf]
  %v45 = vld [vmem:[%s1 + $0x6c] sm:$0xf]
  %v46 = vld [vmem:[%s1 + $0x70] sm:$0xf]
  %v47 = vld [vmem:[%s1 + $0x74] sm:$0xf]
  %v48 = vld [vmem:[%s1 + $0x78] sm:$0xf]
  %v49 = vld [vmem:[%s1 + $0x7c] sm:$0xf]
  %v50 = vld [vmem:[%s1 + $0x80] sm:$0xf]
  %v51 = vld [vmem:[%s1 + $0x84] sm:$0xf]
  %v52 = vld [vmem:[%s1 + $0x88] sm:$0xf]
  %v53 = vld [vmem:[%s1 + $0x8c] sm:$0xf]
  %v54 = vld [vmem:[%s1 + $0x90] sm:$0xf]
  %v55 = vld [vmem:[%s1 + $0x94] sm:$0xf]
  %v56 = vld [vmem:[%s1 + $0x98] sm:$0xf]
  %v57 = vld [vmem:[%s1 + $0x9c] sm:$0xf]
  %v58 = vld [vmem:[%s1 + $0xa0] sm:$0xf]
  %v59 = vld [vmem:[%s1 + $0xa4] sm:$0xf]
  %v60 = vld [vmem:[%s1 + $0xa8] sm:$0xf]
  %v61 = vld [vmem:[%s1 + $0xac] sm:$0xf]
  %v62 = vld [vmem:[%s1 + $0xb0] sm:$0xf]
  %v63 = vld [vmem:[%s1 + $0xb4] sm:$0xf]
  %v64 = vld [vmem:[%s1 + $0xb8] sm:$0xf]
  %v65 = vld [vmem:[%s1 + $0xbc] sm:$0xf]
  %v66 = vld [vmem:[%s1 + $0xc0] sm:$0xf]
  %v67 = vld [vmem:[%s1 + $0xc4] sm:$0xf]
  %v68 = vld [vmem:[%s1 + $0xc8] sm:$0xf]
  %v69 = vld [vmem:[%s1 + $0xcc] sm:$0xf]
  %v70 = vld [vmem:[%s1 + $0xd0] sm:$0xf]
  %v71 = vld [vmem:[%s1 + $0xd4] sm:$0xf]
  %v72 = vld [vmem:[%s1 + $0xd8] sm:$0xf]
  %v73 = vld [vmem:[%s1 + $0xdc] sm:$0xf]
  %v74 = vld [vmem:[%s1 + $0xe0] sm:$0xf]
  %v75 = vld [vmem:[%s1 + $0xe4] sm:$0xf]
  %v76 = vld [vmem:[%s1 + $0xe8] sm:$0xf]
  %v77 = vld [vmem:[%s1 + $0xec] sm:$0xf]
  %v78 = vld [vmem:[%s1 + $0xf0] sm:$0xf]
  %v79 = vld [vmem:[%s1 + $0xf4] sm:$0xf]
  %v80 = vld [vmem:[%s1 + $0xf8] sm:$0xf]
  %v81 = vld [vmem:[%s1 + $0xfc] sm:$0xf]
  %v82 = vld [vmem:[%s1 + $0x100] sm:$0xf]
  %v83 = vld [vmem:[%s1 + $0x104] sm:$0xf]
  %v84 = vld [vmem:[%s1 + $0x108] sm:$0xf]
  %v85 = vld [vmem:[%s1 + $0x10c] sm:$0xf]
  %v86 = vld [vmem:[%s1 + $0x110] sm:$0xf]
  %v87 = vld [vmem:[%s1 + $0x114] sm:$0xf]
  %v88 = vld [vmem:[%s1 + $0x118] sm:$0xf]
  %v89 = vld [vmem:[%s1 + $0x11c] sm:$0xf]
  %v90 = vld [vmem:[%s2] sm:$0x1]
  %v92 = vperm.slane %v90, 0
  %v97 = vunpack.c.l.b16 %v15
  %v98 = vunpack.c.h.b16 %v15
  %v99 = vunpack.c.l.b16 %v16
  %v100 = vunpack.c.h.b16 %v16
  %v101 = vunpack.c.l.b16 %v17
  %v102 = vpack.c.b16 %v97, %v97
  %v103 = vpack.c.b16 %v98, %v98
  %v104 = vpack.c.b16 %v99, %v99
  %v105 = vpack.c.b16 %v100, %v100
  %v106 = vpack.c.b16 %v101, %v101
  %v183 = vunpack.c.l.b16 %v18
  %v184 = vunpack.c.l.b16 %v19
  %v185 = vunpack.c.l.b16 %v20
  %v186 = vunpack.c.l.b16 %v21
  %v187 = vunpack.c.l.b16 %v22
  %v188 = vunpack.c.l.b16 %v23
  %v189 = vunpack.c.l.b16 %v24
  %v190 = vunpack.c.l.b16 %v25
  %v191 = vunpack.c.l.b16 %v26
  %v192 = vunpack.c.l.b16 %v27
  %v193 = vunpack.c.l.b16 %v28
  %v194 = vunpack.c.l.b16 %v29
  %v195 = vunpack.c.l.b16 %v30
  %v196 = vunpack.c.l.b16 %v31
  %v197 = vunpack.c.l.b16 %v32
  %v198 = vunpack.c.l.b16 %v33
  %v199 = vunpack.c.l.b16 %v34
  %v200 = vunpack.c.l.b16 %v35
  %v201 = vunpack.c.l.b16 %v36
  %v202 = vunpack.c.l.b16 %v37
  %v203 = vunpack.c.l.b16 %v38
  %v204 = vunpack.c.l.b16 %v39
  %v205 = vunpack.c.l.b16 %v40
  %v206 = vunpack.c.l.b16 %v41
  %v207 = vunpack.c.l.b16 %v42
  %v208 = vunpack.c.l.b16 %v43
  %v209 = vunpack.c.l.b16 %v44
  %v210 = vunpack.c.l.b16 %v45
  %v211 = vunpack.c.l.b16 %v46
  %v212 = vunpack.c.l.b16 %v47
  %v213 = vunpack.c.l.b16 %v48
  %v214 = vunpack.c.l.b16 %v49
  %v215 = vunpack.c.l.b16 %v50
  %v216 = vunpack.c.l.b16 %v51
  %v217 = vunpack.c.l.b16 %v52
  %v218 = vunpack.c.l.b16 %v53
  %v219 = vunpack.c.l.b16 %v54
  %v220 = vunpack.c.l.b16 %v55
  %v221 = vunpack.c.l.b16 %v56
  %v222 = vunpack.c.l.b16 %v57
  %v223 = vunpack.c.l.b16 %v58
  %v224 = vunpack.c.l.b16 %v59
  %v225 = vunpack.c.l.b16 %v60
  %v226 = vunpack.c.l.b16 %v61
  %v227 = vunpack.c.l.b16 %v62
  %v228 = vunpack.c.l.b16 %v63
  %v229 = vunpack.c.l.b16 %v64
  %v230 = vunpack.c.l.b16 %v65
  %v231 = vunpack.c.l.b16 %v66
  %v232 = vunpack.c.l.b16 %v67
  %v233 = vunpack.c.l.b16 %v68
  %v234 = vunpack.c.l.b16 %v69
  %v235 = vunpack.c.l.b16 %v70
  %v236 = vunpack.c.l.b16 %v71
  %v237 = vunpack.c.l.b16 %v72
  %v238 = vunpack.c.l.b16 %v73
  %v239 = vunpack.c.l.b16 %v74
  %v240 = vunpack.c.l.b16 %v75
  %v241 = vunpack.c.l.b16 %v76
  %v242 = vunpack.c.l.b16 %v77
  %v243 = vunpack.c.l.b16 %v78
  %v244 = vunpack.c.l.b16 %v79
  %v245 = vunpack.c.l.b16 %v80
  %v246 = vunpack.c.l.b16 %v81
  %v247 = vunpack.c.l.b16 %v82
  %v248 = vunpack.c.l.b16 %v83
  %v249 = vunpack.c.l.b16 %v84
  %v250 = vunpack.c.l.b16 %v85
  %v251 = vunpack.c.l.b16 %v86
  %v252 = vunpack.c.l.b16 %v87
  %v253 = vunpack.c.l.b16 %v88
  %v254 = vunpack.c.l.b16 %v89
  %v255 = vpack.c.b16 %v184, %v183
  %v256 = vpack.c.b16 %v186, %v185
  %v257 = vpack.c.b16 %v188, %v187
  %v258 = vpack.c.b16 %v190, %v189
  %v259 = vpack.c.b16 %v192, %v191
  %v260 = vpack.c.b16 %v194, %v193
  %v261 = vpack.c.b16 %v196, %v195
  %v262 = vpack.c.b16 %v198, %v197
  %v263 = vpack.c.b16 %v200, %v199
  %v264 = vpack.c.b16 %v202, %v201
  %v265 = vpack.c.b16 %v204, %v203
  %v266 = vpack.c.b16 %v206, %v205
  %v267 = vpack.c.b16 %v208, %v207
  %v268 = vpack.c.b16 %v210, %v209
  %v269 = vpack.c.b16 %v212, %v211
  %v270 = vpack.c.b16 %v214, %v213
  %v271 = vpack.c.b16 %v216, %v215
  %v272 = vpack.c.b16 %v218, %v217
  %v273 = vpack.c.b16 %v220, %v219
  %v274 = vpack.c.b16 %v222, %v221
  %v275 = vpack.c.b16 %v224, %v223
  %v276 = vpack.c.b16 %v226, %v225
  %v277 = vpack.c.b16 %v228, %v227
  %v278 = vpack.c.b16 %v230, %v229
  %v279 = vpack.c.b16 %v232, %v231
  %v280 = vpack.c.b16 %v234, %v233
  %v281 = vpack.c.b16 %v236, %v235
  %v282 = vpack.c.b16 %v238, %v237
  %v283 = vpack.c.b16 %v240, %v239
  %v284 = vpack.c.b16 %v242, %v241
  %v285 = vpack.c.b16 %v244, %v243
  %v286 = vpack.c.b16 %v246, %v245
  %v287 = vpack.c.b16 %v248, %v247
  %v288 = vpack.c.b16 %v250, %v249
  %v289 = vpack.c.b16 %v252, %v251
  %v290 = vpack.c.b16 %v254, %v253
  %vm327 = vcmask 523264
  %v329 = vsel %vm327, %v106, 0
  %331 = vmatpush.bf16.msra.mxu0 %v262
  %332 = vmatpush.bf16.msra.mxu0 %v261
  %333 = vmatpush.bf16.msra.mxu0 %v260
  %334 = vmatpush.bf16.msra.mxu0 %v259
  %335 = vmatpush.bf16.msra.mxu0 %v258
  %336 = vmatpush.bf16.msra.mxu0 %v257
  %337 = vmatpush.bf16.msra.mxu0 %v256
  %338 = vmatpush.bf16.msra.mxu0 %v255
  %339 = vmatmul.bf16.gmra.mxu0 %v102
  %v340 = vpop.f32.mrf.mxu0
  %v341 = vadd.f32 %v92, %v340
  %v342 = vpop.f32.mrf.mxu0
  %343 = vdwg.mxu0
  %344 = vmatpush.bf16.msra.mxu0 %v270
  %345 = vmatpush.bf16.msra.mxu0 %v269
  %346 = vmatpush.bf16.msra.mxu0 %v268
  %347 = vmatpush.bf16.msra.mxu0 %v267
  %348 = vmatpush.bf16.msra.mxu0 %v266
  %349 = vmatpush.bf16.msra.mxu0 %v265
  %350 = vmatpush.bf16.msra.mxu0 %v264
  %351 = vmatpush.bf16.msra.mxu0 %v263
  %352 = vmatmul.bf16.gmra.mxu0 %v103
  %v353 = vpop.f32.mrf.mxu0
  %v354 = vadd.f32 %v341, %v353
  %v355 = vpop.f32.mrf.mxu0
  %356 = vdwg.mxu0
  %357 = vmatpush.bf16.msra.mxu0 %v278
  %358 = vmatpush.bf16.msra.mxu0 %v277
  %359 = vmatpush.bf16.msra.mxu0 %v276
  %360 = vmatpush.bf16.msra.mxu0 %v275
  %361 = vmatpush.bf16.msra.mxu0 %v274
  %362 = vmatpush.bf16.msra.mxu0 %v273
  %363 = vmatpush.bf16.msra.mxu0 %v272
  %364 = vmatpush.bf16.msra.mxu0 %v271
  %365 = vmatmul.bf16.gmra.mxu0 %v104
  %v366 = vpop.f32.mrf.mxu0
  %v367 = vadd.f32 %v354, %v366
  %v368 = vpop.f32.mrf.mxu0
  %369 = vdwg.mxu0
  %370 = vmatpush.bf16.msra.mxu0 %v286
  %371 = vmatpush.bf16.msra.mxu0 %v285
  %372 = vmatpush.bf16.msra.mxu0 %v284
  %373 = vmatpush.bf16.msra.mxu0 %v283
  %374 = vmatpush.bf16.msra.mxu0 %v282
  %375 = vmatpush.bf16.msra.mxu0 %v281
  %376 = vmatpush.bf16.msra.mxu0 %v280
  %377 = vmatpush.bf16.msra.mxu0 %v279
  %378 = vmatmul.bf16.gmra.mxu0 %v105
  %v379 = vpop.f32.mrf.mxu0
  %v380 = vadd.f32 %v367, %v379
  %v381 = vpop.f32.mrf.mxu0
  %382 = vdwg.mxu0
  %383 = vmatpush.bf16.msra.mxu0 0
  %384 = vmatpush.bf16.msra.mxu0 0
  %385 = vmatpush.bf16.msra.mxu0 0
  %386 = vmatpush.bf16.msra.mxu0 0
  %387 = vmatpush.bf16.msra.mxu0 %v290
  %388 = vmatpush.bf16.msra.mxu0 %v289
  %389 = vmatpush.bf16.msra.mxu0 %v288
  %390 = vmatpush.bf16.msra.mxu0 %v287
  %391 = vmatmul.bf16.gmra.mxu0 %v329
  %v392 = vpop.f32.mrf.mxu0
  %v393 = vadd.f32 %v380, %v392
  %v394 = vpop.f32.mrf.mxu0
  %395 = vdwg.mxu0
  %v396 = vmax.f32 %v393, 0.0
  %v397 = vpack.c.bf16 %v396, %v396
  %vm398 = vcmask 519168
  %399 = vst.msk [vmem:[%s3] sm:$0xf] %vm398, %v397
  // Predicated region
  $region14: #{ppo_atari_snd_forward.11} parent=0 // pred_check
    _
  $region15: #{ppo_atari_snd_forward.11} parent=0 // pred_check_branch
    %401 = sbr.rel (0) target = $region17
  $region16: #{ppo_atari_snd_forward.11} parent=0 // pred_region
    _
  $region17: #{ppo_atari_snd_forward.11} parent=0 // pred_fallthru
    _
  // Predicated region
  $region18: #{ppo_atari_snd_forward.11} parent=0 // pred_check
    _
  $region19: #{ppo_atari_snd_forward.11} parent=0 // pred_check_branch
    %403 = sbr.rel (0) target = $region21
  $region20: #{ppo_atari_snd_forward.11} parent=0 // pred_region
    _
  $region21: #{ppo_atari_snd_forward.11} parent=0 // pred_fallthru
    _

// kernel: ppo_atari_snd_forward.10
$region0: #{ppo_atari_snd_forward.10}
  #allocation0 [shape = 'u32[]', space=smem, size = 0x4, offset = 0x4, fixed_abs, tag = 'smem constant byte address 0x4 - core index']
  #allocation1 [shape = 'u32[72,128]{1,0:T(1,128)}', space=vmem, size = 0x9000, scoped, tag = 'internal scratch']
  %s0 = inlined_call_operand.vmem [shape: bf16[32,288], index: 0, kind: input, shape index: {}]
  %s1 = inlined_call_operand.vmem [shape: bf16[288,64], index: 1, kind: input, shape index: {}]
  %s2 = inlined_call_operand.vmem [shape: f32[1,64], index: 2, kind: input, shape index: {}]
  %s3 = inlined_call_operand.vmem [shape: bf16[32,64], index: 3, kind: output, shape index: {}]
  %s4 = sld [smem:[#allocation0]]
  $region22: #{ppo_atari_snd_forward.10} parent=0
    _
  %s6 = ssub.s32 1, %s4
  %s7 = scalar_select 0, %s6, %s4
  // Predicated region
  $region2: #{ppo_atari_snd_forward.10} parent=0 // pred_check
    _
  $region3: #{ppo_atari_snd_forward.10} parent=0 // pred_check_branch
    %9 = sbr.rel (0) target = $region5
  $region4: #{ppo_atari_snd_forward.10} parent=0 // pred_region
    _
  $region5: #{ppo_atari_snd_forward.10} parent=0 // pred_fallthru
    _
  // Predicated region
  $region6: #{ppo_atari_snd_forward.10} parent=0 // pred_check
    _
  $region7: #{ppo_atari_snd_forward.10} parent=0 // pred_check_branch
    %11 = sbr.rel (0) target = $region9
  $region8: #{ppo_atari_snd_forward.10} parent=0 // pred_region
    _
  $region9: #{ppo_atari_snd_forward.10} parent=0 // pred_fallthru
    _
  // Predicated region
  $region10: #{ppo_atari_snd_forward.10} parent=0 // pred_check
    _
  $region11: #{ppo_atari_snd_forward.10} parent=0 // pred_check_branch
    %13 = sbr.rel (0) target = $region13
  $region12: #{ppo_atari_snd_forward.10} parent=0 // pred_region
    _
  $region13: #{ppo_atari_snd_forward.10} parent=0 // pred_fallthru
    _
  %v15 = vld [vmem:[%s0] sm:$0xff]
  %v16 = vld [vmem:[%s0 + $0x8] sm:$0xf]
  %v17 = vld [vmem:[%s0 + $0xc] sm:$0xff]
  %v18 = vld [vmem:[%s0 + $0x14] sm:$0xf]
  %v19 = vld [vmem:[%s0 + $0x18] sm:$0xff]
  %v20 = vld [vmem:[%s0 + $0x20] sm:$0xf]
  %v21 = vld [vmem:[%s0 + $0x24] sm:$0xff]
  %v22 = vld [vmem:[%s0 + $0x2c] sm:$0xf]
  %v23 = vld [vmem:[%s1] sm:$0xf]
  %v24 = vld [vmem:[%s1 + $0x4] sm:$0xf]
  %v25 = vld [vmem:[%s1 + $0x8] sm:$0xf]
  %v26 = vld [vmem:[%s1 + $0xc] sm:$0xf]
  %v27 = vld [vmem:[%s1 + $0x10] sm:$0xf]
  %v28 = vld [vmem:[%s1 + $0x14] sm:$0xf]
  %v29 = vld [vmem:[%s1 + $0x18] sm:$0xf]
  %v30 = vld [vmem:[%s1 + $0x1c] sm:$0xf]
  %v31 = vld [vmem:[%s1 + $0x20] sm:$0xf]
  %v32 = vld [vmem:[%s1 + $0x24] sm:$0xf]
  %v33 = vld [vmem:[%s1 + $0x28] sm:$0xf]
  %v34 = vld [vmem:[%s1 + $0x2c] sm:$0xf]
  %v35 = vld [vmem:[%s1 + $0x30] sm:$0xf]
  %v36 = vld [vmem:[%s1 + $0x34] sm:$0xf]
  %v37 = vld [vmem:[%s1 + $0x38] sm:$0xf]
  %v38 = vld [vmem:[%s1 + $0x3c] sm:$0xf]
  %v39 = vld [vmem:[%s1 + $0x40] sm:$0xf]
  %v40 = vld [vmem:[%s1 + $0x44] sm:$0xf]
  %v41 = vld [vmem:[%s1 + $0x48] sm:$0xf]
  %v42 = vld [vmem:[%s1 + $0x4c] sm:$0xf]
  %v43 = vld [vmem:[%s1 + $0x50] sm:$0xf]
  %v44 = vld [vmem:[%s1 + $0x54] sm:$0xf]
  %v45 = vld [vmem:[%s1 + $0x58] sm:$0xf]
  %v46 = vld [vmem:[%s1 + $0x5c] sm:$0xf]
  %v47 = vld [vmem:[%s1 + $0x60] sm:$0xf]
  %v48 = vld [vmem:[%s1 + $0x64] sm:$0xf]
  %v49 = vld [vmem:[%s1 + $0x68] sm:$0xf]
  %v50 = vld [vmem:[%s1 + $0x6c] sm:$0xf]
  %v51 = vld [vmem:[%s1 + $0x70] sm:$0xf]
  %v52 = vld [vmem:[%s1 + $0x74] sm:$0xf]
  %v53 = vld [vmem:[%s1 + $0x78] sm:$0xf]
  %v54 = vld [vmem:[%s1 + $0x7c] sm:$0xf]
  %v55 = vld [vmem:[%s1 + $0x80] sm:$0xf]
  %v56 = vld [vmem:[%s1 + $0x84] sm:$0xf]
  %v57 = vld [vmem:[%s1 + $0x88] sm:$0xf]
  %v58 = vld [vmem:[%s1 + $0x8c] sm:$0xf]
  %v59 = vld [vmem:[%s2] sm:$0x1]
  %v61 = vperm.slane %v59, 0
  %v71 = vunpack.c.l.b16 %v15
  %v72 = vunpack.c.h.b16 %v15
  %v73 = vunpack.c.l.b16 %v16
  %v74 = vunpack.c.l.b16 %v17
  %v75 = vunpack.c.h.b16 %v17
  %v76 = vunpack.c.l.b16 %v18
  %v77 = vunpack.c.l.b16 %v19
  %v78 = vunpack.c.h.b16 %v19
  %v79 = vunpack.c.l.b16 %v20
  %v80 = vunpack.c.l.b16 %v21
  %v81 = vunpack.c.h.b16 %v21
  %v82 = vunpack.c.l.b16 %v22
  %v83 = vpack.c.b16 %v74, %v71
  %v84 = vpack.c.b16 %v75, %v72
  %v85 = vpack.c.b16 %v76, %v73
  %v86 = vpack.c.b16 %v80, %v77
  %v87 = vpack.c.b16 %v81, %v78
  %v88 = vpack.c.b16 %v82, %v79
  %v129 = vunpack.c.l.b16 %v23
  %v130 = vunpack.c.l.b16 %v24
  %v131 = vunpack.c.l.b16 %v25
  %v132 = vunpack.c.l.b16 %v26
  %v133 = vunpack.c.l.b16 %v27
  %v134 = vunpack.c.l.b16 %v28
  %v135 = vunpack.c.l.b16 %v29
  %v136 = vunpack.c.l.b16 %v30
  %v137 = vunpack.c.l.b16 %v31
  %v138 = vunpack.c.l.b16 %v32
  %v139 = vunpack.c.l.b16 %v33
  %v140 = vunpack.c.l.b16 %v34
  %v141 = vunpack.c.l.b16 %v35
  %v142 = vunpack.c.l.b16 %v36
  %v143 = vunpack.c.l.b16 %v37
  %v144 = vunpack.c.l.b16 %v38
  %v145 = vunpack.c.l.b16 %v39
  %v146 = vunpack.c.l.b16 %v40
  %v147 = vunpack.c.l.b16 %v41
  %v148 = vunpack.c.l.b16 %v42
  %v149 = vunpack.c.l.b16 %v43
  %v150 = vunpack.c.l.b16 %v44
  %v151 = vunpack.c.l.b16 %v45
  %v152 = vunpack.c.l.b16 %v46
  %v153 = vunpack.c.l.b16 %v47
  %v154 = vunpack.c.l.b16 %v48
  %v155 = vunpack.c.l.b16 %v49
  %v156 = vunpack.c.l.b16 %v50
  %v157 = vunpack.c.l.b16 %v51
  %v158 = vunpack.c.l.b16 %v52
  %v159 = vunpack.c.l.b16 %v53
  %v160 = vunpack.c.l.b16 %v54
  %v161 = vunpack.c.l.b16 %v55
  %v162 = vunpack.c.l.b16 %v56
  %v163 = vunpack.c.l.b16 %v57
  %v164 = vunpack.c.l.b16 %v58
  %v165 = vpack.c.b16 %v130, %v129
  %v166 = vpack.c.b16 %v132, %v131
  %v167 = vpack.c.b16 %v134, %v133
  %v168 = vpack.c.b16 %v136, %v135
  %v169 = vpack.c.b16 %v138, %v137
  %v170 = vpack.c.b16 %v140, %v139
  %v171 = vpack.c.b16 %v142, %v141
  %v172 = vpack.c.b16 %v144, %v143
  %v173 = vpack.c.b16 %v146, %v145
  %v174 = vpack.c.b16 %v148, %v147
  %v175 = vpack.c.b16 %v150, %v149
  %v176 = vpack.c.b16 %v152, %v151
  %v177 = vpack.c.b16 %v154, %v153
  %v178 = vpack.c.b16 %v156, %v155
  %v179 = vpack.c.b16 %v158, %v157
  %v180 = vpack.c.b16 %v160, %v159
  %v181 = vpack.c.b16 %v162, %v161
  %v182 = vpack.c.b16 %v164, %v163
  %vm201 = vcmask 261120
  %v203 = vsel %vm201, %v85, 0
  %v206 = vsel %vm201, %v88, 0
  %208 = vmatpush.bf16.msra.mxu0 %v172
  %209 = vmatpush.bf16.msra.mxu0 %v171
  %210 = vmatpush.bf16.msra.mxu0 %v170
  %211 = vmatpush.bf16.msra.mxu0 %v169
  %212 = vmatpush.bf16.msra.mxu0 %v168
  %213 = vmatpush.bf16.msra.mxu0 %v167
  %214 = vmatpush.bf16.msra.mxu0 %v166
  %215 = vmatpush.bf16.msra.mxu0 %v165
  %216 = vmatmul.bf16.gmra.mxu0 %v83
  %v217 = vpop.f32.mrf.mxu0
  %v218 = vadd.f32 %v61, %v217
  %v219 = vpop.f32.mrf.mxu0
  %v220 = vadd.f32 %v61, %v219
  %221 = vmatmul.bf16.gmra.mxu0 %v86
  %v222 = vpop.f32.mrf.mxu0
  %v223 = vadd.f32 %v61, %v222
  %v224 = vpop.f32.mrf.mxu0
  %v225 = vadd.f32 %v61, %v224
  %226 = vdwg.mxu0
  %227 = vmatpush.bf16.msra.mxu0 %v180
  %228 = vmatpush.bf16.msra.mxu0 %v179
  %229 = vmatpush.bf16.msra.mxu0 %v178
  %230 = vmatpush.bf16.msra.mxu0 %v177
  %231 = vmatpush.bf16.msra.mxu0 %v176
  %232 = vmatpush.bf16.msra.mxu0 %v175
  %233 = vmatpush.bf16.msra.mxu0 %v174
  %234 = vmatpush.bf16.msra.mxu0 %v173
  %235 = vmatmul.bf16.gmra.mxu0 %v84
  %v236 = vpop.f32.mrf.mxu0
  %v237 = vadd.f32 %v218, %v236
  %v238 = vpop.f32.mrf.mxu0
  %v239 = vadd.f32 %v220, %v238
  %240 = vmatmul.bf16.gmra.mxu0 %v87
  %v241 = vpop.f32.mrf.mxu0
  %v242 = vadd.f32 %v223, %v241
  %v243 = vpop.f32.mrf.mxu0
  %v244 = vadd.f32 %v225, %v243
  %245 = vdwg.mxu0
  %246 = vmatpush.bf16.msra.mxu0 0
  %247 = vmatpush.bf16.msra.mxu0 0
  %248 = vmatpush.bf16.msra.mxu0 0
  %249 = vmatpush.bf16.msra.mxu0 0
  %250 = vmatpush.bf16.msra.mxu0 0
  %251 = vmatpush.bf16.msra.mxu0 0
  %252 = vmatpush.bf16.msra.mxu0 %v182
  %253 = vmatpush.bf16.msra.mxu0 %v181
  %254 = vmatmul.bf16.gmra.mxu0 %v203
  %v255 = vpop.f32.mrf.mxu0
  %v256 = vadd.f32 %v237, %v255
  %v257 = vpop.f32.mrf.mxu0
  %v258 = vadd.f32 %v239, %v257
  %259 = vmatmul.bf16.gmra.mxu0 %v206
  %v260 = vpop.f32.mrf.mxu0
  %v261 = vadd.f32 %v242, %v260
  %v262 = vpop.f32.mrf.mxu0
  %v263 = vadd.f32 %v244, %v262
  %264 = vdwg.mxu0
  %v265 = vmax.f32 %v256, 0.0
  %v266 = vmax.f32 %v258, 0.0
  %v267 = vmax.f32 %v261, 0.0
  %v268 = vmax.f32 %v263, 0.0
  %v269 = vpack.c.bf16 %v265, %v265
  %v270 = vpack.c.bf16 %v266, %v266
  %v271 = vpack.c.bf16 %v267, %v267
  %v272 = vpack.c.bf16 %v268, %v268
  %vm273 = vcmask 519168
  %274 = vst.msk [vmem:[%s3] sm:$0xf] %vm273, %v269
  %275 = vst.msk [vmem:[%s3 + $0x4] sm:$0xf] %vm273, %v270
  %276 = vst.msk [vmem:[%s3 + $0x8] sm:$0xf] %vm273, %v271
  %277 = vst.msk [vmem:[%s3 + $0xc] sm:$0xf] %vm273, %v272
  // Predicated region
  $region14: #{ppo_atari_snd_forward.10} parent=0 // pred_check
    _
  $region15: #{ppo_atari_snd_forward.10} parent=0 // pred_check_branch
    %279 = sbr.rel (0) target = $region17
  $region16: #{ppo_atari_snd_forward.10} parent=0 // pred_region
    _
  $region17: #{ppo_atari_snd_forward.10} parent=0 // pred_fallthru
    _
  // Predicated region
  $region18: #{ppo_atari_snd_forward.10} parent=0 // pred_check
    _
  $region19: #{ppo_atari_snd_forward.10} parent=0 // pred_check_branch
    %281 = sbr.rel (0) target = $region21
  $region20: #{ppo_atari_snd_forward.10} parent=0 // pred_region
    _
  $region21: #{ppo_atari_snd_forward.10} parent=0 // pred_fallthru
    _

// kernel: ppo_atari_snd_forward.12
$region0: #{ppo_atari_snd_forward.12}
  #allocation0 [shape = 'u32[]', space=smem, size = 0x4, offset = 0x4, fixed_abs, tag = 'smem constant byte address 0x4 - core index']
  #allocation1 [shape = 'u32[72,128]{1,0:T(1,128)}', space=vmem, size = 0x9000, scoped, tag = 'internal scratch']
  %s0 = inlined_call_operand.vmem [shape: bf16[8,576], index: 0, kind: input, shape index: {}]
  %s1 = inlined_call_operand.vmem [shape: bf16[576,128], index: 1, kind: input, shape index: {}]
  %s2 = inlined_call_operand.vmem [shape: f32[1,128], index: 2, kind: input, shape index: {}]
  %s3 = inlined_call_operand.vmem [shape: bf16[8,128], index: 3, kind: output, shape index: {}]
  %s4 = sld [smem:[#allocation0]]
  $region22: #{ppo_atari_snd_forward.12} parent=0
    _
  %s6 = ssub.s32 1, %s4
  %s7 = scalar_select 0, %s6, %s4
  // Predicated region
  $region2: #{ppo_atari_snd_forward.12} parent=0 // pred_check
    _
  $region3: #{ppo_atari_snd_forward.12} parent=0 // pred_check_branch
    %9 = sbr.rel (0) target = $region5
  $region4: #{ppo_atari_snd_forward.12} parent=0 // pred_region
    _
  $region5: #{ppo_atari_snd_forward.12} parent=0 // pred_fallthru
    _
  // Predicated region
  $region6: #{ppo_atari_snd_forward.12} parent=0 // pred_check
    _
  $region7: #{ppo_atari_snd_forward.12} parent=0 // pred_check_branch
    %11 = sbr.rel (0) target = $region9
  $region8: #{ppo_atari_snd_forward.12} parent=0 // pred_region
    _
  $region9: #{ppo_atari_snd_forward.12} parent=0 // pred_fallthru
    _
  // Predicated region
  $region10: #{ppo_atari_snd_forward.12} parent=0 // pred_check
    _
  $region11: #{ppo_atari_snd_forward.12} parent=0 // pred_check_branch
    %13 = sbr.rel (0) target = $region13
  $region12: #{ppo_atari_snd_forward.12} parent=0 // pred_region
    _
  $region13: #{ppo_atari_snd_forward.12} parent=0 // pred_fallthru
    _
  %v15 = vld [vmem:[%s0] sm:$0xff]
  %v16 = vld [vmem:[%s0 + $0x8] sm:$0xff]
  %v17 = vld [vmem:[%s0 + $0x10] sm:$0xf]
  %v18 = vld [vmem:[%s1] sm:$0xf]
  %v19 = vld [vmem:[%s1 + $0x4] sm:$0xf]
  %v20 = vld [vmem:[%s1 + $0x8] sm:$0xf]
  %v21 = vld [vmem:[%s1 + $0xc] sm:$0xf]
  %v22 = vld [vmem:[%s1 + $0x10] sm:$0xf]
  %v23 = vld [vmem:[%s1 + $0x14] sm:$0xf]
  %v24 = vld [vmem:[%s1 + $0x18] sm:$0xf]
  %v25 = vld [vmem:[%s1 + $0x1c] sm:$0xf]
  %v26 = vld [vmem:[%s1 + $0x20] sm:$0xf]
  %v27 = vld [vmem:[%s1 + $0x24] sm:$0xf]
  %v28 = vld [vmem:[%s1 + $0x28] sm:$0xf]
  %v29 = vld [vmem:[%s1 + $0x2c] sm:$0xf]
  %v30 = vld [vmem:[%s1 + $0x30] sm:$0xf]
  %v31 = vld [vmem:[%s1 + $0x34] sm:$0xf]
  %v32 = vld [vmem:[%s1 + $0x38] sm:$0xf]
  %v33 = vld [vmem:[%s1 + $0x3c] sm:$0xf]
  %v34 = vld [vmem:[%s1 + $0x40] sm:$0xf]
  %v35 = vld [vmem:[%s1 + $0x44] sm:$0xf]
  %v36 = vld [vmem:[%s1 + $0x48] sm:$0xf]
  %v37 = vld [vmem:[%s1 + $0x4c] sm:$0xf]
  %v38 = vld [vmem:[%s1 + $0x50] sm:$0xf]
  %v39 = vld [vmem:[%s1 + $0x54] sm:$0xf]
  %v40 = vld [vmem:[%s1 + $0x58] sm:$0xf]
  %v41 = vld [vmem:[%s1 + $0x5c] sm:$0xf]
  %v42 = vld [vmem:[%s1 + $0x60] sm:$0xf]
  %v43 = vld [vmem:[%s1 + $0x64] sm:$0xf]
  %v44 = vld [vmem:[%s1 + $0x68] sm:$0xf]
  %v45 = vld [vmem:[%s1 + $0x6c] sm:$0xf]
  %v46 = vld [vmem:[%s1 + $0x70] sm:$0xf]
  %v47 = vld [vmem:[%s1 + $0x74] sm:$0xf]
  %v48 = vld [vmem:[%s1 + $0x78] sm:$0xf]
  %v49 = vld [vmem:[%s1 + $0x7c] sm:$0xf]
  %v50 = vld [vmem:[%s1 + $0x80] sm:$0xf]
  %v51 = vld [vmem:[%s1 + $0x84] sm:$0xf]
  %v52 = vld [vmem:[%s1 + $0x88] sm:$0xf]
  %v53 = vld [vmem:[%s1 + $0x8c] sm:$0xf]
  %v54 = vld [vmem:[%s1 + $0x90] sm:$0xf]
  %v55 = vld [vmem:[%s1 + $0x94] sm:$0xf]
  %v56 = vld [vmem:[%s1 + $0x98] sm:$0xf]
  %v57 = vld [vmem:[%s1 + $0x9c] sm:$0xf]
  %v58 = vld [vmem:[%s1 + $0xa0] sm:$0xf]
  %v59 = vld [vmem:[%s1 + $0xa4] sm:$0xf]
  %v60 = vld [vmem:[%s1 + $0xa8] sm:$0xf]
  %v61 = vld [vmem:[%s1 + $0xac] sm:$0xf]
  %v62 = vld [vmem:[%s1 + $0xb0] sm:$0xf]
  %v63 = vld [vmem:[%s1 + $0xb4] sm:$0xf]
  %v64 = vld [vmem:[%s1 + $0xb8] sm:$0xf]
  %v65 = vld [vmem:[%s1 + $0xbc] sm:$0xf]
  %v66 = vld [vmem:[%s1 + $0xc0] sm:$0xf]
  %v67 = vld [vmem:[%s1 + $0xc4] sm:$0xf]
  %v68 = vld [vmem:[%s1 + $0xc8] sm:$0xf]
  %v69 = vld [vmem:[%s1 + $0xcc] sm:$0xf]
  %v70 = vld [vmem:[%s1 + $0xd0] sm:$0xf]
  %v71 = vld [vmem:[%s1 + $0xd4] sm:$0xf]
  %v72 = vld [vmem:[%s1 + $0xd8] sm:$0xf]
  %v73 = vld [vmem:[%s1 + $0xdc] sm:$0xf]
  %v74 = vld [vmem:[%s1 + $0xe0] sm:$0xf]
  %v75 = vld [vmem:[%s1 + $0xe4] sm:$0xf]
  %v76 = vld [vmem:[%s1 + $0xe8] sm:$0xf]
  %v77 = vld [vmem:[%s1 + $0xec] sm:$0xf]
  %v78 = vld [vmem:[%s1 + $0xf0] sm:$0xf]
  %v79 = vld [vmem:[%s1 + $0xf4] sm:$0xf]
  %v80 = vld [vmem:[%s1 + $0xf8] sm:$0xf]
  %v81 = vld [vmem:[%s1 + $0xfc] sm:$0xf]
  %v82 = vld [vmem:[%s1 + $0x100] sm:$0xf]
  %v83 = vld [vmem:[%s1 + $0x104] sm:$0xf]
  %v84 = vld [vmem:[%s1 + $0x108] sm:$0xf]
  %v85 = vld [vmem:[%s1 + $0x10c] sm:$0xf]
  %v86 = vld [vmem:[%s1 + $0x110] sm:$0xf]
  %v87 = vld [vmem:[%s1 + $0x114] sm:$0xf]
  %v88 = vld [vmem:[%s1 + $0x118] sm:$0xf]
  %v89 = vld [vmem:[%s1 + $0x11c] sm:$0xf]
  %v90 = vld [vmem:[%s2] sm:$0x1]
  %v92 = vperm.slane %v90, 0
  %v97 = vunpack.c.l.b16 %v15
  %v98 = vunpack.c.h.b16 %v15
  %v99 = vunpack.c.l.b16 %v16
  %v100 = vunpack.c.h.b16 %v16
  %v101 = vunpack.c.l.b16 %v17
  %v102 = vpack.c.b16 %v97, %v97
  %v103 = vpack.c.b16 %v98, %v98
  %v104 = vpack.c.b16 %v99, %v99
  %v105 = vpack.c.b16 %v100, %v100
  %v106 = vpack.c.b16 %v101, %v101
  %v183 = vunpack.c.l.b16 %v18
  %v184 = vunpack.c.l.b16 %v19
  %v185 = vunpack.c.l.b16 %v20
  %v186 = vunpack.c.l.b16 %v21
  %v187 = vunpack.c.l.b16 %v22
  %v188 = vunpack.c.l.b16 %v23
  %v189 = vunpack.c.l.b16 %v24
  %v190 = vunpack.c.l.b16 %v25
  %v191 = vunpack.c.l.b16 %v26
  %v192 = vunpack.c.l.b16 %v27
  %v193 = vunpack.c.l.b16 %v28
  %v194 = vunpack.c.l.b16 %v29
  %v195 = vunpack.c.l.b16 %v30
  %v196 = vunpack.c.l.b16 %v31
  %v197 = vunpack.c.l.b16 %v32
  %v198 = vunpack.c.l.b16 %v33
  %v199 = vunpack.c.l.b16 %v34
  %v200 = vunpack.c.l.b16 %v35
  %v201 = vunpack.c.l.b16 %v36
  %v202 = vunpack.c.l.b16 %v37
  %v203 = vunpack.c.l.b16 %v38
  %v204 = vunpack.c.l.b16 %v39
  %v205 = vunpack.c.l.b16 %v40
  %v206 = vunpack.c.l.b16 %v41
  %v207 = vunpack.c.l.b16 %v42
  %v208 = vunpack.c.l.b16 %v43
  %v209 = vunpack.c.l.b16 %v44
  %v210 = vunpack.c.l.b16 %v45
  %v211 = vunpack.c.l.b16 %v46
  %v212 = vunpack.c.l.b16 %v47
  %v213 = vunpack.c.l.b16 %v48
  %v214 = vunpack.c.l.b16 %v49
  %v215 = vunpack.c.l.b16 %v50
  %v216 = vunpack.c.l.b16 %v51
  %v217 = vunpack.c.l.b16 %v52
  %v218 = vunpack.c.l.b16 %v53
  %v219 = vunpack.c.l.b16 %v54
  %v220 = vunpack.c.l.b16 %v55
  %v221 = vunpack.c.l.b16 %v56
  %v222 = vunpack.c.l.b16 %v57
  %v223 = vunpack.c.l.b16 %v58
  %v224 = vunpack.c.l.b16 %v59
  %v225 = vunpack.c.l.b16 %v60
  %v226 = vunpack.c.l.b16 %v61
  %v227 = vunpack.c.l.b16 %v62
  %v228 = vunpack.c.l.b16 %v63
  %v229 = vunpack.c.l.b16 %v64
  %v230 = vunpack.c.l.b16 %v65
  %v231 = vunpack.c.l.b16 %v66
  %v232 = vunpack.c.l.b16 %v67
  %v233 = vunpack.c.l.b16 %v68
  %v234 = vunpack.c.l.b16 %v69
  %v235 = vunpack.c.l.b16 %v70
  %v236 = vunpack.c.l.b16 %v71
  %v237 = vunpack.c.l.b16 %v72
  %v238 = vunpack.c.l.b16 %v73
  %v239 = vunpack.c.l.b16 %v74
  %v240 = vunpack.c.l.b16 %v75
  %v241 = vunpack.c.l.b16 %v76
  %v242 = vunpack.c.l.b16 %v77
  %v243 = vunpack.c.l.b16 %v78
  %v244 = vunpack.c.l.b16 %v79
  %v245 = vunpack.c.l.b16 %v80
  %v246 = vunpack.c.l.b16 %v81
  %v247 = vunpack.c.l.b16 %v82
  %v248 = vunpack.c.l.b16 %v83
  %v249 = vunpack.c.l.b16 %v84
  %v250 = vunpack.c.l.b16 %v85
  %v251 = vunpack.c.l.b16 %v86
  %v252 = vunpack.c.l.b16 %v87
  %v253 = vunpack.c.l.b16 %v88
  %v254 = vunpack.c.l.b16 %v89
  %v255 = vpack.c.b16 %v184, %v183
  %v256 = vpack.c.b16 %v186, %v185
  %v257 = vpack.c.b16 %v188, %v187
  %v258 = vpack.c.b16 %v190, %v189
  %v259 = vpack.c.b16 %v192, %v191
  %v260 = vpack.c.b16 %v194, %v193
  %v261 = vpack.c.b16 %v196, %v195
  %v262 = vpack.c.b16 %v198, %v197
  %v263 = vpack.c.b16 %v200, %v199
  %v264 = vpack.c.b16 %v202, %v201
  %v265 = vpack.c.b16 %v204, %v203
  %v266 = vpack.c.b16 %v206, %v205
  %v267 = vpack.c.b16 %v208, %v207
  %v268 = vpack.c.b16 %v210, %v209
  %v269 = vpack.c.b16 %v212, %v211
  %v270 = vpack.c.b16 %v214, %v213
  %v271 = vpack.c.b16 %v216, %v215
  %v272 = vpack.c.b16 %v218, %v217
  %v273 = vpack.c.b16 %v220, %v219
  %v274 = vpack.c.b16 %v222, %v221
  %v275 = vpack.c.b16 %v224, %v223
  %v276 = vpack.c.b16 %v226, %v225
  %v277 = vpack.c.b16 %v228, %v227
  %v278 = vpack.c.b16 %v230, %v229
  %v279 = vpack.c.b16 %v232, %v231
  %v280 = vpack.c.b16 %v234, %v233
  %v281 = vpack.c.b16 %v236, %v235
  %v282 = vpack.c.b16 %v238, %v237
  %v283 = vpack.c.b16 %v240, %v239
  %v284 = vpack.c.b16 %v242, %v241
  %v285 = vpack.c.b16 %v244, %v243
  %v286 = vpack.c.b16 %v246, %v245
  %v287 = vpack.c.b16 %v248, %v247
  %v288 = vpack.c.b16 %v250, %v249
  %v289 = vpack.c.b16 %v252, %v251
  %v290 = vpack.c.b16 %v254, %v253
  %vm327 = vcmask 523264
  %v329 = vsel %vm327, %v106, 0
  %331 = vmatpush.bf16.msra.mxu0 %v262
  %332 = vmatpush.bf16.msra.mxu0 %v261
  %333 = vmatpush.bf16.msra.mxu0 %v260
  %334 = vmatpush.bf16.msra.mxu0 %v259
  %335 = vmatpush.bf16.msra.mxu0 %v258
  %336 = vmatpush.bf16.msra.mxu0 %v257
  %337 = vmatpush.bf16.msra.mxu0 %v256
  %338 = vmatpush.bf16.msra.mxu0 %v255
  %339 = vmatmul.bf16.gmra.mxu0 %v102
  %v340 = vpop.f32.mrf.mxu0
  %v341 = vadd.f32 %v92, %v340
  %v342 = vpop.f32.mrf.mxu0
  %343 = vdwg.mxu0
  %344 = vmatpush.bf16.msra.mxu0 %v270
  %345 = vmatpush.bf16.msra.mxu0 %v269
  %346 = vmatpush.bf16.msra.mxu0 %v268
  %347 = vmatpush.bf16.msra.mxu0 %v267
  %348 = vmatpush.bf16.msra.mxu0 %v266
  %349 = vmatpush.bf16.msra.mxu0 %v265
  %350 = vmatpush.bf16.msra.mxu0 %v264
  %351 = vmatpush.bf16.msra.mxu0 %v263
  %352 = vmatmul.bf16.gmra.mxu0 %v103
  %v353 = vpop.f32.mrf.mxu0
  %v354 = vadd.f32 %v341, %v353
  %v355 = vpop.f32.mrf.mxu0
  %356 = vdwg.mxu0
  %357 = vmatpush.bf16.msra.mxu0 %v278
  %358 = vmatpush.bf16.msra.mxu0 %v277
  %359 = vmatpush.bf16.msra.mxu0 %v276
  %360 = vmatpush.bf16.msra.mxu0 %v275
  %361 = vmatpush.bf16.msra.mxu0 %v274
  %362 = vmatpush.bf16.msra.mxu0 %v273
  %363 = vmatpush.bf16.msra.mxu0 %v272
  %364 = vmatpush.bf16.msra.mxu0 %v271
  %365 = vmatmul.bf16.gmra.mxu0 %v104
  %v366 = vpop.f32.mrf.mxu0
  %v367 = vadd.f32 %v354, %v366
  %v368 = vpop.f32.mrf.mxu0
  %369 = vdwg.mxu0
  %370 = vmatpush.bf16.msra.mxu0 %v286
  %371 = vmatpush.bf16.msra.mxu0 %v285
  %372 = vmatpush.bf16.msra.mxu0 %v284
  %373 = vmatpush.bf16.msra.mxu0 %v283
  %374 = vmatpush.bf16.msra.mxu0 %v282
  %375 = vmatpush.bf16.msra.mxu0 %v281
  %376 = vmatpush.bf16.msra.mxu0 %v280
  %377 = vmatpush.bf16.msra.mxu0 %v279
  %378 = vmatmul.bf16.gmra.mxu0 %v105
  %v379 = vpop.f32.mrf.mxu0
  %v380 = vadd.f32 %v367, %v379
  %v381 = vpop.f32.mrf.mxu0
  %382 = vdwg.mxu0
  %383 = vmatpush.bf16.msra.mxu0 0
  %384 = vmatpush.bf16.msra.mxu0 0
  %385 = vmatpush.bf16.msra.mxu0 0
  %386 = vmatpush.bf16.msra.mxu0 0
  %387 = vmatpush.bf16.msra.mxu0 %v290
  %388 = vmatpush.bf16.msra.mxu0 %v289
  %389 = vmatpush.bf16.msra.mxu0 %v288
  %390 = vmatpush.bf16.msra.mxu0 %v287
  %391 = vmatmul.bf16.gmra.mxu0 %v329
  %v392 = vpop.f32.mrf.mxu0
  %v393 = vadd.f32 %v380, %v392
  %v394 = vpop.f32.mrf.mxu0
  %395 = vdwg.mxu0
  %v396 = vmax.f32 %v393, 0.0
  %v397 = vpack.c.bf16 %v396, %v396
  %398 = vst [vmem:[%s3] sm:$0xf] %v397
  // Predicated region
  $region14: #{ppo_atari_snd_forward.12} parent=0 // pred_check
    _
  $region15: #{ppo_atari_snd_forward.12} parent=0 // pred_check_branch
    %400 = sbr.rel (0) target = $region17
  $region16: #{ppo_atari_snd_forward.12} parent=0 // pred_region
    _
  $region17: #{ppo_atari_snd_forward.12} parent=0 // pred_fallthru
    _
  // Predicated region
  $region18: #{ppo_atari_snd_forward.12} parent=0 // pred_check
    _
  $region19: #{ppo_atari_snd_forward.12} parent=0 // pred_check_branch
    %402 = sbr.rel (0) target = $region21
  $region20: #{ppo_atari_snd_forward.12} parent=0 // pred_region
    _
  $region21: #{ppo_atari_snd_forward.12} parent=0 // pred_fallthru
    _

// kernel: ppo_atari_snd_forward.17
$region0: #{ppo_atari_snd_forward.17}
  #allocation0 [shape = 'u32[]', space=smem, size = 0x4, offset = 0x4, fixed_abs, tag = 'smem constant byte address 0x4 - core index']
  #allocation1 [shape = 'u32[72,128]{1,0:T(1,128)}', space=vmem, size = 0x9000, scoped, tag = 'internal scratch']
  %s0 = inlined_call_operand.vmem [shape: f32[2,4], index: 0, kind: input, shape index: {}]
  %s1 = inlined_call_operand.vmem [shape: bf16[2,128], index: 1, kind: input, shape index: {}]
  %s2 = inlined_call_operand.vmem [shape: bf16[2,128], index: 2, kind: input, shape index: {}]
  %s3 = inlined_call_operand.vmem [shape: bf16[128,512], index: 3, kind: input, shape index: {}]
  %s4 = inlined_call_operand.vmem [shape: f32[1,512], index: 4, kind: input, shape index: {}]
  %s5 = inlined_call_operand.vmem [shape: bf16[512,512], index: 5, kind: input, shape index: {}]
  %s6 = inlined_call_operand.vmem [shape: f32[1,512], index: 6, kind: input, shape index: {}]
  %s7 = inlined_call_operand.vmem [shape: bf16[512,2], index: 7, kind: input, shape index: {}]
  %s8 = inlined_call_operand.vmem [shape: f32[1,2], index: 8, kind: input, shape index: {}]
  %s9 = inlined_call_operand.vmem [shape: bf16[512,512], index: 9, kind: input, shape index: {}]
  %s10 = inlined_call_operand.vmem [shape: f32[1,512], index: 10, kind: input, shape index: {}]
  %s11 = inlined_call_operand.vmem [shape: bf16[512,4], index: 11, kind: input, shape index: {}]
  %s12 = inlined_call_operand.vmem [shape: f32[1,4], index: 12, kind: input, shape index: {}]
  %s13 = inlined_call_operand.vmem [shape: bf16[128,512], index: 13, kind: input, shape index: {}]
  %s14 = inlined_call_operand.vmem [shape: f32[1,512], index: 14, kind: input, shape index: {}]
  %s15 = inlined_call_operand.hbm [shape: f32[2,512], index: 15, kind: output, shape index: {0}]
  %s16 = inlined_call_operand.hbm [shape: f32[2,2], index: 16, kind: output, shape index: {1}]
  %s17 = inlined_call_operand.hbm [shape: f32[2,4], index: 17, kind: output, shape index: {2}]
  %s18 = inlined_call_operand.hbm [shape: f32[2,4], index: 18, kind: output, shape index: {3}]
  %19 = xla_tuple %s15, %s16, %s17, %s18
  %s20 = sld [smem:[#allocation0]]
  $region94: #{ppo_atari_snd_forward.17} parent=0
    _
  %s22 = ssub.s32 1, %s20
  %s23 = scalar_select 0, %s22, %s20
  $region1: #{ppo_atari_snd_forward.17} parent=0
    #allocation2 [shape = 'u8[4096]{0}', space=vmem, size = 0x1000, scoped, tag = 'output window, operand 0, single buffered']
    #allocation3 [shape = 's32[1]{0}', space=sflag, size = 0x4, scoped, tag = 'scoped memory for ppo_atari_snd_forward.17']
    #allocation4 [shape = 'u8[1024]{0}', space=vmem, size = 0x400, scoped, tag = 'output window, operand 1, single buffered']
    #allocation5 [shape = 's32[1]{0}', space=sflag, size = 0x4, scoped, tag = 'scoped memory for ppo_atari_snd_forward.17']
    #allocation6 [shape = 'u8[1024]{0}', space=vmem, size = 0x400, scoped, tag = 'output window, operand 2, single buffered']
    #allocation7 [shape = 'u8[1024]{0}', space=vmem, size = 0x400, scoped, tag = 'output window, operand 3, single buffered']
    #allocation8 [shape = 's32[1]{0}', space=sflag, size = 0x4, scoped, tag = 'scoped memory for ppo_atari_snd_forward.17']
    %24 = vsyncpa [#allocation3], 0
    %25 = vsyncpa [#allocation5], 0
    %26 = vsyncpa [#allocation8], 0
    // Predicated region
    $region2: #{ppo_atari_snd_forward.17} parent=1 // pred_check
      _
    $region3: #{ppo_atari_snd_forward.17} parent=1 // pred_check_branch
      %28 = sbr.rel (0) target = $region5
    $region4: #{ppo_atari_snd_forward.17} parent=1 // pred_region
      _
    $region5: #{ppo_atari_snd_forward.17} parent=1 // pred_fallthru
      _
    // Predicated region
    $region6: #{ppo_atari_snd_forward.17} parent=1 // pred_check
      _
    $region7: #{ppo_atari_snd_forward.17} parent=1 // pred_check_branch
      %30 = sbr.rel (0) target = $region9
    $region8: #{ppo_atari_snd_forward.17} parent=1 // pred_region
      _
    $region9: #{ppo_atari_snd_forward.17} parent=1 // pred_fallthru
      _
    // Predicated region
    $region10: #{ppo_atari_snd_forward.17} parent=1 // pred_check
      _
    $region11: #{ppo_atari_snd_forward.17} parent=1 // pred_check_branch
      %32 = sbr.rel (0) target = $region13
    $region12: #{ppo_atari_snd_forward.17} parent=1 // pred_region
      _
    $region13: #{ppo_atari_snd_forward.17} parent=1 // pred_fallthru
      _
    // Predicated region
    $region14: #{ppo_atari_snd_forward.17} parent=1 // pred_check
      _
    $region15: #{ppo_atari_snd_forward.17} parent=1 // pred_check_branch
      %34 = sbr.rel (0) target = $region17
    $region16: #{ppo_atari_snd_forward.17} parent=1 // pred_region
      _
    $region17: #{ppo_atari_snd_forward.17} parent=1 // pred_fallthru
      _
    // Predicated region
    $region18: #{ppo_atari_snd_forward.17} parent=1 // pred_check
      _
    $region19: #{ppo_atari_snd_forward.17} parent=1 // pred_check_branch
      %36 = sbr.rel (0) target = $region21
    $region20: #{ppo_atari_snd_forward.17} parent=1 // pred_region
      _
    $region21: #{ppo_atari_snd_forward.17} parent=1 // pred_fallthru
      _
    // Predicated region
    $region22: #{ppo_atari_snd_forward.17} parent=1 // pred_check
      _
    $region23: #{ppo_atari_snd_forward.17} parent=1 // pred_check_branch
      %38 = sbr.rel (0) target = $region25
    $region24: #{ppo_atari_snd_forward.17} parent=1 // pred_region
      _
    $region25: #{ppo_atari_snd_forward.17} parent=1 // pred_fallthru
      _
    // Predicated region
    $region26: #{ppo_atari_snd_forward.17} parent=1 // pred_check
      _
    $region27: #{ppo_atari_snd_forward.17} parent=1 // pred_check_branch
      %40 = sbr.rel (0) target = $region29
    $region28: #{ppo_atari_snd_forward.17} parent=1 // pred_region
      _
    $region29: #{ppo_atari_snd_forward.17} parent=1 // pred_fallthru
      _
    // Predicated region
    $region30: #{ppo_atari_snd_forward.17} parent=1 // pred_check
      _
    $region31: #{ppo_atari_snd_forward.17} parent=1 // pred_check_branch
      %42 = sbr.rel (0) target = $region33
    $region32: #{ppo_atari_snd_forward.17} parent=1 // pred_region
      _
    $region33: #{ppo_atari_snd_forward.17} parent=1 // pred_fallthru
      _
    // Predicated region
    $region34: #{ppo_atari_snd_forward.17} parent=1 // pred_check
      _
    $region35: #{ppo_atari_snd_forward.17} parent=1 // pred_check_branch
      %44 = sbr.rel (0) target = $region37
    $region36: #{ppo_atari_snd_forward.17} parent=1 // pred_region
      _
    $region37: #{ppo_atari_snd_forward.17} parent=1 // pred_fallthru
      _
    // Predicated region
    $region38: #{ppo_atari_snd_forward.17} parent=1 // pred_check
      _
    $region39: #{ppo_atari_snd_forward.17} parent=1 // pred_check_branch
      %46 = sbr.rel (0) target = $region41
    $region40: #{ppo_atari_snd_forward.17} parent=1 // pred_region
      _
    $region41: #{ppo_atari_snd_forward.17} parent=1 // pred_fallthru
      _
    // Predicated region
    $region42: #{ppo_atari_snd_forward.17} parent=1 // pred_check
      _
    $region43: #{ppo_atari_snd_forward.17} parent=1 // pred_check_branch
      %48 = sbr.rel (0) target = $region45
    $region44: #{ppo_atari_snd_forward.17} parent=1 // pred_region
      _
    $region45: #{ppo_atari_snd_forward.17} parent=1 // pred_fallthru
      _
    // Predicated region
    $region46: #{ppo_atari_snd_forward.17} parent=1 // pred_check
      _
    $region47: #{ppo_atari_snd_forward.17} parent=1 // pred_check_branch
      %50 = sbr.rel (0) target = $region49
    $region48: #{ppo_atari_snd_forward.17} parent=1 // pred_region
      _
    $region49: #{ppo_atari_snd_forward.17} parent=1 // pred_fallthru
      _
    // Predicated region
    $region50: #{ppo_atari_snd_forward.17} parent=1 // pred_check
      _
    $region51: #{ppo_atari_snd_forward.17} parent=1 // pred_check_branch
      %52 = sbr.rel (0) target = $region53
    $region52: #{ppo_atari_snd_forward.17} parent=1 // pred_region
      _
    $region53: #{ppo_atari_snd_forward.17} parent=1 // pred_fallthru
      _
    // Predicated region
    $region54: #{ppo_atari_snd_forward.17} parent=1 // pred_check
      _
    $region55: #{ppo_atari_snd_forward.17} parent=1 // pred_check_branch
      %54 = sbr.rel (0) target = $region57
    $region56: #{ppo_atari_snd_forward.17} parent=1 // pred_region
      _
    $region57: #{ppo_atari_snd_forward.17} parent=1 // pred_fallthru
      _
    // Predicated region
    $region58: #{ppo_atari_snd_forward.17} parent=1 // pred_check
      _
    $region59: #{ppo_atari_snd_forward.17} parent=1 // pred_check_branch
      %56 = sbr.rel (0) target = $region61
    $region60: #{ppo_atari_snd_forward.17} parent=1 // pred_region
      _
    $region61: #{ppo_atari_snd_forward.17} parent=1 // pred_fallthru
      _
    %v57 = vld [vmem:[%s1] sm:$0x1]
    %v58 = vld [vmem:[%s3] sm:$0xff]
    %v59 = vld [vmem:[%s3 + $0x8] sm:$0xff]
    %v60 = vld [vmem:[%s3 + $0x10] sm:$0xff]
    %v61 = vld [vmem:[%s3 + $0x18] sm:$0xff]
    %v62 = vld [vmem:[%s3 + $0x20] sm:$0xff]
    %v63 = vld [vmem:[%s3 + $0x28] sm:$0xff]
    %v64 = vld [vmem:[%s3 + $0x30] sm:$0xff]
    %v65 = vld [vmem:[%s3 + $0x38] sm:$0xff]
    %v66 = vld [vmem:[%s3 + $0x40] sm:$0xff]
    %v67 = vld [vmem:[%s3 + $0x48] sm:$0xff]
    %v68 = vld [vmem:[%s3 + $0x50] sm:$0xff]
    %v69 = vld [vmem:[%s3 + $0x58] sm:$0xff]
    %v70 = vld [vmem:[%s3 + $0x60] sm:$0xff]
    %v71 = vld [vmem:[%s3 + $0x68] sm:$0xff]
    %v72 = vld [vmem:[%s3 + $0x70] sm:$0xff]
    %v73 = vld [vmem:[%s3 + $0x78] sm:$0xff]
    %v74 = vld [vmem:[%s3 + $0x80] sm:$0xff]
    %v75 = vld [vmem:[%s3 + $0x88] sm:$0xff]
    %v76 = vld [vmem:[%s3 + $0x90] sm:$0xff]
    %v77 = vld [vmem:[%s3 + $0x98] sm:$0xff]
    %v78 = vld [vmem:[%s3 + $0xa0] sm:$0xff]
    %v79 = vld [vmem:[%s3 + $0xa8] sm:$0xff]
    %v80 = vld [vmem:[%s3 + $0xb0] sm:$0xff]
    %v81 = vld [vmem:[%s3 + $0xb8] sm:$0xff]
    %v82 = vld [vmem:[%s3 + $0xc0] sm:$0xff]
    %v83 = vld [vmem:[%s3 + $0xc8] sm:$0xff]
    %v84 = vld [vmem:[%s3 + $0xd0] sm:$0xff]
    %v85 = vld [vmem:[%s3 + $0xd8] sm:$0xff]
    %v86 = vld [vmem:[%s3 + $0xe0] sm:$0xff]
    %v87 = vld [vmem:[%s3 + $0xe8] sm:$0xff]
    %v88 = vld [vmem:[%s3 + $0xf0] sm:$0xff]
    %v89 = vld [vmem:[%s3 + $0xf8] sm:$0xff]
    %v90 = vld [vmem:[%s4] sm:$0xf]
    %v92 = vperm.slane %v90, 0
    %v93 = vperm.slane %v90, 1
    %v94 = vperm.slane %v90, 2
    %v95 = vperm.slane %v90, 3
    %v132 = vunpack.c.l.b16 %v58
    %v133 = vunpack.c.h.b16 %v58
    %v134 = vunpack.c.l.b16 %v59
    %v135 = vunpack.c.h.b16 %v59
    %v136 = vunpack.c.l.b16 %v60
    %v137 = vunpack.c.h.b16 %v60
    %v138 = vunpack.c.l.b16 %v61
    %v139 = vunpack.c.h.b16 %v61
    %v140 = vunpack.c.l.b16 %v62
    %v141 = vunpack.c.h.b16 %v62
    %v142 = vunpack.c.l.b16 %v63
    %v143 = vunpack.c.h.b16 %v63
    %v144 = vunpack.c.l.b16 %v64
    %v145 = vunpack.c.h.b16 %v64
    %v146 = vunpack.c.l.b16 %v65
    %v147 = vunpack.c.h.b16 %v65
    %v148 = vunpack.c.l.b16 %v66
    %v149 = vunpack.c.h.b16 %v66
    %v150 = vunpack.c.l.b16 %v67
    %v151 = vunpack.c.h.b16 %v67
    %v152 = vunpack.c.l.b16 %v68
    %v153 = vunpack.c.h.b16 %v68
    %v154 = vunpack.c.l.b16 %v69
    %v155 = vunpack.c.h.b16 %v69
    %v156 = vunpack.c.l.b16 %v70
    %v157 = vunpack.c.h.b16 %v70
    %v158 = vunpack.c.l.b16 %v71
    %v159 = vunpack.c.h.b16 %v71
    %v160 = vunpack.c.l.b16 %v72
    %v161 = vunpack.c.h.b16 %v72
    %v162 = vunpack.c.l.b16 %v73
    %v163 = vunpack.c.h.b16 %v73
    %v164 = vunpack.c.l.b16 %v74
    %v165 = vunpack.c.h.b16 %v74
    %v166 = vunpack.c.l.b16 %v75
    %v167 = vunpack.c.h.b16 %v75
    %v168 = vunpack.c.l.b16 %v76
    %v169 = vunpack.c.h.b16 %v76
    %v170 = vunpack.c.l.b16 %v77
    %v171 = vunpack.c.h.b16 %v77
    %v172 = vunpack.c.l.b16 %v78
    %v173 = vunpack.c.h.b16 %v78
    %v174 = vunpack.c.l.b16 %v79
    %v175 = vunpack.c.h.b16 %v79
    %v176 = vunpack.c.l.b16 %v80
    %v177 = vunpack.c.h.b16 %v80
    %v178 = vunpack.c.l.b16 %v81
    %v179 = vunpack.c.h.b16 %v81
    %v180 = vunpack.c.l.b16 %v82
    %v181 = vunpack.c.h.b16 %v82
    %v182 = vunpack.c.l.b16 %v83
    %v183 = vunpack.c.h.b16 %v83
    %v184 = vunpack.c.l.b16 %v84
    %v185 = vunpack.c.h.b16 %v84
    %v186 = vunpack.c.l.b16 %v85
    %v187 = vunpack.c.h.b16 %v85
    %v188 = vunpack.c.l.b16 %v86
    %v189 = vunpack.c.h.b16 %v86
    %v190 = vunpack.c.l.b16 %v87
    %v191 = vunpack.c.h.b16 %v87
    %v192 = vunpack.c.l.b16 %v88
    %v193 = vunpack.c.h.b16 %v88
    %v194 = vunpack.c.l.b16 %v89
    %v195 = vunpack.c.h.b16 %v89
    %v196 = vpack.c.b16 %v136, %v132
    %v197 = vpack.c.b16 %v137, %v133
    %v198 = vpack.c.b16 %v138, %v134
    %v199 = vpack.c.b16 %v139, %v135
    %v200 = vpack.c.b16 %v144, %v140
    %v201 = vpack.c.b16 %v145, %v141
    %v202 = vpack.c.b16 %v146, %v142
    %v203 = vpack.c.b16 %v147, %v143
    %v204 = vpack.c.b16 %v152, %v148
    %v205 = vpack.c.b16 %v153, %v149
    %v206 = vpack.c.b16 %v154, %v150
    %v207 = vpack.c.b16 %v155, %v151
    %v208 = vpack.c.b16 %v160, %v156
    %v209 = vpack.c.b16 %v161, %v157
    %v210 = vpack.c.b16 %v162, %v158
    %v211 = vpack.c.b16 %v163, %v159
    %v212 = vpack.c.b16 %v168, %v164
    %v213 = vpack.c.b16 %v169, %v165
    %v214 = vpack.c.b16 %v170, %v166
    %v215 = vpack.c.b16 %v171, %v167
    %v216 = vpack.c.b16 %v176, %v172
    %v217 = vpack.c.b16 %v177, %v173
    %v218 = vpack.c.b16 %v178, %v174
    %v219 = vpack.c.b16 %v179, %v175
    %v220 = vpack.c.b16 %v184, %v180
    %v221 = vpack.c.b16 %v185, %v181
    %v222 = vpack.c.b16 %v186, %v182
    %v223 = vpack.c.b16 %v187, %v183
    %v224 = vpack.c.b16 %v192, %v188
    %v225 = vpack.c.b16 %v193, %v189
    %v226 = vpack.c.b16 %v194, %v190
    %v227 = vpack.c.b16 %v195, %v191
    %260 = vmatpush.bf16.msra.mxu0 %v224
    %261 = vmatpush.bf16.msra.mxu0 %v220
    %262 = vmatpush.bf16.msra.mxu0 %v216
    %263 = vmatpush.bf16.msra.mxu0 %v212
    %264 = vmatpush.bf16.msra.mxu0 %v208
    %265 = vmatpush.bf16.msra.mxu0 %v204
    %266 = vmatpush.bf16.msra.mxu0 %v200
    %267 = vmatpush.bf16.msra.mxu0 %v196
    %268 = vmatmul.bf16.gmra.mxu0 %v57
    %v269 = vpop.f32.mrf.mxu0
    %v270 = vadd.f32 %v92, %v269
    %v271 = vpop.f32.mrf.mxu0
    %272 = vdwg.mxu0
    %273 = vmatpush.bf16.msra.mxu0 %v225
    %274 = vmatpush.bf16.msra.mxu0 %v221
    %275 = vmatpush.bf16.msra.mxu0 %v217
    %276 = vmatpush.bf16.msra.mxu0 %v213
    %277 = vmatpush.bf16.msra.mxu0 %v209
    %278 = vmatpush.bf16.msra.mxu0 %v205
    %279 = vmatpush.bf16.msra.mxu0 %v201
    %280 = vmatpush.bf16.msra.mxu0 %v197
    %281 = vmatmul.bf16.gmra.mxu0 %v57
    %v282 = vpop.f32.mrf.mxu0
    %v283 = vadd.f32 %v93, %v282
    %v284 = vpop.f32.mrf.mxu0
    %285 = vdwg.mxu0
    %286 = vmatpush.bf16.msra.mxu0 %v226
    %287 = vmatpush.bf16.msra.mxu0 %v222
    %288 = vmatpush.bf16.msra.mxu0 %v218
    %289 = vmatpush.bf16.msra.mxu0 %v214
    %290 = vmatpush.bf16.msra.mxu0 %v210
    %291 = vmatpush.bf16.msra.mxu0 %v206
    %292 = vmatpush.bf16.msra.mxu0 %v202
    %293 = vmatpush.bf16.msra.mxu0 %v198
    %294 = vmatmul.bf16.gmra.mxu0 %v57
    %v295 = vpop.f32.mrf.mxu0
    %v296 = vadd.f32 %v94, %v295
    %v297 = vpop.f32.mrf.mxu0
    %298 = vdwg.mxu0
    %299 = vmatpush.bf16.msra.mxu0 %v227
    %300 = vmatpush.bf16.msra.mxu0 %v223
    %301 = vmatpush.bf16.msra.mxu0 %v219
    %302 = vmatpush.bf16.msra.mxu0 %v215
    %303 = vmatpush.bf16.msra.mxu0 %v211
    %304 = vmatpush.bf16.msra.mxu0 %v207
    %305 = vmatpush.bf16.msra.mxu0 %v203
    %306 = vmatpush.bf16.msra.mxu0 %v199
    %307 = vmatmul.bf16.gmra.mxu0 %v57
    %v308 = vpop.f32.mrf.mxu0
    %v309 = vadd.f32 %v95, %v308
    %v310 = vpop.f32.mrf.mxu0
    %311 = vdwg.mxu0
    %v312 = vmax.f32 %v270, 0.0
    %v313 = vmax.f32 %v283, 0.0
    %v314 = vmax.f32 %v296, 0.0
    %v315 = vmax.f32 %v309, 0.0
    %v316 = vpack.c.bf16 %v312, %v312
    %v317 = vpack.c.bf16 %v313, %v313
    %v318 = vpack.c.bf16 %v314, %v314
    %v319 = vpack.c.bf16 %v315, %v315
    %v320 = vld [vmem:[%s5] sm:$0xff]
    %v321 = vld [vmem:[%s5 + $0x8] sm:$0xff]
    %v322 = vld [vmem:[%s5 + $0x10] sm:$0xff]
    %v323 = vld [vmem:[%s5 + $0x18] sm:$0xff]
    %v324 = vld [vmem:[%s5 + $0x20] sm:$0xff]
    %v325 = vld [vmem:[%s5 + $0x28] sm:$0xff]
    %v326 = vld [vmem:[%s5 + $0x30] sm:$0xff]
    %v327 = vld [vmem:[%s5 + $0x38] sm:$0xff]
    %v328 = vld [vmem:[%s5 + $0x40] sm:$0xff]
    %v329 = vld [vmem:[%s5 + $0x48] sm:$0xff]
    %v330 = vld [vmem:[%s5 + $0x50] sm:$0xff]
    %v331 = vld [vmem:[%s5 + $0x58] sm:$0xff]
    %v332 = vld [vmem:[%s5 + $0x60] sm:$0xff]
    %v333 = vld [vmem:[%s5 + $0x68] sm:$0xff]
    %v334 = vld [vmem:[%s5 + $0x70] sm:$0xff]
    %v335 = vld [vmem:[%s5 + $0x78] sm:$0xff]
    %v336 = vld [vmem:[%s5 + $0x80] sm:$0xff]
    %v337 = vld [vmem:[%s5 + $0x88] sm:$0xff]
    %v338 = vld [vmem:[%s5 + $0x90] sm:$0xff]
    %v339 = vld [vmem:[%s5 + $0x98] sm:$0xff]
    %v340 = vld [vmem:[%s5 + $0xa0] sm:$0xff]
    %v341 = vld [vmem:[%s5 + $0xa8] sm:$0xff]
    %v342 = vld [vmem:[%s5 + $0xb0] sm:$0xff]
    %v343 = vld [vmem:[%s5 + $0xb8] sm:$0xff]
    %v344 = vld [vmem:[%s5 + $0xc0] sm:$0xff]
    %v345 = vld [vmem:[%s5 + $0xc8] sm:$0xff]
    %v346 = vld [vmem:[%s5 + $0xd0] sm:$0xff]
    %v347 = vld [vmem:[%s5 + $0xd8] sm:$0xff]
    %v348 = vld [vmem:[%s5 + $0xe0] sm:$0xff]
    %v349 = vld [vmem:[%s5 + $0xe8] sm:$0xff]
    %v350 = vld [vmem:[%s5 + $0xf0] sm:$0xff]
    %v351 = vld [vmem:[%s5 + $0xf8] sm:$0xff]
    %v352 = vld [vmem:[%s5 + $0x100] sm:$0xff]
    %v353 = vld [vmem:[%s5 + $0x108] sm:$0xff]
    %v354 = vld [vmem:[%s5 + $0x110] sm:$0xff]
    %v355 = vld [vmem:[%s5 + $0x118] sm:$0xff]
    %v356 = vld [vmem:[%s5 + $0x120] sm:$0xff]
    %v357 = vld [vmem:[%s5 + $0x128] sm:$0xff]
    %v358 = vld [vmem:[%s5 + $0x130] sm:$0xff]
    %v359 = vld [vmem:[%s5 + $0x138] sm:$0xff]
    %v360 = vld [vmem:[%s5 + $0x140] sm:$0xff]
    %v361 = vld [vmem:[%s5 + $0x148] sm:$0xff]
    %v362 = vld [vmem:[%s5 + $0x150] sm:$0xff]
    %v363 = vld [vmem:[%s5 + $0x158] sm:$0xff]
    %v364 = vld [vmem:[%s5 + $0x160] sm:$0xff]
    %v365 = vld [vmem:[%s5 + $0x168] sm:$0xff]
    %v366 = vld [vmem:[%s5 + $0x170] sm:$0xff]
    %v367 = vld [vmem:[%s5 + $0x178] sm:$0xff]
    %v368 = vld [vmem:[%s5 + $0x180] sm:$0xff]
    %v369 = vld [vmem:[%s5 + $0x188] sm:$0xff]
    %v370 = vld [vmem:[%s5 + $0x190] sm:$0xff]
    %v371 = vld [vmem:[%s5 + $0x198] sm:$0xff]
    %v372 = vld [vmem:[%s5 + $0x1a0] sm:$0xff]
    %v373 = vld [vmem:[%s5 + $0x1a8] sm:$0xff]
    %v374 = vld [vmem:[%s5 + $0x1b0] sm:$0xff]
    %v375 = vld [vmem:[%s5 + $0x1b8] sm:$0xff]
    %v376 = vld [vmem:[%s5 + $0x1c0] sm:$0xff]
    %v377 = vld [vmem:[%s5 + $0x1c8] sm:$0xff]
    %v378 = vld [vmem:[%s5 + $0x1d0] sm:$0xff]
    %v379 = vld [vmem:[%s5 + $0x1d8] sm:$0xff]
    %v380 = vld [vmem:[%s5 + $0x1e0] sm:$0xff]
    %v381 = vld [vmem:[%s5 + $0x1e8] sm:$0xff]
    %v382 = vld [vmem:[%s5 + $0x1f0] sm:$0xff]
    %v383 = vld [vmem:[%s5 + $0x1f8] sm:$0xff]
    %v384 = vld [vmem:[%s5 + $0x200] sm:$0xff]
    %v385 = vld [vmem:[%s5 + $0x208] sm:$0xff]
    %v386 = vld [vmem:[%s5 + $0x210] sm:$0xff]
    %v387 = vld [vmem:[%s5 + $0x218] sm:$0xff]
    %v388 = vld [vmem:[%s5 + $0x220] sm:$0xff]
    %v389 = vld [vmem:[%s5 + $0x228] sm:$0xff]
    %v390 = vld [vmem:[%s5 + $0x230] sm:$0xff]
    %v391 = vld [vmem:[%s5 + $0x238] sm:$0xff]
    %v392 = vld [vmem:[%s5 + $0x240] sm:$0xff]
    %v393 = vld [vmem:[%s5 + $0x248] sm:$0xff]
    %v394 = vld [vmem:[%s5 + $0x250] sm:$0xff]
    %v395 = vld [vmem:[%s5 + $0x258] sm:$0xff]
    %v396 = vld [vmem:[%s5 + $0x260] sm:$0xff]
    %v397 = vld [vmem:[%s5 + $0x268] sm:$0xff]
    %v398 = vld [vmem:[%s5 + $0x270] sm:$0xff]
    %v399 = vld [vmem:[%s5 + $0x278] sm:$0xff]
    %v400 = vld [vmem:[%s5 + $0x280] sm:$0xff]
    %v401 = vld [vmem:[%s5 + $0x288] sm:$0xff]
    %v402 = vld [vmem:[%s5 + $0x290] sm:$0xff]
    %v403 = vld [vmem:[%s5 + $0x298] sm:$0xff]
    %v404 = vld [vmem:[%s5 + $0x2a0] sm:$0xff]
    %v405 = vld [vmem:[%s5 + $0x2a8] sm:$0xff]
    %v406 = vld [vmem:[%s5 + $0x2b0] sm:$0xff]
    %v407 = vld [vmem:[%s5 + $0x2b8] sm:$0xff]
    %v408 = vld [vmem:[%s5 + $0x2c0] sm:$0xff]
    %v409 = vld [vmem:[%s5 + $0x2c8] sm:$0xff]
    %v410 = vld [vmem:[%s5 + $0x2d0] sm:$0xff]
    %v411 = vld [vmem:[%s5 + $0x2d8] sm:$0xff]
    %v412 = vld [vmem:[%s5 + $0x2e0] sm:$0xff]
    %v413 = vld [vmem:[%s5 + $0x2e8] sm:$0xff]
    %v414 = vld [vmem:[%s5 + $0x2f0] sm:$0xff]
    %v415 = vld [vmem:[%s5 + $0x2f8] sm:$0xff]
    %v416 = vld [vmem:[%s5 + $0x300] sm:$0xff]
    %v417 = vld [vmem:[%s5 + $0x308] sm:$0xff]
    %v418 = vld [vmem:[%s5 + $0x310] sm:$0xff]
    %v419 = vld [vmem:[%s5 + $0x318] sm:$0xff]
    %v420 = vld [vmem:[%s5 + $0x320] sm:$0xff]
    %v421 = vld [vmem:[%s5 + $0x328] sm:$0xff]
    %v422 = vld [vmem:[%s5 + $0x330] sm:$0xff]
    %v423 = vld [vmem:[%s5 + $0x338] sm:$0xff]
    %v424 = vld [vmem:[%s5 + $0x340] sm:$0xff]
    %v425 = vld [vmem:[%s5 + $0x348] sm:$0xff]
    %v426 = vld [vmem:[%s5 + $0x350] sm:$0xff]
    %v427 = vld [vmem:[%s5 + $0x358] sm:$0xff]
    %v428 = vld [vmem:[%s5 + $0x360] sm:$0xff]
    %v429 = vld [vmem:[%s5 + $0x368] sm:$0xff]
    %v430 = vld [vmem:[%s5 + $0x370] sm:$0xff]
    %v431 = vld [vmem:[%s5 + $0x378] sm:$0xff]
    %v432 = vld [vmem:[%s5 + $0x380] sm:$0xff]
    %v433 = vld [vmem:[%s5 + $0x388] sm:$0xff]
    %v434 = vld [vmem:[%s5 + $0x390] sm:$0xff]
    %v435 = vld [vmem:[%s5 + $0x398] sm:$0xff]
    %v436 = vld [vmem:[%s5 + $0x3a0] sm:$0xff]
    %v437 = vld [vmem:[%s5 + $0x3a8] sm:$0xff]
    %v438 = vld [vmem:[%s5 + $0x3b0] sm:$0xff]
    %v439 = vld [vmem:[%s5 + $0x3b8] sm:$0xff]
    %v440 = vld [vmem:[%s5 + $0x3c0] sm:$0xff]
    %v441 = vld [vmem:[%s5 + $0x3c8] sm:$0xff]
    %v442 = vld [vmem:[%s5 + $0x3d0] sm:$0xff]
    %v443 = vld [vmem:[%s5 + $0x3d8] sm:$0xff]
    %v444 = vld [vmem:[%s5 + $0x3e0] sm:$0xff]
    %v445 = vld [vmem:[%s5 + $0x3e8] sm:$0xff]
    %v446 = vld [vmem:[%s5 + $0x3f0] sm:$0xff]
    %v447 = vld [vmem:[%s5 + $0x3f8] sm:$0xff]
    %v448 = vld [vmem:[%s6] sm:$0xf]
    %v450 = vperm.slane %v448, 0
    %v451 = vperm.slane %v448, 1
    %v452 = vperm.slane %v448, 2
    %v453 = vperm.slane %v448, 3
    %v586 = vunpack.c.l.b16 %v320
    %v587 = vunpack.c.h.b16 %v320
    %v588 = vunpack.c.l.b16 %v321
    %v589 = vunpack.c.h.b16 %v321
    %v590 = vunpack.c.l.b16 %v322
    %v591 = vunpack.c.h.b16 %v322
    %v592 = vunpack.c.l.b16 %v323
    %v593 = vunpack.c.h.b16 %v323
    %v594 = vunpack.c.l.b16 %v324
    %v595 = vunpack.c.h.b16 %v324
    %v596 = vunpack.c.l.b16 %v325
    %v597 = vunpack.c.h.b16 %v325
    %v598 = vunpack.c.l.b16 %v326
    %v599 = vunpack.c.h.b16 %v326
    %v600 = vunpack.c.l.b16 %v327
    %v601 = vunpack.c.h.b16 %v327
    %v602 = vunpack.c.l.b16 %v328
    %v603 = vunpack.c.h.b16 %v328
    %v604 = vunpack.c.l.b16 %v329
    %v605 = vunpack.c.h.b16 %v329
    %v606 = vunpack.c.l.b16 %v330
    %v607 = vunpack.c.h.b16 %v330
    %v608 = vunpack.c.l.b16 %v331
    %v609 = vunpack.c.h.b16 %v331
    %v610 = vunpack.c.l.b16 %v332
    %v611 = vunpack.c.h.b16 %v332
    %v612 = vunpack.c.l.b16 %v333
    %v613 = vunpack.c.h.b16 %v333
    %v614 = vunpack.c.l.b16 %v334
    %v615 = vunpack.c.h.b16 %v334
    %v616 = vunpack.c.l.b16 %v335
    %v617 = vunpack.c.h.b16 %v335
    %v618 = vunpack.c.l.b16 %v336
    %v619 = vunpack.c.h.b16 %v336
    %v620 = vunpack.c.l.b16 %v337
    %v621 = vunpack.c.h.b16 %v337
    %v622 = vunpack.c.l.b16 %v338
    %v623 = vunpack.c.h.b16 %v338
    %v624 = vunpack.c.l.b16 %v339
    %v625 = vunpack.c.h.b16 %v339
    %v626 = vunpack.c.l.b16 %v340
    %v627 = vunpack.c.h.b16 %v340
    %v628 = vunpack.c.l.b16 %v341
    %v629 = vunpack.c.h.b16 %v341
    %v630 = vunpack.c.l.b16 %v342
    %v631 = vunpack.c.h.b16 %v342
    %v632 = vunpack.c.l.b16 %v343
    %v633 = vunpack.c.h.b16 %v343
    %v634 = vunpack.c.l.b16 %v344
    %v635 = vunpack.c.h.b16 %v344
    %v636 = vunpack.c.l.b16 %v345
    %v637 = vunpack.c.h.b16 %v345
    %v638 = vunpack.c.l.b16 %v346
    %v639 = vunpack.c.h.b16 %v346
    %v640 = vunpack.c.l.b16 %v347
    %v641 = vunpack.c.h.b16 %v347
    %v642 = vunpack.c.l.b16 %v348
    %v643 = vunpack.c.h.b16 %v348
    %v644 = vunpack.c.l.b16 %v349
    %v645 = vunpack.c.h.b16 %v349
    %v646 = vunpack.c.l.b16 %v350
    %v647 = vunpack.c.h.b16 %v350
    %v648 = vunpack.c.l.b16 %v351
    %v649 = vunpack.c.h.b16 %v351
    %v650 = vunpack.c.l.b16 %v352
    %v651 = vunpack.c.h.b16 %v352
    %v652 = vunpack.c.l.b16 %v353
    %v653 = vunpack.c.h.b16 %v353
    %v654 = vunpack.c.l.b16 %v354
    %v655 = vunpack.c.h.b16 %v354
    %v656 = vunpack.c.l.b16 %v355
    %v657 = vunpack.c.h.b16 %v355
    %v658 = vunpack.c.l.b16 %v356
    %v659 = vunpack.c.h.b16 %v356
    %v660 = vunpack.c.l.b16 %v357
    %v661 = vunpack.c.h.b16 %v357
    %v662 = vunpack.c.l.b16 %v358
    %v663 = vunpack.c.h.b16 %v358
    %v664 = vunpack.c.l.b16 %v359
    %v665 = vunpack.c.h.b16 %v359
    %v666 = vunpack.c.l.b16 %v360
    %v667 = vunpack.c.h.b16 %v360
    %v668 = vunpack.c.l.b16 %v361
    %v669 = vunpack.c.h.b16 %v361
    %v670 = vunpack.c.l.b16 %v362
    %v671 = vunpack.c.h.b16 %v362
    %v672 = vunpack.c.l.b16 %v363
    %v673 = vunpack.c.h.b16 %v363
    %v674 = vunpack.c.l.b16 %v364
    %v675 = vunpack.c.h.b16 %v364
    %v676 = vunpack.c.l.b16 %v365
    %v677 = vunpack.c.h.b16 %v365
    %v678 = vunpack.c.l.b16 %v366
    %v679 = vunpack.c.h.b16 %v366
    %v680 = vunpack.c.l.b16 %v367
    %v681 = vunpack.c.h.b16 %v367
    %v682 = vunpack.c.l.b16 %v368
    %v683 = vunpack.c.h.b16 %v368
    %v684 = vunpack.c.l.b16 %v369
    %v685 = vunpack.c.h.b16 %v369
    %v686 = vunpack.c.l.b16 %v370
    %v687 = vunpack.c.h.b16 %v370
    %v688 = vunpack.c.l.b16 %v371
    %v689 = vunpack.c.h.b16 %v371
    %v690 = vunpack.c.l.b16 %v372
    %v691 = vunpack.c.h.b16 %v372
    %v692 = vunpack.c.l.b16 %v373
    %v693 = vunpack.c.h.b16 %v373
    %v694 = vunpack.c.l.b16 %v374
    %v695 = vunpack.c.h.b16 %v374
    %v696 = vunpack.c.l.b16 %v375
    %v697 = vunpack.c.h.b16 %v375
    %v698 = vunpack.c.l.b16 %v376
    %v699 = vunpack.c.h.b16 %v376
    %v700 = vunpack.c.l.b16 %v377
    %v701 = vunpack.c.h.b16 %v377
    %v702 = vunpack.c.l.b16 %v378
    %v703 = vunpack.c.h.b16 %v378
    %v704 = vunpack.c.l.b16 %v379
    %v705 = vunpack.c.h.b16 %v379
    %v706 = vunpack.c.l.b16 %v380
    %v707 = vunpack.c.h.b16 %v380
    %v708 = vunpack.c.l.b16 %v381
    %v709 = vunpack.c.h.b16 %v381
    %v710 = vunpack.c.l.b16 %v382
    %v711 = vunpack.c.h.b16 %v382
    %v712 = vunpack.c.l.b16 %v383
    %v713 = vunpack.c.h.b16 %v383
    %v714 = vunpack.c.l.b16 %v384
    %v715 = vunpack.c.h.b16 %v384
    %v716 = vunpack.c.l.b16 %v385
    %v717 = vunpack.c.h.b16 %v385
    %v718 = vunpack.c.l.b16 %v386
    %v719 = vunpack.c.h.b16 %v386
    %v720 = vunpack.c.l.b16 %v387
    %v721 = vunpack.c.h.b16 %v387
    %v722 = vunpack.c.l.b16 %v388
    %v723 = vunpack.c.h.b16 %v388
    %v724 = vunpack.c.l.b16 %v389
    %v725 = vunpack.c.h.b16 %v389
    %v726 = vunpack.c.l.b16 %v390
    %v727 = vunpack.c.h.b16 %v390
    %v728 = vunpack.c.l.b16 %v391
    %v729 = vunpack.c.h.b16 %v391
    %v730 = vunpack.c.l.b16 %v392
    %v731 = vunpack.c.h.b16 %v392
    %v732 = vunpack.c.l.b16 %v393
    %v733 = vunpack.c.h.b16 %v393
    %v734 = vunpack.c.l.b16 %v394
    %v735 = vunpack.c.h.b16 %v394
    %v736 = vunpack.c.l.b16 %v395
    %v737 = vunpack.c.h.b16 %v395
    %v738 = vunpack.c.l.b16 %v396
    %v739 = vunpack.c.h.b16 %v396
    %v740 = vunpack.c.l.b16 %v397
    %v741 = vunpack.c.h.b16 %v397
    %v742 = vunpack.c.l.b16 %v398
    %v743 = vunpack.c.h.b16 %v398
    %v744 = vunpack.c.l.b16 %v399
    %v745 = vunpack.c.h.b16 %v399
    %v746 = vunpack.c.l.b16 %v400
    %v747 = vunpack.c.h.b16 %v400
    %v748 = vunpack.c.l.b16 %v401
    %v749 = vunpack.c.h.b16 %v401
    %v750 = vunpack.c.l.b16 %v402
    %v751 = vunpack.c.h.b16 %v402
    %v752 = vunpack.c.l.b16 %v403
    %v753 = vunpack.c.h.b16 %v403
    %v754 = vunpack.c.l.b16 %v404
    %v755 = vunpack.c.h.b16 %v404
    %v756 = vunpack.c.l.b16 %v405
    %v757 = vunpack.c.h.b16 %v405
    %v758 = vunpack.c.l.b16 %v406
    %v759 = vunpack.c.h.b16 %v406
    %v760 = vunpack.c.l.b16 %v407
    %v761 = vunpack.c.h.b16 %v407
    %v762 = vunpack.c.l.b16 %v408
    %v763 = vunpack.c.h.b16 %v408
    %v764 = vunpack.c.l.b16 %v409
    %v765 = vunpack.c.h.b16 %v409
    %v766 = vunpack.c.l.b16 %v410
    %v767 = vunpack.c.h.b16 %v410
    %v768 = vunpack.c.l.b16 %v411
    %v769 = vunpack.c.h.b16 %v411
    %v770 = vunpack.c.l.b16 %v412
    %v771 = vunpack.c.h.b16 %v412
    %v772 = vunpack.c.l.b16 %v413
    %v773 = vunpack.c.h.b16 %v413
    %v774 = vunpack.c.l.b16 %v414
    %v775 = vunpack.c.h.b16 %v414
    %v776 = vunpack.c.l.b16 %v415
    %v777 = vunpack.c.h.b16 %v415
    %v778 = vunpack.c.l.b16 %v416
    %v779 = vunpack.c.h.b16 %v416
    %v780 = vunpack.c.l.b16 %v417
    %v781 = vunpack.c.h.b16 %v417
    %v782 = vunpack.c.l.b16 %v418
    %v783 = vunpack.c.h.b16 %v418
    %v784 = vunpack.c.l.b16 %v419
    %v785 = vunpack.c.h.b16 %v419
    %v786 = vunpack.c.l.b16 %v420
    %v787 = vunpack.c.h.b16 %v420
    %v788 = vunpack.c.l.b16 %v421
    %v789 = vunpack.c.h.b16 %v421
    %v790 = vunpack.c.l.b16 %v422
    %v791 = vunpack.c.h.b16 %v422
    %v792 = vunpack.c.l.b16 %v423
    %v793 = vunpack.c.h.b16 %v423
    %v794 = vunpack.c.l.b16 %v424
    %v795 = vunpack.c.h.b16 %v424
    %v796 = vunpack.c.l.b16 %v425
    %v797 = vunpack.c.h.b16 %v425
    %v798 = vunpack.c.l.b16 %v426
    %v799 = vunpack.c.h.b16 %v426
    %v800 = vunpack.c.l.b16 %v427
    %v801 = vunpack.c.h.b16 %v427
    %v802 = vunpack.c.l.b16 %v428
    %v803 = vunpack.c.h.b16 %v428
    %v804 = vunpack.c.l.b16 %v429
    %v805 = vunpack.c.h.b16 %v429
    %v806 = vunpack.c.l.b16 %v430
    %v807 = vunpack.c.h.b16 %v430
    %v808 = vunpack.c.l.b16 %v431
    %v809 = vunpack.c.h.b16 %v431
    %v810 = vunpack.c.l.b16 %v432
    %v811 = vunpack.c.h.b16 %v432
    %v812 = vunpack.c.l.b16 %v433
    %v813 = vunpack.c.h.b16 %v433
    %v814 = vunpack.c.l.b16 %v434
    %v815 = vunpack.c.h.b16 %v434
    %v816 = vunpack.c.l.b16 %v435
    %v817 = vunpack.c.h.b16 %v435
    %v818 = vunpack.c.l.b16 %v436
    %v819 = vunpack.c.h.b16 %v436
    %v820 = vunpack.c.l.b16 %v437
    %v821 = vunpack.c.h.b16 %v437
    %v822 = vunpack.c.l.b16 %v438
    %v823 = vunpack.c.h.b16 %v438
    %v824 = vunpack.c.l.b16 %v439
    %v825 = vunpack.c.h.b16 %v439
    %v826 = vunpack.c.l.b16 %v440
    %v827 = vunpack.c.h.b16 %v440
    %v828 = vunpack.c.l.b16 %v441
    %v829 = vunpack.c.h.b16 %v441
    %v830 = vunpack.c.l.b16 %v442
    %v831 = vunpack.c.h.b16 %v442
    %v832 = vunpack.c.l.b16 %v443
    %v833 = vunpack.c.h.b16 %v443
    %v834 = vunpack.c.l.b16 %v444
    %v835 = vunpack.c.h.b16 %v444
    %v836 = vunpack.c.l.b16 %v445
    %v837 = vunpack.c.h.b16 %v445
    %v838 = vunpack.c.l.b16 %v446
    %v839 = vunpack.c.h.b16 %v446
    %v840 = vunpack.c.l.b16 %v447
    %v841 = vunpack.c.h.b16 %v447
    %v842 = vpack.c.b16 %v590, %v586
    %v843 = vpack.c.b16 %v591, %v587
    %v844 = vpack.c.b16 %v592, %v588
    %v845 = vpack.c.b16 %v593, %v589
    %v846 = vpack.c.b16 %v598, %v594
    %v847 = vpack.c.b16 %v599, %v595
    %v848 = vpack.c.b16 %v600, %v596
    %v849 = vpack.c.b16 %v601, %v597
    %v850 = vpack.c.b16 %v606, %v602
    %v851 = vpack.c.b16 %v607, %v603
    %v852 = vpack.c.b16 %v608, %v604
    %v853 = vpack.c.b16 %v609, %v605
    %v854 = vpack.c.b16 %v614, %v610
    %v855 = vpack.c.b16 %v615, %v611
    %v856 = vpack.c.b16 %v616, %v612
    %v857 = vpack.c.b16 %v617, %v613
    %v858 = vpack.c.b16 %v622, %v618
    %v859 = vpack.c.b16 %v623, %v619
    %v860 = vpack.c.b16 %v624, %v620
    %v861 = vpack.c.b16 %v625, %v621
    %v862 = vpack.c.b16 %v630, %v626
    %v863 = vpack.c.b16 %v631, %v627
    %v864 = vpack.c.b16 %v632, %v628
    %v865 = vpack.c.b16 %v633, %v629
    %v866 = vpack.c.b16 %v638, %v634
    %v867 = vpack.c.b16 %v639, %v635
    %v868 = vpack.c.b16 %v640, %v636
    %v869 = vpack.c.b16 %v641, %v637
    %v870 = vpack.c.b16 %v646, %v642
    %v871 = vpack.c.b16 %v647, %v643
    %v872 = vpack.c.b16 %v648, %v644
    %v873 = vpack.c.b16 %v649, %v645
    %v874 = vpack.c.b16 %v654, %v650
    %v875 = vpack.c.b16 %v655, %v651
    %v876 = vpack.c.b16 %v656, %v652
    %v877 = vpack.c.b16 %v657, %v653
    %v878 = vpack.c.b16 %v662, %v658
    %v879 = vpack.c.b16 %v663, %v659
    %v880 = vpack.c.b16 %v664, %v660
    %v881 = vpack.c.b16 %v665, %v661
    %v882 = vpack.c.b16 %v670, %v666
    %v883 = vpack.c.b16 %v671, %v667
    %v884 = vpack.c.b16 %v672, %v668
    %v885 = vpack.c.b16 %v673, %v669
    %v886 = vpack.c.b16 %v678, %v674
    %v887 = vpack.c.b16 %v679, %v675
    %v888 = vpack.c.b16 %v680, %v676
    %v889 = vpack.c.b16 %v681, %v677
    %v890 = vpack.c.b16 %v686, %v682
    %v891 = vpack.c.b16 %v687, %v683
    %v892 = vpack.c.b16 %v688, %v684
    %v893 = vpack.c.b16 %v689, %v685
    %v894 = vpack.c.b16 %v694, %v690
    %v895 = vpack.c.b16 %v695, %v691
    %v896 = vpack.c.b16 %v696, %v692
    %v897 = vpack.c.b16 %v697, %v693
    %v898 = vpack.c.b16 %v702, %v698
    %v899 = vpack.c.b16 %v703, %v699
    %v900 = vpack.c.b16 %v704, %v700
    %v901 = vpack.c.b16 %v705, %v701
    %v902 = vpack.c.b16 %v710, %v706
    %v903 = vpack.c.b16 %v711, %v707
    %v904 = vpack.c.b16 %v712, %v708
    %v905 = vpack.c.b16 %v713, %v709
    %v906 = vpack.c.b16 %v718, %v714
    %v907 = vpack.c.b16 %v719, %v715
    %v908 = vpack.c.b16 %v720, %v716
    %v909 = vpack.c.b16 %v721, %v717
    %v910 = vpack.c.b16 %v726, %v722
    %v911 = vpack.c.b16 %v727, %v723
    %v912 = vpack.c.b16 %v728, %v724
    %v913 = vpack.c.b16 %v729, %v725
    %v914 = vpack.c.b16 %v734, %v730
    %v915 = vpack.c.b16 %v735, %v731
    %v916 = vpack.c.b16 %v736, %v732
    %v917 = vpack.c.b16 %v737, %v733
    %v918 = vpack.c.b16 %v742, %v738
    %v919 = vpack.c.b16 %v743, %v739
    %v920 = vpack.c.b16 %v744, %v740
    %v921 = vpack.c.b16 %v745, %v741
    %v922 = vpack.c.b16 %v750, %v746
    %v923 = vpack.c.b16 %v751, %v747
    %v924 = vpack.c.b16 %v752, %v748
    %v925 = vpack.c.b16 %v753, %v749
    %v926 = vpack.c.b16 %v758, %v754
    %v927 = vpack.c.b16 %v759, %v755
    %v928 = vpack.c.b16 %v760, %v756
    %v929 = vpack.c.b16 %v761, %v757
    %v930 = vpack.c.b16 %v766, %v762
    %v931 = vpack.c.b16 %v767, %v763
    %v932 = vpack.c.b16 %v768, %v764
    %v933 = vpack.c.b16 %v769, %v765
    %v934 = vpack.c.b16 %v774, %v770
    %v935 = vpack.c.b16 %v775, %v771
    %v936 = vpack.c.b16 %v776, %v772
    %v937 = vpack.c.b16 %v777, %v773
    %v938 = vpack.c.b16 %v782, %v778
    %v939 = vpack.c.b16 %v783, %v779
    %v940 = vpack.c.b16 %v784, %v780
    %v941 = vpack.c.b16 %v785, %v781
    %v942 = vpack.c.b16 %v790, %v786
    %v943 = vpack.c.b16 %v791, %v787
    %v944 = vpack.c.b16 %v792, %v788
    %v945 = vpack.c.b16 %v793, %v789
    %v946 = vpack.c.b16 %v798, %v794
    %v947 = vpack.c.b16 %v799, %v795
    %v948 = vpack.c.b16 %v800, %v796
    %v949 = vpack.c.b16 %v801, %v797
    %v950 = vpack.c.b16 %v806, %v802
    %v951 = vpack.c.b16 %v807, %v803
    %v952 = vpack.c.b16 %v808, %v804
    %v953 = vpack.c.b16 %v809, %v805
    %v954 = vpack.c.b16 %v814, %v810
    %v955 = vpack.c.b16 %v815, %v811
    %v956 = vpack.c.b16 %v816, %v812
    %v957 = vpack.c.b16 %v817, %v813
    %v958 = vpack.c.b16 %v822, %v818
    %v959 = vpack.c.b16 %v823, %v819
    %v960 = vpack.c.b16 %v824, %v820
    %v961 = vpack.c.b16 %v825, %v821
    %v962 = vpack.c.b16 %v830, %v826
    %v963 = vpack.c.b16 %v831, %v827
    %v964 = vpack.c.b16 %v832, %v828
    %v965 = vpack.c.b16 %v833, %v829
    %v966 = vpack.c.b16 %v838, %v834
    %v967 = vpack.c.b16 %v839, %v835
    %v968 = vpack.c.b16 %v840, %v836
    %v969 = vpack.c.b16 %v841, %v837
    %1098 = vmatpush.bf16.msra.mxu0 %v870
    %1099 = vmatpush.bf16.msra.mxu0 %v866
    %1100 = vmatpush.bf16.msra.mxu0 %v862
    %1101 = vmatpush.bf16.msra.mxu0 %v858
    %1102 = vmatpush.bf16.msra.mxu0 %v854
    %1103 = vmatpush.bf16.msra.mxu0 %v850
    %1104 = vmatpush.bf16.msra.mxu0 %v846
    %1105 = vmatpush.bf16.msra.mxu0 %v842
    %1106 = vmatmul.bf16.gmra.mxu0 %v316
    %v1107 = vpop.f32.mrf.mxu0
    %v1108 = vadd.f32 %v450, %v1107
    %v1109 = vpop.f32.mrf.mxu0
    %1110 = vdwg.mxu0
    %1111 = vmatpush.bf16.msra.mxu0 %v902
    %1112 = vmatpush.bf16.msra.mxu0 %v898
    %1113 = vmatpush.bf16.msra.mxu0 %v894
    %1114 = vmatpush.bf16.msra.mxu0 %v890
    %1115 = vmatpush.bf16.msra.mxu0 %v886
    %1116 = vmatpush.bf16.msra.mxu0 %v882
    %1117 = vmatpush.bf16.msra.mxu0 %v878
    %1118 = vmatpush.bf16.msra.mxu0 %v874
    %1119 = vmatmul.bf16.gmra.mxu0 %v317
    %v1120 = vpop.f32.mrf.mxu0
    %v1121 = vadd.f32 %v1108, %v1120
    %v1122 = vpop.f32.mrf.mxu0
    %1123 = vdwg.mxu0
    %1124 = vmatpush.bf16.msra.mxu0 %v934
    %1125 = vmatpush.bf16.msra.mxu0 %v930
    %1126 = vmatpush.bf16.msra.mxu0 %v926
    %1127 = vmatpush.bf16.msra.mxu0 %v922
    %1128 = vmatpush.bf16.msra.mxu0 %v918
    %1129 = vmatpush.bf16.msra.mxu0 %v914
    %1130 = vmatpush.bf16.msra.mxu0 %v910
    %1131 = vmatpush.bf16.msra.mxu0 %v906
    %1132 = vmatmul.bf16.gmra.mxu0 %v318
    %v1133 = vpop.f32.mrf.mxu0
    %v1134 = vadd.f32 %v1121, %v1133
    %v1135 = vpop.f32.mrf.mxu0
    %1136 = vdwg.mxu0
    %1137 = vmatpush.bf16.msra.mxu0 %v966
    %1138 = vmatpush.bf16.msra.mxu0 %v962
    %1139 = vmatpush.bf16.msra.mxu0 %v958
    %1140 = vmatpush.bf16.msra.mxu0 %v954
    %1141 = vmatpush.bf16.msra.mxu0 %v950
    %1142 = vmatpush.bf16.msra.mxu0 %v946
    %1143 = vmatpush.bf16.msra.mxu0 %v942
    %1144 = vmatpush.bf16.msra.mxu0 %v938
    %1145 = vmatmul.bf16.gmra.mxu0 %v319
    %v1146 = vpop.f32.mrf.mxu0
    %v1147 = vadd.f32 %v1134, %v1146
    %v1148 = vpop.f32.mrf.mxu0
    %1149 = vdwg.mxu0
    %1150 = vmatpush.bf16.msra.mxu0 %v871
    %1151 = vmatpush.bf16.msra.mxu0 %v867
    %1152 = vmatpush.bf16.msra.mxu0 %v863
    %1153 = vmatpush.bf16.msra.mxu0 %v859
    %1154 = vmatpush.bf16.msra.mxu0 %v855
    %1155 = vmatpush.bf16.msra.mxu0 %v851
    %1156 = vmatpush.bf16.msra.mxu0 %v847
    %1157 = vmatpush.bf16.msra.mxu0 %v843
    %1158 = vmatmul.bf16.gmra.mxu0 %v316
    %v1159 = vpop.f32.mrf.mxu0
    %v1160 = vadd.f32 %v451, %v1159
    %v1161 = vpop.f32.mrf.mxu0
    %1162 = vdwg.mxu0
    %1163 = vmatpush.bf16.msra.mxu0 %v903
    %1164 = vmatpush.bf16.msra.mxu0 %v899
    %1165 = vmatpush.bf16.msra.mxu0 %v895
    %1166 = vmatpush.bf16.msra.mxu0 %v891
    %1167 = vmatpush.bf16.msra.mxu0 %v887
    %1168 = vmatpush.bf16.msra.mxu0 %v883
    %1169 = vmatpush.bf16.msra.mxu0 %v879
    %1170 = vmatpush.bf16.msra.mxu0 %v875
    %1171 = vmatmul.bf16.gmra.mxu0 %v317
    %v1172 = vpop.f32.mrf.mxu0
    %v1173 = vadd.f32 %v1160, %v1172
    %v1174 = vpop.f32.mrf.mxu0
    %1175 = vdwg.mxu0
    %1176 = vmatpush.bf16.msra.mxu0 %v935
    %1177 = vmatpush.bf16.msra.mxu0 %v931
    %1178 = vmatpush.bf16.msra.mxu0 %v927
    %1179 = vmatpush.bf16.msra.mxu0 %v923
    %1180 = vmatpush.bf16.msra.mxu0 %v919
    %1181 = vmatpush.bf16.msra.mxu0 %v915
    %1182 = vmatpush.bf16.msra.mxu0 %v911
    %1183 = vmatpush.bf16.msra.mxu0 %v907
    %1184 = vmatmul.bf16.gmra.mxu0 %v318
    %v1185 = vpop.f32.mrf.mxu0
    %v1186 = vadd.f32 %v1173, %v1185
    %v1187 = vpop.f32.mrf.mxu0
    %1188 = vdwg.mxu0
    %1189 = vmatpush.bf16.msra.mxu0 %v967
    %1190 = vmatpush.bf16.msra.mxu0 %v963
    %1191 = vmatpush.bf16.msra.mxu0 %v959
    %1192 = vmatpush.bf16.msra.mxu0 %v955
    %1193 = vmatpush.bf16.msra.mxu0 %v951
    %1194 = vmatpush.bf16.msra.mxu0 %v947
    %1195 = vmatpush.bf16.msra.mxu0 %v943
    %1196 = vmatpush.bf16.msra.mxu0 %v939
    %1197 = vmatmul.bf16.gmra.mxu0 %v319
    %v1198 = vpop.f32.mrf.mxu0
    %v1199 = vadd.f32 %v1186, %v1198
    %v1200 = vpop.f32.mrf.mxu0
    %1201 = vdwg.mxu0
    %1202 = vmatpush.bf16.msra.mxu0 %v872
    %1203 = vmatpush.bf16.msra.mxu0 %v868
    %1204 = vmatpush.bf16.msra.mxu0 %v864
    %1205 = vmatpush.bf16.msra.mxu0 %v860
    %1206 = vmatpush.bf16.msra.mxu0 %v856
    %1207 = vmatpush.bf16.msra.mxu0 %v852
    %1208 = vmatpush.bf16.msra.mxu0 %v848
    %1209 = vmatpush.bf16.msra.mxu0 %v844
    %1210 = vmatmul.bf16.gmra.mxu0 %v316
    %v1211 = vpop.f32.mrf.mxu0
    %v1212 = vadd.f32 %v452, %v1211
    %v1213 = vpop.f32.mrf.mxu0
    %1214 = vdwg.mxu0
    %1215 = vmatpush.bf16.msra.mxu0 %v904
    %1216 = vmatpush.bf16.msra.mxu0 %v900
    %1217 = vmatpush.bf16.msra.mxu0 %v896
    %1218 = vmatpush.bf16.msra.mxu0 %v892
    %1219 = vmatpush.bf16.msra.mxu0 %v888
    %1220 = vmatpush.bf16.msra.mxu0 %v884
    %1221 = vmatpush.bf16.msra.mxu0 %v880
    %1222 = vmatpush.bf16.msra.mxu0 %v876
    %1223 = vmatmul.bf16.gmra.mxu0 %v317
    %v1224 = vpop.f32.mrf.mxu0
    %v1225 = vadd.f32 %v1212, %v1224
    %v1226 = vpop.f32.mrf.mxu0
    %1227 = vdwg.mxu0
    %1228 = vmatpush.bf16.msra.mxu0 %v936
    %1229 = vmatpush.bf16.msra.mxu0 %v932
    %1230 = vmatpush.bf16.msra.mxu0 %v928
    %1231 = vmatpush.bf16.msra.mxu0 %v924
    %1232 = vmatpush.bf16.msra.mxu0 %v920
    %1233 = vmatpush.bf16.msra.mxu0 %v916
    %1234 = vmatpush.bf16.msra.mxu0 %v912
    %1235 = vmatpush.bf16.msra.mxu0 %v908
    %1236 = vmatmul.bf16.gmra.mxu0 %v318
    %v1237 = vpop.f32.mrf.mxu0
    %v1238 = vadd.f32 %v1225, %v1237
    %v1239 = vpop.f32.mrf.mxu0
    %1240 = vdwg.mxu0
    %1241 = vmatpush.bf16.msra.mxu0 %v968
    %1242 = vmatpush.bf16.msra.mxu0 %v964
    %1243 = vmatpush.bf16.msra.mxu0 %v960
    %1244 = vmatpush.bf16.msra.mxu0 %v956
    %1245 = vmatpush.bf16.msra.mxu0 %v952
    %1246 = vmatpush.bf16.msra.mxu0 %v948
    %1247 = vmatpush.bf16.msra.mxu0 %v944
    %1248 = vmatpush.bf16.msra.mxu0 %v940
    %1249 = vmatmul.bf16.gmra.mxu0 %v319
    %v1250 = vpop.f32.mrf.mxu0
    %v1251 = vadd.f32 %v1238, %v1250
    %v1252 = vpop.f32.mrf.mxu0
    %1253 = vdwg.mxu0
    %1254 = vmatpush.bf16.msra.mxu0 %v873
    %1255 = vmatpush.bf16.msra.mxu0 %v869
    %1256 = vmatpush.bf16.msra.mxu0 %v865
    %1257 = vmatpush.bf16.msra.mxu0 %v861
    %1258 = vmatpush.bf16.msra.mxu0 %v857
    %1259 = vmatpush.bf16.msra.mxu0 %v853
    %1260 = vmatpush.bf16.msra.mxu0 %v849
    %1261 = vmatpush.bf16.msra.mxu0 %v845
    %1262 = vmatmul.bf16.gmra.mxu0 %v316
    %v1263 = vpop.f32.mrf.mxu0
    %v1264 = vadd.f32 %v453, %v1263
    %v1265 = vpop.f32.mrf.mxu0
    %1266 = vdwg.mxu0
    %1267 = vmatpush.bf16.msra.mxu0 %v905
    %1268 = vmatpush.bf16.msra.mxu0 %v901
    %1269 = vmatpush.bf16.msra.mxu0 %v897
    %1270 = vmatpush.bf16.msra.mxu0 %v893
    %1271 = vmatpush.bf16.msra.mxu0 %v889
    %1272 = vmatpush.bf16.msra.mxu0 %v885
    %1273 = vmatpush.bf16.msra.mxu0 %v881
    %1274 = vmatpush.bf16.msra.mxu0 %v877
    %1275 = vmatmul.bf16.gmra.mxu0 %v317
    %v1276 = vpop.f32.mrf.mxu0
    %v1277 = vadd.f32 %v1264, %v1276
    %v1278 = vpop.f32.mrf.mxu0
    %1279 = vdwg.mxu0
    %1280 = vmatpush.bf16.msra.mxu0 %v937
    %1281 = vmatpush.bf16.msra.mxu0 %v933
    %1282 = vmatpush.bf16.msra.mxu0 %v929
    %1283 = vmatpush.bf16.msra.mxu0 %v925
    %1284 = vmatpush.bf16.msra.mxu0 %v921
    %1285 = vmatpush.bf16.msra.mxu0 %v917
    %1286 = vmatpush.bf16.msra.mxu0 %v913
    %1287 = vmatpush.bf16.msra.mxu0 %v909
    %1288 = vmatmul.bf16.gmra.mxu0 %v318
    %v1289 = vpop.f32.mrf.mxu0
    %v1290 = vadd.f32 %v1277, %v1289
    %v1291 = vpop.f32.mrf.mxu0
    %1292 = vdwg.mxu0
    %1293 = vmatpush.bf16.msra.mxu0 %v969
    %1294 = vmatpush.bf16.msra.mxu0 %v965
    %1295 = vmatpush.bf16.msra.mxu0 %v961
    %1296 = vmatpush.bf16.msra.mxu0 %v957
    %1297 = vmatpush.bf16.msra.mxu0 %v953
    %1298 = vmatpush.bf16.msra.mxu0 %v949
    %1299 = vmatpush.bf16.msra.mxu0 %v945
    %1300 = vmatpush.bf16.msra.mxu0 %v941
    %1301 = vmatmul.bf16.gmra.mxu0 %v319
    %v1302 = vpop.f32.mrf.mxu0
    %v1303 = vadd.f32 %v1290, %v1302
    %v1304 = vpop.f32.mrf.mxu0
    %1305 = vdwg.mxu0
    %v1306 = vmax.f32 %v1147, 0.0
    %v1307 = vmax.f32 %v1199, 0.0
    %v1308 = vmax.f32 %v1251, 0.0
    %v1309 = vmax.f32 %v1303, 0.0
    %v1310 = vpack.c.bf16 %v1306, %v1306
    %v1311 = vpack.c.bf16 %v1307, %v1307
    %v1312 = vpack.c.bf16 %v1308, %v1308
    %v1313 = vpack.c.bf16 %v1309, %v1309
    %v1314 = vld [vmem:[%s7] sm:$0xf]
    %v1315 = vld [vmem:[%s7 + $0x4] sm:$0xf]
    %v1316 = vld [vmem:[%s7 + $0x8] sm:$0xf]
    %v1317 = vld [vmem:[%s7 + $0xc] sm:$0xf]
    %v1318 = vld [vmem:[%s7 + $0x10] sm:$0xf]
    %v1319 = vld [vmem:[%s7 + $0x14] sm:$0xf]
    %v1320 = vld [vmem:[%s7 + $0x18] sm:$0xf]
    %v1321 = vld [vmem:[%s7 + $0x1c] sm:$0xf]
    %v1322 = vld [vmem:[%s7 + $0x20] sm:$0xf]
    %v1323 = vld [vmem:[%s7 + $0x24] sm:$0xf]
    %v1324 = vld [vmem:[%s7 + $0x28] sm:$0xf]
    %v1325 = vld [vmem:[%s7 + $0x2c] sm:$0xf]
    %v1326 = vld [vmem:[%s7 + $0x30] sm:$0xf]
    %v1327 = vld [vmem:[%s7 + $0x34] sm:$0xf]
    %v1328 = vld [vmem:[%s7 + $0x38] sm:$0xf]
    %v1329 = vld [vmem:[%s7 + $0x3c] sm:$0xf]
    %v1330 = vld [vmem:[%s7 + $0x40] sm:$0xf]
    %v1331 = vld [vmem:[%s7 + $0x44] sm:$0xf]
    %v1332 = vld [vmem:[%s7 + $0x48] sm:$0xf]
    %v1333 = vld [vmem:[%s7 + $0x4c] sm:$0xf]
    %v1334 = vld [vmem:[%s7 + $0x50] sm:$0xf]
    %v1335 = vld [vmem:[%s7 + $0x54] sm:$0xf]
    %v1336 = vld [vmem:[%s7 + $0x58] sm:$0xf]
    %v1337 = vld [vmem:[%s7 + $0x5c] sm:$0xf]
    %v1338 = vld [vmem:[%s7 + $0x60] sm:$0xf]
    %v1339 = vld [vmem:[%s7 + $0x64] sm:$0xf]
    %v1340 = vld [vmem:[%s7 + $0x68] sm:$0xf]
    %v1341 = vld [vmem:[%s7 + $0x6c] sm:$0xf]
    %v1342 = vld [vmem:[%s7 + $0x70] sm:$0xf]
    %v1343 = vld [vmem:[%s7 + $0x74] sm:$0xf]
    %v1344 = vld [vmem:[%s7 + $0x78] sm:$0xf]
    %v1345 = vld [vmem:[%s7 + $0x7c] sm:$0xf]
    %v1346 = vld [vmem:[%s7 + $0x80] sm:$0xf]
    %v1347 = vld [vmem:[%s7 + $0x84] sm:$0xf]
    %v1348 = vld [vmem:[%s7 + $0x88] sm:$0xf]
    %v1349 = vld [vmem:[%s7 + $0x8c] sm:$0xf]
    %v1350 = vld [vmem:[%s7 + $0x90] sm:$0xf]
    %v1351 = vld [vmem:[%s7 + $0x94] sm:$0xf]
    %v1352 = vld [vmem:[%s7 + $0x98] sm:$0xf]
    %v1353 = vld [vmem:[%s7 + $0x9c] sm:$0xf]
    %v1354 = vld [vmem:[%s7 + $0xa0] sm:$0xf]
    %v1355 = vld [vmem:[%s7 + $0xa4] sm:$0xf]
    %v1356 = vld [vmem:[%s7 + $0xa8] sm:$0xf]
    %v1357 = vld [vmem:[%s7 + $0xac] sm:$0xf]
    %v1358 = vld [vmem:[%s7 + $0xb0] sm:$0xf]
    %v1359 = vld [vmem:[%s7 + $0xb4] sm:$0xf]
    %v1360 = vld [vmem:[%s7 + $0xb8] sm:$0xf]
    %v1361 = vld [vmem:[%s7 + $0xbc] sm:$0xf]
    %v1362 = vld [vmem:[%s7 + $0xc0] sm:$0xf]
    %v1363 = vld [vmem:[%s7 + $0xc4] sm:$0xf]
    %v1364 = vld [vmem:[%s7 + $0xc8] sm:$0xf]
    %v1365 = vld [vmem:[%s7 + $0xcc] sm:$0xf]
    %v1366 = vld [vmem:[%s7 + $0xd0] sm:$0xf]
    %v1367 = vld [vmem:[%s7 + $0xd4] sm:$0xf]
    %v1368 = vld [vmem:[%s7 + $0xd8] sm:$0xf]
    %v1369 = vld [vmem:[%s7 + $0xdc] sm:$0xf]
    %v1370 = vld [vmem:[%s7 + $0xe0] sm:$0xf]
    %v1371 = vld [vmem:[%s7 + $0xe4] sm:$0xf]
    %v1372 = vld [vmem:[%s7 + $0xe8] sm:$0xf]
    %v1373 = vld [vmem:[%s7 + $0xec] sm:$0xf]
    %v1374 = vld [vmem:[%s7 + $0xf0] sm:$0xf]
    %v1375 = vld [vmem:[%s7 + $0xf4] sm:$0xf]
    %v1376 = vld [vmem:[%s7 + $0xf8] sm:$0xf]
    %v1377 = vld [vmem:[%s7 + $0xfc] sm:$0xf]
    %v1378 = vld [vmem:[%s8] sm:$0x1]
    %v1380 = vperm.slane %v1378, 0
    %v1446 = vunpack.c.l.b16 %v1314
    %v1447 = vunpack.c.l.b16 %v1315
    %v1448 = vunpack.c.l.b16 %v1316
    %v1449 = vunpack.c.l.b16 %v1317
    %v1450 = vunpack.c.l.b16 %v1318
    %v1451 = vunpack.c.l.b16 %v1319
    %v1452 = vunpack.c.l.b16 %v1320
    %v1453 = vunpack.c.l.b16 %v1321
    %v1454 = vunpack.c.l.b16 %v1322
    %v1455 = vunpack.c.l.b16 %v1323
    %v1456 = vunpack.c.l.b16 %v1324
    %v1457 = vunpack.c.l.b16 %v1325
    %v1458 = vunpack.c.l.b16 %v1326
    %v1459 = vunpack.c.l.b16 %v1327
    %v1460 = vunpack.c.l.b16 %v1328
    %v1461 = vunpack.c.l.b16 %v1329
    %v1462 = vunpack.c.l.b16 %v1330
    %v1463 = vunpack.c.l.b16 %v1331
    %v1464 = vunpack.c.l.b16 %v1332
    %v1465 = vunpack.c.l.b16 %v1333
    %v1466 = vunpack.c.l.b16 %v1334
    %v1467 = vunpack.c.l.b16 %v1335
    %v1468 = vunpack.c.l.b16 %v1336
    %v1469 = vunpack.c.l.b16 %v1337
    %v1470 = vunpack.c.l.b16 %v1338
    %v1471 = vunpack.c.l.b16 %v1339
    %v1472 = vunpack.c.l.b16 %v1340
    %v1473 = vunpack.c.l.b16 %v1341
    %v1474 = vunpack.c.l.b16 %v1342
    %v1475 = vunpack.c.l.b16 %v1343
    %v1476 = vunpack.c.l.b16 %v1344
    %v1477 = vunpack.c.l.b16 %v1345
    %v1478 = vunpack.c.l.b16 %v1346
    %v1479 = vunpack.c.l.b16 %v1347
    %v1480 = vunpack.c.l.b16 %v1348
    %v1481 = vunpack.c.l.b16 %v1349
    %v1482 = vunpack.c.l.b16 %v1350
    %v1483 = vunpack.c.l.b16 %v1351
    %v1484 = vunpack.c.l.b16 %v1352
    %v1485 = vunpack.c.l.b16 %v1353
    %v1486 = vunpack.c.l.b16 %v1354
    %v1487 = vunpack.c.l.b16 %v1355
    %v1488 = vunpack.c.l.b16 %v1356
    %v1489 = vunpack.c.l.b16 %v1357
    %v1490 = vunpack.c.l.b16 %v1358
    %v1491 = vunpack.c.l.b16 %v1359
    %v1492 = vunpack.c.l.b16 %v1360
    %v1493 = vunpack.c.l.b16 %v1361
    %v1494 = vunpack.c.l.b16 %v1362
    %v1495 = vunpack.c.l.b16 %v1363
    %v1496 = vunpack.c.l.b16 %v1364
    %v1497 = vunpack.c.l.b16 %v1365
    %v1498 = vunpack.c.l.b16 %v1366
    %v1499 = vunpack.c.l.b16 %v1367
    %v1500 = vunpack.c.l.b16 %v1368
    %v1501 = vunpack.c.l.b16 %v1369
    %v1502 = vunpack.c.l.b16 %v1370
    %v1503 = vunpack.c.l.b16 %v1371
    %v1504 = vunpack.c.l.b16 %v1372
    %v1505 = vunpack.c.l.b16 %v1373
    %v1506 = vunpack.c.l.b16 %v1374
    %v1507 = vunpack.c.l.b16 %v1375
    %v1508 = vunpack.c.l.b16 %v1376
    %v1509 = vunpack.c.l.b16 %v1377
    %v1510 = vpack.c.b16 %v1447, %v1446
    %v1511 = vpack.c.b16 %v1449, %v1448
    %v1512 = vpack.c.b16 %v1451, %v1450
    %v1513 = vpack.c.b16 %v1453, %v1452
    %v1514 = vpack.c.b16 %v1455, %v1454
    %v1515 = vpack.c.b16 %v1457, %v1456
    %v1516 = vpack.c.b16 %v1459, %v1458
    %v1517 = vpack.c.b16 %v1461, %v1460
    %v1518 = vpack.c.b16 %v1463, %v1462
    %v1519 = vpack.c.b16 %v1465, %v1464
    %v1520 = vpack.c.b16 %v1467, %v1466
    %v1521 = vpack.c.b16 %v1469, %v1468
    %v1522 = vpack.c.b16 %v1471, %v1470
    %v1523 = vpack.c.b16 %v1473, %v1472
    %v1524 = vpack.c.b16 %v1475, %v1474
    %v1525 = vpack.c.b16 %v1477, %v1476
    %v1526 = vpack.c.b16 %v1479, %v1478
    %v1527 = vpack.c.b16 %v1481, %v1480
    %v1528 = vpack.c.b16 %v1483, %v1482
    %v1529 = vpack.c.b16 %v1485, %v1484
    %v1530 = vpack.c.b16 %v1487, %v1486
    %v1531 = vpack.c.b16 %v1489, %v1488
    %v1532 = vpack.c.b16 %v1491, %v1490
    %v1533 = vpack.c.b16 %v1493, %v1492
    %v1534 = vpack.c.b16 %v1495, %v1494
    %v1535 = vpack.c.b16 %v1497, %v1496
    %v1536 = vpack.c.b16 %v1499, %v1498
    %v1537 = vpack.c.b16 %v1501, %v1500
    %v1538 = vpack.c.b16 %v1503, %v1502
    %v1539 = vpack.c.b16 %v1505, %v1504
    %v1540 = vpack.c.b16 %v1507, %v1506
    %v1541 = vpack.c.b16 %v1509, %v1508
    %1574 = vmatpush.bf16.msra.mxu0 %v1517
    %1575 = vmatpush.bf16.msra.mxu0 %v1516
    %1576 = vmatpush.bf16.msra.mxu0 %v1515
    %1577 = vmatpush.bf16.msra.mxu0 %v1514
    %1578 = vmatpush.bf16.msra.mxu0 %v1513
    %1579 = vmatpush.bf16.msra.mxu0 %v1512
    %1580 = vmatpush.bf16.msra.mxu0 %v1511
    %1581 = vmatpush.bf16.msra.mxu0 %v1510
    %1582 = vmatmul.bf16.gmra.mxu0 %v1310
    %v1583 = vpop.f32.mrf.mxu0
    %v1584 = vadd.f32 %v1380, %v1583
    %v1585 = vpop.f32.mrf.mxu0
    %1586 = vdwg.mxu0
    %1587 = vmatpush.bf16.msra.mxu0 %v1525
    %1588 = vmatpush.bf16.msra.mxu0 %v1524
    %1589 = vmatpush.bf16.msra.mxu0 %v1523
    %1590 = vmatpush.bf16.msra.mxu0 %v1522
    %1591 = vmatpush.bf16.msra.mxu0 %v1521
    %1592 = vmatpush.bf16.msra.mxu0 %v1520
    %1593 = vmatpush.bf16.msra.mxu0 %v1519
    %1594 = vmatpush.bf16.msra.mxu0 %v1518
    %1595 = vmatmul.bf16.gmra.mxu0 %v1311
    %v1596 = vpop.f32.mrf.mxu0
    %v1597 = vadd.f32 %v1584, %v1596
    %v1598 = vpop.f32.mrf.mxu0
    %1599 = vdwg.mxu0
    %1600 = vmatpush.bf16.msra.mxu0 %v1533
    %1601 = vmatpush.bf16.msra.mxu0 %v1532
    %1602 = vmatpush.bf16.msra.mxu0 %v1531
    %1603 = vmatpush.bf16.msra.mxu0 %v1530
    %1604 = vmatpush.bf16.msra.mxu0 %v1529
    %1605 = vmatpush.bf16.msra.mxu0 %v1528
    %1606 = vmatpush.bf16.msra.mxu0 %v1527
    %1607 = vmatpush.bf16.msra.mxu0 %v1526
    %1608 = vmatmul.bf16.gmra.mxu0 %v1312
    %v1609 = vpop.f32.mrf.mxu0
    %v1610 = vadd.f32 %v1597, %v1609
    %v1611 = vpop.f32.mrf.mxu0
    %1612 = vdwg.mxu0
    %1613 = vmatpush.bf16.msra.mxu0 %v1541
    %1614 = vmatpush.bf16.msra.mxu0 %v1540
    %1615 = vmatpush.bf16.msra.mxu0 %v1539
    %1616 = vmatpush.bf16.msra.mxu0 %v1538
    %1617 = vmatpush.bf16.msra.mxu0 %v1537
    %1618 = vmatpush.bf16.msra.mxu0 %v1536
    %1619 = vmatpush.bf16.msra.mxu0 %v1535
    %1620 = vmatpush.bf16.msra.mxu0 %v1534
    %1621 = vmatmul.bf16.gmra.mxu0 %v1313
    %v1622 = vpop.f32.mrf.mxu0
    %v1623 = vadd.f32 %v1610, %v1622
    %v1624 = vpop.f32.mrf.mxu0
    %1625 = vdwg.mxu0
    %vm1626 = vcmask 9216
    %1627 = vst.msk [vmem:[#allocation4] sm:$0x3] %vm1626, %v1623
    %v1628 = vld [vmem:[%s9] sm:$0xff]
    %v1629 = vld [vmem:[%s9 + $0x8] sm:$0xff]
    %v1630 = vld [vmem:[%s9 + $0x10] sm:$0xff]
    %v1631 = vld [vmem:[%s9 + $0x18] sm:$0xff]
    %v1632 = vld [vmem:[%s9 + $0x20] sm:$0xff]
    %v1633 = vld [vmem:[%s9 + $0x28] sm:$0xff]
    %v1634 = vld [vmem:[%s9 + $0x30] sm:$0xff]
    %v1635 = vld [vmem:[%s9 + $0x38] sm:$0xff]
    %v1636 = vld [vmem:[%s9 + $0x40] sm:$0xff]
    %v1637 = vld [vmem:[%s9 + $0x48] sm:$0xff]
    %v1638 = vld [vmem:[%s9 + $0x50] sm:$0xff]
    %v1639 = vld [vmem:[%s9 + $0x58] sm:$0xff]
    %v1640 = vld [vmem:[%s9 + $0x60] sm:$0xff]
    %v1641 = vld [vmem:[%s9 + $0x68] sm:$0xff]
    %v1642 = vld [vmem:[%s9 + $0x70] sm:$0xff]
    %v1643 = vld [vmem:[%s9 + $0x78] sm:$0xff]
    %v1644 = vld [vmem:[%s9 + $0x80] sm:$0xff]
    %v1645 = vld [vmem:[%s9 + $0x88] sm:$0xff]
    %v1646 = vld [vmem:[%s9 + $0x90] sm:$0xff]
    %v1647 = vld [vmem:[%s9 + $0x98] sm:$0xff]
    %v1648 = vld [vmem:[%s9 + $0xa0] sm:$0xff]
    %v1649 = vld [vmem:[%s9 + $0xa8] sm:$0xff]
    %v1650 = vld [vmem:[%s9 + $0xb0] sm:$0xff]
    %v1651 = vld [vmem:[%s9 + $0xb8] sm:$0xff]
    %v1652 = vld [vmem:[%s9 + $0xc0] sm:$0xff]
    %v1653 = vld [vmem:[%s9 + $0xc8] sm:$0xff]
    %v1654 = vld [vmem:[%s9 + $0xd0] sm:$0xff]
    %v1655 = vld [vmem:[%s9 + $0xd8] sm:$0xff]
    %v1656 = vld [vmem:[%s9 + $0xe0] sm:$0xff]
    %v1657 = vld [vmem:[%s9 + $0xe8] sm:$0xff]
    %v1658 = vld [vmem:[%s9 + $0xf0] sm:$0xff]
    %v1659 = vld [vmem:[%s9 + $0xf8] sm:$0xff]
    %v1660 = vld [vmem:[%s9 + $0x100] sm:$0xff]
    %v1661 = vld [vmem:[%s9 + $0x108] sm:$0xff]
    %v1662 = vld [vmem:[%s9 + $0x110] sm:$0xff]
    %v1663 = vld [vmem:[%s9 + $0x118] sm:$0xff]
    %v1664 = vld [vmem:[%s9 + $0x120] sm:$0xff]
    %v1665 = vld [vmem:[%s9 + $0x128] sm:$0xff]
    %v1666 = vld [vmem:[%s9 + $0x130] sm:$0xff]
    %v1667 = vld [vmem:[%s9 + $0x138] sm:$0xff]
    %v1668 = vld [vmem:[%s9 + $0x140] sm:$0xff]
    %v1669 = vld [vmem:[%s9 + $0x148] sm:$0xff]
    %v1670 = vld [vmem:[%s9 + $0x150] sm:$0xff]
    %v1671 = vld [vmem:[%s9 + $0x158] sm:$0xff]
    %v1672 = vld [vmem:[%s9 + $0x160] sm:$0xff]
    %v1673 = vld [vmem:[%s9 + $0x168] sm:$0xff]
    %v1674 = vld [vmem:[%s9 + $0x170] sm:$0xff]
    %v1675 = vld [vmem:[%s9 + $0x178] sm:$0xff]
    %v1676 = vld [vmem:[%s9 + $0x180] sm:$0xff]
    %v1677 = vld [vmem:[%s9 + $0x188] sm:$0xff]
    %v1678 = vld [vmem:[%s9 + $0x190] sm:$0xff]
    %v1679 = vld [vmem:[%s9 + $0x198] sm:$0xff]
    %v1680 = vld [vmem:[%s9 + $0x1a0] sm:$0xff]
    %v1681 = vld [vmem:[%s9 + $0x1a8] sm:$0xff]
    %v1682 = vld [vmem:[%s9 + $0x1b0] sm:$0xff]
    %v1683 = vld [vmem:[%s9 + $0x1b8] sm:$0xff]
    %v1684 = vld [vmem:[%s9 + $0x1c0] sm:$0xff]
    %v1685 = vld [vmem:[%s9 + $0x1c8] sm:$0xff]
    %v1686 = vld [vmem:[%s9 + $0x1d0] sm:$0xff]
    %v1687 = vld [vmem:[%s9 + $0x1d8] sm:$0xff]
    %v1688 = vld [vmem:[%s9 + $0x1e0] sm:$0xff]
    %v1689 = vld [vmem:[%s9 + $0x1e8] sm:$0xff]
    %v1690 = vld [vmem:[%s9 + $0x1f0] sm:$0xff]
    %v1691 = vld [vmem:[%s9 + $0x1f8] sm:$0xff]
    %v1692 = vld [vmem:[%s9 + $0x200] sm:$0xff]
    %v1693 = vld [vmem:[%s9 + $0x208] sm:$0xff]
    %v1694 = vld [vmem:[%s9 + $0x210] sm:$0xff]
    %v1695 = vld [vmem:[%s9 + $0x218] sm:$0xff]
    %v1696 = vld [vmem:[%s9 + $0x220] sm:$0xff]
    %v1697 = vld [vmem:[%s9 + $0x228] sm:$0xff]
    %v1698 = vld [vmem:[%s9 + $0x230] sm:$0xff]
    %v1699 = vld [vmem:[%s9 + $0x238] sm:$0xff]
    %v1700 = vld [vmem:[%s9 + $0x240] sm:$0xff]
    %v1701 = vld [vmem:[%s9 + $0x248] sm:$0xff]
    %v1702 = vld [vmem:[%s9 + $0x250] sm:$0xff]
    %v1703 = vld [vmem:[%s9 + $0x258] sm:$0xff]
    %v1704 = vld [vmem:[%s9 + $0x260] sm:$0xff]
    %v1705 = vld [vmem:[%s9 + $0x268] sm:$0xff]
    %v1706 = vld [vmem:[%s9 + $0x270] sm:$0xff]
    %v1707 = vld [vmem:[%s9 + $0x278] sm:$0xff]
    %v1708 = vld [vmem:[%s9 + $0x280] sm:$0xff]
    %v1709 = vld [vmem:[%s9 + $0x288] sm:$0xff]
    %v1710 = vld [vmem:[%s9 + $0x290] sm:$0xff]
    %v1711 = vld [vmem:[%s9 + $0x298] sm:$0xff]
    %v1712 = vld [vmem:[%s9 + $0x2a0] sm:$0xff]
    %v1713 = vld [vmem:[%s9 + $0x2a8] sm:$0xff]
    %v1714 = vld [vmem:[%s9 + $0x2b0] sm:$0xff]
    %v1715 = vld [vmem:[%s9 + $0x2b8] sm:$0xff]
    %v1716 = vld [vmem:[%s9 + $0x2c0] sm:$0xff]
    %v1717 = vld [vmem:[%s9 + $0x2c8] sm:$0xff]
    %v1718 = vld [vmem:[%s9 + $0x2d0] sm:$0xff]
    %v1719 = vld [vmem:[%s9 + $0x2d8] sm:$0xff]
    %v1720 = vld [vmem:[%s9 + $0x2e0] sm:$0xff]
    %v1721 = vld [vmem:[%s9 + $0x2e8] sm:$0xff]
    %v1722 = vld [vmem:[%s9 + $0x2f0] sm:$0xff]
    %v1723 = vld [vmem:[%s9 + $0x2f8] sm:$0xff]
    %v1724 = vld [vmem:[%s9 + $0x300] sm:$0xff]
    %v1725 = vld [vmem:[%s9 + $0x308] sm:$0xff]
    %v1726 = vld [vmem:[%s9 + $0x310] sm:$0xff]
    %v1727 = vld [vmem:[%s9 + $0x318] sm:$0xff]
    %v1728 = vld [vmem:[%s9 + $0x320] sm:$0xff]
    %v1729 = vld [vmem:[%s9 + $0x328] sm:$0xff]
    %v1730 = vld [vmem:[%s9 + $0x330] sm:$0xff]
    %v1731 = vld [vmem:[%s9 + $0x338] sm:$0xff]
    %v1732 = vld [vmem:[%s9 + $0x340] sm:$0xff]
    %v1733 = vld [vmem:[%s9 + $0x348] sm:$0xff]
    %v1734 = vld [vmem:[%s9 + $0x350] sm:$0xff]
    %v1735 = vld [vmem:[%s9 + $0x358] sm:$0xff]
    %v1736 = vld [vmem:[%s9 + $0x360] sm:$0xff]
    %v1737 = vld [vmem:[%s9 + $0x368] sm:$0xff]
    %v1738 = vld [vmem:[%s9 + $0x370] sm:$0xff]
    %v1739 = vld [vmem:[%s9 + $0x378] sm:$0xff]
    %v1740 = vld [vmem:[%s9 + $0x380] sm:$0xff]
    %v1741 = vld [vmem:[%s9 + $0x388] sm:$0xff]
    %v1742 = vld [vmem:[%s9 + $0x390] sm:$0xff]
    %v1743 = vld [vmem:[%s9 + $0x398] sm:$0xff]
    %v1744 = vld [vmem:[%s9 + $0x3a0] sm:$0xff]
    %v1745 = vld [vmem:[%s9 + $0x3a8] sm:$0xff]
    %v1746 = vld [vmem:[%s9 + $0x3b0] sm:$0xff]
    %v1747 = vld [vmem:[%s9 + $0x3b8] sm:$0xff]
    %v1748 = vld [vmem:[%s9 + $0x3c0] sm:$0xff]
    %v1749 = vld [vmem:[%s9 + $0x3c8] sm:$0xff]
    %v1750 = vld [vmem:[%s9 + $0x3d0] sm:$0xff]
    %v1751 = vld [vmem:[%s9 + $0x3d8] sm:$0xff]
    %v1752 = vld [vmem:[%s9 + $0x3e0] sm:$0xff]
    %v1753 = vld [vmem:[%s9 + $0x3e8] sm:$0xff]
    %v1754 = vld [vmem:[%s9 + $0x3f0] sm:$0xff]
    %v1755 = vld [vmem:[%s9 + $0x3f8] sm:$0xff]
    %v1756 = vld [vmem:[%s10] sm:$0xf]
    %v1758 = vperm.slane %v1756, 0
    %v1759 = vperm.slane %v1756, 1
    %v1760 = vperm.slane %v1756, 2
    %v1761 = vperm.slane %v1756, 3
    %v1894 = vunpack.c.l.b16 %v1628
    %v1895 = vunpack.c.h.b16 %v1628
    %v1896 = vunpack.c.l.b16 %v1629
    %v1897 = vunpack.c.h.b16 %v1629
    %v1898 = vunpack.c.l.b16 %v1630
    %v1899 = vunpack.c.h.b16 %v1630
    %v1900 = vunpack.c.l.b16 %v1631
    %v1901 = vunpack.c.h.b16 %v1631
    %v1902 = vunpack.c.l.b16 %v1632
    %v1903 = vunpack.c.h.b16 %v1632
    %v1904 = vunpack.c.l.b16 %v1633
    %v1905 = vunpack.c.h.b16 %v1633
    %v1906 = vunpack.c.l.b16 %v1634
    %v1907 = vunpack.c.h.b16 %v1634
    %v1908 = vunpack.c.l.b16 %v1635
    %v1909 = vunpack.c.h.b16 %v1635
    %v1910 = vunpack.c.l.b16 %v1636
    %v1911 = vunpack.c.h.b16 %v1636
    %v1912 = vunpack.c.l.b16 %v1637
    %v1913 = vunpack.c.h.b16 %v1637
    %v1914 = vunpack.c.l.b16 %v1638
    %v1915 = vunpack.c.h.b16 %v1638
    %v1916 = vunpack.c.l.b16 %v1639
    %v1917 = vunpack.c.h.b16 %v1639
    %v1918 = vunpack.c.l.b16 %v1640
    %v1919 = vunpack.c.h.b16 %v1640
    %v1920 = vunpack.c.l.b16 %v1641
    %v1921 = vunpack.c.h.b16 %v1641
    %v1922 = vunpack.c.l.b16 %v1642
    %v1923 = vunpack.c.h.b16 %v1642
    %v1924 = vunpack.c.l.b16 %v1643
    %v1925 = vunpack.c.h.b16 %v1643
    %v1926 = vunpack.c.l.b16 %v1644
    %v1927 = vunpack.c.h.b16 %v1644
    %v1928 = vunpack.c.l.b16 %v1645
    %v1929 = vunpack.c.h.b16 %v1645
    %v1930 = vunpack.c.l.b16 %v1646
    %v1931 = vunpack.c.h.b16 %v1646
    %v1932 = vunpack.c.l.b16 %v1647
    %v1933 = vunpack.c.h.b16 %v1647
    %v1934 = vunpack.c.l.b16 %v1648
    %v1935 = vunpack.c.h.b16 %v1648
    %v1936 = vunpack.c.l.b16 %v1649
    %v1937 = vunpack.c.h.b16 %v1649
    %v1938 = vunpack.c.l.b16 %v1650
    %v1939 = vunpack.c.h.b16 %v1650
    %v1940 = vunpack.c.l.b16 %v1651
    %v1941 = vunpack.c.h.b16 %v1651
    %v1942 = vunpack.c.l.b16 %v1652
    %v1943 = vunpack.c.h.b16 %v1652
    %v1944 = vunpack.c.l.b16 %v1653
    %v1945 = vunpack.c.h.b16 %v1653
    %v1946 = vunpack.c.l.b16 %v1654
    %v1947 = vunpack.c.h.b16 %v1654
    %v1948 = vunpack.c.l.b16 %v1655
    %v1949 = vunpack.c.h.b16 %v1655
    %v1950 = vunpack.c.l.b16 %v1656
    %v1951 = vunpack.c.h.b16 %v1656
    %v1952 = vunpack.c.l.b16 %v1657
    %v1953 = vunpack.c.h.b16 %v1657
    %v1954 = vunpack.c.l.b16 %v1658
    %v1955 = vunpack.c.h.b16 %v1658
    %v1956 = vunpack.c.l.b16 %v1659
    %v1957 = vunpack.c.h.b16 %v1659
    %v1958 = vunpack.c.l.b16 %v1660
    %v1959 = vunpack.c.h.b16 %v1660
    %v1960 = vunpack.c.l.b16 %v1661
    %v1961 = vunpack.c.h.b16 %v1661
    %v1962 = vunpack.c.l.b16 %v1662
    %v1963 = vunpack.c.h.b16 %v1662
    %v1964 = vunpack.c.l.b16 %v1663
    %v1965 = vunpack.c.h.b16 %v1663
    %v1966 = vunpack.c.l.b16 %v1664
    %v1967 = vunpack.c.h.b16 %v1664
    %v1968 = vunpack.c.l.b16 %v1665
    %v1969 = vunpack.c.h.b16 %v1665
    %v1970 = vunpack.c.l.b16 %v1666
    %v1971 = vunpack.c.h.b16 %v1666
    %v1972 = vunpack.c.l.b16 %v1667
    %v1973 = vunpack.c.h.b16 %v1667
    %v1974 = vunpack.c.l.b16 %v1668
    %v1975 = vunpack.c.h.b16 %v1668
    %v1976 = vunpack.c.l.b16 %v1669
    %v1977 = vunpack.c.h.b16 %v1669
    %v1978 = vunpack.c.l.b16 %v1670
    %v1979 = vunpack.c.h.b16 %v1670
    %v1980 = vunpack.c.l.b16 %v1671
    %v1981 = vunpack.c.h.b16 %v1671
    %v1982 = vunpack.c.l.b16 %v1672
    %v1983 = vunpack.c.h.b16 %v1672
    %v1984 = vunpack.c.l.b16 %v1673
    %v1985 = vunpack.c.h.b16 %v1673
    %v1986 = vunpack.c.l.b16 %v1674
    %v1987 = vunpack.c.h.b16 %v1674
    %v1988 = vunpack.c.l.b16 %v1675
    %v1989 = vunpack.c.h.b16 %v1675
    %v1990 = vunpack.c.l.b16 %v1676
    %v1991 = vunpack.c.h.b16 %v1676
    %v1992 = vunpack.c.l.b16 %v1677
    %v1993 = vunpack.c.h.b16 %v1677
    %v1994 = vunpack.c.l.b16 %v1678
    %v1995 = vunpack.c.h.b16 %v1678
    %v1996 = vunpack.c.l.b16 %v1679
    %v1997 = vunpack.c.h.b16 %v1679
    %v1998 = vunpack.c.l.b16 %v1680
    %v1999 = vunpack.c.h.b16 %v1680
    %v2000 = vunpack.c.l.b16 %v1681
    %v2001 = vunpack.c.h.b16 %v1681
    %v2002 = vunpack.c.l.b16 %v1682
    %v2003 = vunpack.c.h.b16 %v1682
    %v2004 = vunpack.c.l.b16 %v1683
    %v2005 = vunpack.c.h.b16 %v1683
    %v2006 = vunpack.c.l.b16 %v1684
    %v2007 = vunpack.c.h.b16 %v1684
    %v2008 = vunpack.c.l.b16 %v1685
    %v2009 = vunpack.c.h.b16 %v1685
    %v2010 = vunpack.c.l.b16 %v1686
    %v2011 = vunpack.c.h.b16 %v1686
    %v2012 = vunpack.c.l.b16 %v1687
    %v2013 = vunpack.c.h.b16 %v1687
    %v2014 = vunpack.c.l.b16 %v1688
    %v2015 = vunpack.c.h.b16 %v1688
    %v2016 = vunpack.c.l.b16 %v1689
    %v2017 = vunpack.c.h.b16 %v1689
    %v2018 = vunpack.c.l.b16 %v1690
    %v2019 = vunpack.c.h.b16 %v1690
    %v2020 = vunpack.c.l.b16 %v1691
    %v2021 = vunpack.c.h.b16 %v1691
    %v2022 = vunpack.c.l.b16 %v1692
    %v2023 = vunpack.c.h.b16 %v1692
    %v2024 = vunpack.c.l.b16 %v1693
    %v2025 = vunpack.c.h.b16 %v1693
    %v2026 = vunpack.c.l.b16 %v1694
    %v2027 = vunpack.c.h.b16 %v1694
    %v2028 = vunpack.c.l.b16 %v1695
    %v2029 = vunpack.c.h.b16 %v1695
    %v2030 = vunpack.c.l.b16 %v1696
    %v2031 = vunpack.c.h.b16 %v1696
    %v2032 = vunpack.c.l.b16 %v1697
    %v2033 = vunpack.c.h.b16 %v1697
    %v2034 = vunpack.c.l.b16 %v1698
    %v2035 = vunpack.c.h.b16 %v1698
    %v2036 = vunpack.c.l.b16 %v1699
    %v2037 = vunpack.c.h.b16 %v1699
    %v2038 = vunpack.c.l.b16 %v1700
    %v2039 = vunpack.c.h.b16 %v1700
    %v2040 = vunpack.c.l.b16 %v1701
    %v2041 = vunpack.c.h.b16 %v1701
    %v2042 = vunpack.c.l.b16 %v1702
    %v2043 = vunpack.c.h.b16 %v1702
    %v2044 = vunpack.c.l.b16 %v1703
    %v2045 = vunpack.c.h.b16 %v1703
    %v2046 = vunpack.c.l.b16 %v1704
    %v2047 = vunpack.c.h.b16 %v1704
    %v2048 = vunpack.c.l.b16 %v1705
    %v2049 = vunpack.c.h.b16 %v1705
    %v2050 = vunpack.c.l.b16 %v1706
    %v2051 = vunpack.c.h.b16 %v1706
    %v2052 = vunpack.c.l.b16 %v1707
    %v2053 = vunpack.c.h.b16 %v1707
    %v2054 = vunpack.c.l.b16 %v1708
    %v2055 = vunpack.c.h.b16 %v1708
    %v2056 = vunpack.c.l.b16 %v1709
    %v2057 = vunpack.c.h.b16 %v1709
    %v2058 = vunpack.c.l.b16 %v1710
    %v2059 = vunpack.c.h.b16 %v1710
    %v2060 = vunpack.c.l.b16 %v1711
    %v2061 = vunpack.c.h.b16 %v1711
    %v2062 = vunpack.c.l.b16 %v1712
    %v2063 = vunpack.c.h.b16 %v1712
    %v2064 = vunpack.c.l.b16 %v1713
    %v2065 = vunpack.c.h.b16 %v1713
    %v2066 = vunpack.c.l.b16 %v1714
    %v2067 = vunpack.c.h.b16 %v1714
    %v2068 = vunpack.c.l.b16 %v1715
    %v2069 = vunpack.c.h.b16 %v1715
    %v2070 = vunpack.c.l.b16 %v1716
    %v2071 = vunpack.c.h.b16 %v1716
    %v2072 = vunpack.c.l.b16 %v1717
    %v2073 = vunpack.c.h.b16 %v1717
    %v2074 = vunpack.c.l.b16 %v1718
    %v2075 = vunpack.c.h.b16 %v1718
    %v2076 = vunpack.c.l.b16 %v1719
    %v2077 = vunpack.c.h.b16 %v1719
    %v2078 = vunpack.c.l.b16 %v1720
    %v2079 = vunpack.c.h.b16 %v1720
    %v2080 = vunpack.c.l.b16 %v1721
    %v2081 = vunpack.c.h.b16 %v1721
    %v2082 = vunpack.c.l.b16 %v1722
    %v2083 = vunpack.c.h.b16 %v1722
    %v2084 = vunpack.c.l.b16 %v1723
    %v2085 = vunpack.c.h.b16 %v1723
    %v2086 = vunpack.c.l.b16 %v1724
    %v2087 = vunpack.c.h.b16 %v1724
    %v2088 = vunpack.c.l.b16 %v1725
    %v2089 = vunpack.c.h.b16 %v1725
    %v2090 = vunpack.c.l.b16 %v1726
    %v2091 = vunpack.c.h.b16 %v1726
    %v2092 = vunpack.c.l.b16 %v1727
    %v2093 = vunpack.c.h.b16 %v1727
    %v2094 = vunpack.c.l.b16 %v1728
    %v2095 = vunpack.c.h.b16 %v1728
    %v2096 = vunpack.c.l.b16 %v1729
    %v2097 = vunpack.c.h.b16 %v1729
    %v2098 = vunpack.c.l.b16 %v1730
    %v2099 = vunpack.c.h.b16 %v1730
    %v2100 = vunpack.c.l.b16 %v1731
    %v2101 = vunpack.c.h.b16 %v1731
    %v2102 = vunpack.c.l.b16 %v1732
    %v2103 = vunpack.c.h.b16 %v1732
    %v2104 = vunpack.c.l.b16 %v1733
    %v2105 = vunpack.c.h.b16 %v1733
    %v2106 = vunpack.c.l.b16 %v1734
    %v2107 = vunpack.c.h.b16 %v1734
    %v2108 = vunpack.c.l.b16 %v1735
    %v2109 = vunpack.c.h.b16 %v1735
    %v2110 = vunpack.c.l.b16 %v1736
    %v2111 = vunpack.c.h.b16 %v1736
    %v2112 = vunpack.c.l.b16 %v1737
    %v2113 = vunpack.c.h.b16 %v1737
    %v2114 = vunpack.c.l.b16 %v1738
    %v2115 = vunpack.c.h.b16 %v1738
    %v2116 = vunpack.c.l.b16 %v1739
    %v2117 = vunpack.c.h.b16 %v1739
    %v2118 = vunpack.c.l.b16 %v1740
    %v2119 = vunpack.c.h.b16 %v1740
    %v2120 = vunpack.c.l.b16 %v1741
    %v2121 = vunpack.c.h.b16 %v1741
    %v2122 = vunpack.c.l.b16 %v1742
    %v2123 = vunpack.c.h.b16 %v1742
    %v2124 = vunpack.c.l.b16 %v1743
    %v2125 = vunpack.c.h.b16 %v1743
    %v2126 = vunpack.c.l.b16 %v1744
    %v2127 = vunpack.c.h.b16 %v1744
    %v2128 = vunpack.c.l.b16 %v1745
    %v2129 = vunpack.c.h.b16 %v1745
    %v2130 = vunpack.c.l.b16 %v1746
    %v2131 = vunpack.c.h.b16 %v1746
    %v2132 = vunpack.c.l.b16 %v1747
    %v2133 = vunpack.c.h.b16 %v1747
    %v2134 = vunpack.c.l.b16 %v1748
    %v2135 = vunpack.c.h.b16 %v1748
    %v2136 = vunpack.c.l.b16 %v1749
    %v2137 = vunpack.c.h.b16 %v1749
    %v2138 = vunpack.c.l.b16 %v1750
    %v2139 = vunpack.c.h.b16 %v1750
    %v2140 = vunpack.c.l.b16 %v1751
    %v2141 = vunpack.c.h.b16 %v1751
    %v2142 = vunpack.c.l.b16 %v1752
    %v2143 = vunpack.c.h.b16 %v1752
    %v2144 = vunpack.c.l.b16 %v1753
    %v2145 = vunpack.c.h.b16 %v1753
    %v2146 = vunpack.c.l.b16 %v1754
    %v2147 = vunpack.c.h.b16 %v1754
    %v2148 = vunpack.c.l.b16 %v1755
    %v2149 = vunpack.c.h.b16 %v1755
    %v2150 = vpack.c.b16 %v1898, %v1894
    %v2151 = vpack.c.b16 %v1899, %v1895
    %v2152 = vpack.c.b16 %v1900, %v1896
    %v2153 = vpack.c.b16 %v1901, %v1897
    %v2154 = vpack.c.b16 %v1906, %v1902
    %v2155 = vpack.c.b16 %v1907, %v1903
    %v2156 = vpack.c.b16 %v1908, %v1904
    %v2157 = vpack.c.b16 %v1909, %v1905
    %v2158 = vpack.c.b16 %v1914, %v1910
    %v2159 = vpack.c.b16 %v1915, %v1911
    %v2160 = vpack.c.b16 %v1916, %v1912
    %v2161 = vpack.c.b16 %v1917, %v1913
    %v2162 = vpack.c.b16 %v1922, %v1918
    %v2163 = vpack.c.b16 %v1923, %v1919
    %v2164 = vpack.c.b16 %v1924, %v1920
    %v2165 = vpack.c.b16 %v1925, %v1921
    %v2166 = vpack.c.b16 %v1930, %v1926
    %v2167 = vpack.c.b16 %v1931, %v1927
    %v2168 = vpack.c.b16 %v1932, %v1928
    %v2169 = vpack.c.b16 %v1933, %v1929
    %v2170 = vpack.c.b16 %v1938, %v1934
    %v2171 = vpack.c.b16 %v1939, %v1935
    %v2172 = vpack.c.b16 %v1940, %v1936
    %v2173 = vpack.c.b16 %v1941, %v1937
    %v2174 = vpack.c.b16 %v1946, %v1942
    %v2175 = vpack.c.b16 %v1947, %v1943
    %v2176 = vpack.c.b16 %v1948, %v1944
    %v2177 = vpack.c.b16 %v1949, %v1945
    %v2178 = vpack.c.b16 %v1954, %v1950
    %v2179 = vpack.c.b16 %v1955, %v1951
    %v2180 = vpack.c.b16 %v1956, %v1952
    %v2181 = vpack.c.b16 %v1957, %v1953
    %v2182 = vpack.c.b16 %v1962, %v1958
    %v2183 = vpack.c.b16 %v1963, %v1959
    %v2184 = vpack.c.b16 %v1964, %v1960
    %v2185 = vpack.c.b16 %v1965, %v1961
    %v2186 = vpack.c.b16 %v1970, %v1966
    %v2187 = vpack.c.b16 %v1971, %v1967
    %v2188 = vpack.c.b16 %v1972, %v1968
    %v2189 = vpack.c.b16 %v1973, %v1969
    %v2190 = vpack.c.b16 %v1978, %v1974
    %v2191 = vpack.c.b16 %v1979, %v1975
    %v2192 = vpack.c.b16 %v1980, %v1976
    %v2193 = vpack.c.b16 %v1981, %v1977
    %v2194 = vpack.c.b16 %v1986, %v1982
    %v2195 = vpack.c.b16 %v1987, %v1983
    %v2196 = vpack.c.b16 %v1988, %v1984
    %v2197 = vpack.c.b16 %v1989, %v1985
    %v2198 = vpack.c.b16 %v1994, %v1990
    %v2199 = vpack.c.b16 %v1995, %v1991
    %v2200 = vpack.c.b16 %v1996, %v1992
    %v2201 = vpack.c.b16 %v1997, %v1993
    %v2202 = vpack.c.b16 %v2002, %v1998
    %v2203 = vpack.c.b16 %v2003, %v1999
    %v2204 = vpack.c.b16 %v2004, %v2000
    %v2205 = vpack.c.b16 %v2005, %v2001
    %v2206 = vpack.c.b16 %v2010, %v2006
    %v2207 = vpack.c.b16 %v2011, %v2007
    %v2208 = vpack.c.b16 %v2012, %v2008
    %v2209 = vpack.c.b16 %v2013, %v2009
    %v2210 = vpack.c.b16 %v2018, %v2014
    %v2211 = vpack.c.b16 %v2019, %v2015
    %v2212 = vpack.c.b16 %v2020, %v2016
    %v2213 = vpack.c.b16 %v2021, %v2017
    %v2214 = vpack.c.b16 %v2026, %v2022
    %v2215 = vpack.c.b16 %v2027, %v2023
    %v2216 = vpack.c.b16 %v2028, %v2024
    %v2217 = vpack.c.b16 %v2029, %v2025
    %v2218 = vpack.c.b16 %v2034, %v2030
    %v2219 = vpack.c.b16 %v2035, %v2031
    %v2220 = vpack.c.b16 %v2036, %v2032
    %v2221 = vpack.c.b16 %v2037, %v2033
    %v2222 = vpack.c.b16 %v2042, %v2038
    %v2223 = vpack.c.b16 %v2043, %v2039
    %v2224 = vpack.c.b16 %v2044, %v2040
    %v2225 = vpack.c.b16 %v2045, %v2041
    %v2226 = vpack.c.b16 %v2050, %v2046
    %v2227 = vpack.c.b16 %v2051, %v2047
    %v2228 = vpack.c.b16 %v2052, %v2048
    %v2229 = vpack.c.b16 %v2053, %v2049
    %v2230 = vpack.c.b16 %v2058, %v2054
    %v2231 = vpack.c.b16 %v2059, %v2055
    %v2232 = vpack.c.b16 %v2060, %v2056
    %v2233 = vpack.c.b16 %v2061, %v2057
    %v2234 = vpack.c.b16 %v2066, %v2062
    %v2235 = vpack.c.b16 %v2067, %v2063
    %v2236 = vpack.c.b16 %v2068, %v2064
    %v2237 = vpack.c.b16 %v2069, %v2065
    %v2238 = vpack.c.b16 %v2074, %v2070
    %v2239 = vpack.c.b16 %v2075, %v2071
    %v2240 = vpack.c.b16 %v2076, %v2072
    %v2241 = vpack.c.b16 %v2077, %v2073
    %v2242 = vpack.c.b16 %v2082, %v2078
    %v2243 = vpack.c.b16 %v2083, %v2079
    %v2244 = vpack.c.b16 %v2084, %v2080
    %v2245 = vpack.c.b16 %v2085, %v2081
    %v2246 = vpack.c.b16 %v2090, %v2086
    %v2247 = vpack.c.b16 %v2091, %v2087
    %v2248 = vpack.c.b16 %v2092, %v2088
    %v2249 = vpack.c.b16 %v2093, %v2089
    %v2250 = vpack.c.b16 %v2098, %v2094
    %v2251 = vpack.c.b16 %v2099, %v2095
    %v2252 = vpack.c.b16 %v2100, %v2096
    %v2253 = vpack.c.b16 %v2101, %v2097
    %v2254 = vpack.c.b16 %v2106, %v2102
    %v2255 = vpack.c.b16 %v2107, %v2103
    %v2256 = vpack.c.b16 %v2108, %v2104
    %v2257 = vpack.c.b16 %v2109, %v2105
    %v2258 = vpack.c.b16 %v2114, %v2110
    %v2259 = vpack.c.b16 %v2115, %v2111
    %v2260 = vpack.c.b16 %v2116, %v2112
    %v2261 = vpack.c.b16 %v2117, %v2113
    %v2262 = vpack.c.b16 %v2122, %v2118
    %v2263 = vpack.c.b16 %v2123, %v2119
    %v2264 = vpack.c.b16 %v2124, %v2120
    %v2265 = vpack.c.b16 %v2125, %v2121
    %v2266 = vpack.c.b16 %v2130, %v2126
    %v2267 = vpack.c.b16 %v2131, %v2127
    %v2268 = vpack.c.b16 %v2132, %v2128
    %v2269 = vpack.c.b16 %v2133, %v2129
    %v2270 = vpack.c.b16 %v2138, %v2134
    %v2271 = vpack.c.b16 %v2139, %v2135
    %v2272 = vpack.c.b16 %v2140, %v2136
    %v2273 = vpack.c.b16 %v2141, %v2137
    %v2274 = vpack.c.b16 %v2146, %v2142
    %v2275 = vpack.c.b16 %v2147, %v2143
    %v2276 = vpack.c.b16 %v2148, %v2144
    %v2277 = vpack.c.b16 %v2149, %v2145
    %2406 = vmatpush.bf16.msra.mxu0 %v2178
    %2407 = vmatpush.bf16.msra.mxu0 %v2174
    %2408 = vmatpush.bf16.msra.mxu0 %v2170
    %2409 = vmatpush.bf16.msra.mxu0 %v2166
    %2410 = vmatpush.bf16.msra.mxu0 %v2162
    %2411 = vmatpush.bf16.msra.mxu0 %v2158
    %2412 = vmatpush.bf16.msra.mxu0 %v2154
    %2413 = vmatpush.bf16.msra.mxu0 %v2150
    %2414 = vmatmul.bf16.gmra.mxu0 %v316
    %v2415 = vpop.f32.mrf.mxu0
    %v2416 = vadd.f32 %v1758, %v2415
    %v2417 = vpop.f32.mrf.mxu0
    %2418 = vdwg.mxu0
    %2419 = vmatpush.bf16.msra.mxu0 %v2210
    %2420 = vmatpush.bf16.msra.mxu0 %v2206
    %2421 = vmatpush.bf16.msra.mxu0 %v2202
    %2422 = vmatpush.bf16.msra.mxu0 %v2198
    %2423 = vmatpush.bf16.msra.mxu0 %v2194
    %2424 = vmatpush.bf16.msra.mxu0 %v2190
    %2425 = vmatpush.bf16.msra.mxu0 %v2186
    %2426 = vmatpush.bf16.msra.mxu0 %v2182
    %2427 = vmatmul.bf16.gmra.mxu0 %v317
    %v2428 = vpop.f32.mrf.mxu0
    %v2429 = vadd.f32 %v2416, %v2428
    %v2430 = vpop.f32.mrf.mxu0
    %2431 = vdwg.mxu0
    %2432 = vmatpush.bf16.msra.mxu0 %v2242
    %2433 = vmatpush.bf16.msra.mxu0 %v2238
    %2434 = vmatpush.bf16.msra.mxu0 %v2234
    %2435 = vmatpush.bf16.msra.mxu0 %v2230
    %2436 = vmatpush.bf16.msra.mxu0 %v2226
    %2437 = vmatpush.bf16.msra.mxu0 %v2222
    %2438 = vmatpush.bf16.msra.mxu0 %v2218
    %2439 = vmatpush.bf16.msra.mxu0 %v2214
    %2440 = vmatmul.bf16.gmra.mxu0 %v318
    %v2441 = vpop.f32.mrf.mxu0
    %v2442 = vadd.f32 %v2429, %v2441
    %v2443 = vpop.f32.mrf.mxu0
    %2444 = vdwg.mxu0
    %2445 = vmatpush.bf16.msra.mxu0 %v2274
    %2446 = vmatpush.bf16.msra.mxu0 %v2270
    %2447 = vmatpush.bf16.msra.mxu0 %v2266
    %2448 = vmatpush.bf16.msra.mxu0 %v2262
    %2449 = vmatpush.bf16.msra.mxu0 %v2258
    %2450 = vmatpush.bf16.msra.mxu0 %v2254
    %2451 = vmatpush.bf16.msra.mxu0 %v2250
    %2452 = vmatpush.bf16.msra.mxu0 %v2246
    %2453 = vmatmul.bf16.gmra.mxu0 %v319
    %v2454 = vpop.f32.mrf.mxu0
    %v2455 = vadd.f32 %v2442, %v2454
    %v2456 = vpop.f32.mrf.mxu0
    %2457 = vdwg.mxu0
    %2458 = vmatpush.bf16.msra.mxu0 %v2179
    %2459 = vmatpush.bf16.msra.mxu0 %v2175
    %2460 = vmatpush.bf16.msra.mxu0 %v2171
    %2461 = vmatpush.bf16.msra.mxu0 %v2167
    %2462 = vmatpush.bf16.msra.mxu0 %v2163
    %2463 = vmatpush.bf16.msra.mxu0 %v2159
    %2464 = vmatpush.bf16.msra.mxu0 %v2155
    %2465 = vmatpush.bf16.msra.mxu0 %v2151
    %2466 = vmatmul.bf16.gmra.mxu0 %v316
    %v2467 = vpop.f32.mrf.mxu0
    %v2468 = vadd.f32 %v1759, %v2467
    %v2469 = vpop.f32.mrf.mxu0
    %2470 = vdwg.mxu0
    %2471 = vmatpush.bf16.msra.mxu0 %v2211
    %2472 = vmatpush.bf16.msra.mxu0 %v2207
    %2473 = vmatpush.bf16.msra.mxu0 %v2203
    %2474 = vmatpush.bf16.msra.mxu0 %v2199
    %2475 = vmatpush.bf16.msra.mxu0 %v2195
    %2476 = vmatpush.bf16.msra.mxu0 %v2191
    %2477 = vmatpush.bf16.msra.mxu0 %v2187
    %2478 = vmatpush.bf16.msra.mxu0 %v2183
    %2479 = vmatmul.bf16.gmra.mxu0 %v317
    %v2480 = vpop.f32.mrf.mxu0
    %v2481 = vadd.f32 %v2468, %v2480
    %v2482 = vpop.f32.mrf.mxu0
    %2483 = vdwg.mxu0
    %2484 = vmatpush.bf16.msra.mxu0 %v2243
    %2485 = vmatpush.bf16.msra.mxu0 %v2239
    %2486 = vmatpush.bf16.msra.mxu0 %v2235
    %2487 = vmatpush.bf16.msra.mxu0 %v2231
    %2488 = vmatpush.bf16.msra.mxu0 %v2227
    %2489 = vmatpush.bf16.msra.mxu0 %v2223
    %2490 = vmatpush.bf16.msra.mxu0 %v2219
    %2491 = vmatpush.bf16.msra.mxu0 %v2215
    %2492 = vmatmul.bf16.gmra.mxu0 %v318
    %v2493 = vpop.f32.mrf.mxu0
    %v2494 = vadd.f32 %v2481, %v2493
    %v2495 = vpop.f32.mrf.mxu0
    %2496 = vdwg.mxu0
    %2497 = vmatpush.bf16.msra.mxu0 %v2275
    %2498 = vmatpush.bf16.msra.mxu0 %v2271
    %2499 = vmatpush.bf16.msra.mxu0 %v2267
    %2500 = vmatpush.bf16.msra.mxu0 %v2263
    %2501 = vmatpush.bf16.msra.mxu0 %v2259
    %2502 = vmatpush.bf16.msra.mxu0 %v2255
    %2503 = vmatpush.bf16.msra.mxu0 %v2251
    %2504 = vmatpush.bf16.msra.mxu0 %v2247
    %2505 = vmatmul.bf16.gmra.mxu0 %v319
    %v2506 = vpop.f32.mrf.mxu0
    %v2507 = vadd.f32 %v2494, %v2506
    %v2508 = vpop.f32.mrf.mxu0
    %2509 = vdwg.mxu0
    %2510 = vmatpush.bf16.msra.mxu0 %v2180
    %2511 = vmatpush.bf16.msra.mxu0 %v2176
    %2512 = vmatpush.bf16.msra.mxu0 %v2172
    %2513 = vmatpush.bf16.msra.mxu0 %v2168
    %2514 = vmatpush.bf16.msra.mxu0 %v2164
    %2515 = vmatpush.bf16.msra.mxu0 %v2160
    %2516 = vmatpush.bf16.msra.mxu0 %v2156
    %2517 = vmatpush.bf16.msra.mxu0 %v2152
    %2518 = vmatmul.bf16.gmra.mxu0 %v316
    %v2519 = vpop.f32.mrf.mxu0
    %v2520 = vadd.f32 %v1760, %v2519
    %v2521 = vpop.f32.mrf.mxu0
    %2522 = vdwg.mxu0
    %2523 = vmatpush.bf16.msra.mxu0 %v2212
    %2524 = vmatpush.bf16.msra.mxu0 %v2208
    %2525 = vmatpush.bf16.msra.mxu0 %v2204
    %2526 = vmatpush.bf16.msra.mxu0 %v2200
    %2527 = vmatpush.bf16.msra.mxu0 %v2196
    %2528 = vmatpush.bf16.msra.mxu0 %v2192
    %2529 = vmatpush.bf16.msra.mxu0 %v2188
    %2530 = vmatpush.bf16.msra.mxu0 %v2184
    %2531 = vmatmul.bf16.gmra.mxu0 %v317
    %v2532 = vpop.f32.mrf.mxu0
    %v2533 = vadd.f32 %v2520, %v2532
    %v2534 = vpop.f32.mrf.mxu0
    %2535 = vdwg.mxu0
    %2536 = vmatpush.bf16.msra.mxu0 %v2244
    %2537 = vmatpush.bf16.msra.mxu0 %v2240
    %2538 = vmatpush.bf16.msra.mxu0 %v2236
    %2539 = vmatpush.bf16.msra.mxu0 %v2232
    %2540 = vmatpush.bf16.msra.mxu0 %v2228
    %2541 = vmatpush.bf16.msra.mxu0 %v2224
    %2542 = vmatpush.bf16.msra.mxu0 %v2220
    %2543 = vmatpush.bf16.msra.mxu0 %v2216
    %2544 = vmatmul.bf16.gmra.mxu0 %v318
    %v2545 = vpop.f32.mrf.mxu0
    %v2546 = vadd.f32 %v2533, %v2545
    %v2547 = vpop.f32.mrf.mxu0
    %2548 = vdwg.mxu0
    %2549 = vmatpush.bf16.msra.mxu0 %v2276
    %2550 = vmatpush.bf16.msra.mxu0 %v2272
    %2551 = vmatpush.bf16.msra.mxu0 %v2268
    %2552 = vmatpush.bf16.msra.mxu0 %v2264
    %2553 = vmatpush.bf16.msra.mxu0 %v2260
    %2554 = vmatpush.bf16.msra.mxu0 %v2256
    %2555 = vmatpush.bf16.msra.mxu0 %v2252
    %2556 = vmatpush.bf16.msra.mxu0 %v2248
    %2557 = vmatmul.bf16.gmra.mxu0 %v319
    %v2558 = vpop.f32.mrf.mxu0
    %v2559 = vadd.f32 %v2546, %v2558
    %v2560 = vpop.f32.mrf.mxu0
    %2561 = vdwg.mxu0
    %2562 = vmatpush.bf16.msra.mxu0 %v2181
    %2563 = vmatpush.bf16.msra.mxu0 %v2177
    %2564 = vmatpush.bf16.msra.mxu0 %v2173
    %2565 = vmatpush.bf16.msra.mxu0 %v2169
    %2566 = vmatpush.bf16.msra.mxu0 %v2165
    %2567 = vmatpush.bf16.msra.mxu0 %v2161
    %2568 = vmatpush.bf16.msra.mxu0 %v2157
    %2569 = vmatpush.bf16.msra.mxu0 %v2153
    %2570 = vmatmul.bf16.gmra.mxu0 %v316
    %v2571 = vpop.f32.mrf.mxu0
    %v2572 = vadd.f32 %v1761, %v2571
    %v2573 = vpop.f32.mrf.mxu0
    %2574 = vdwg.mxu0
    %2575 = vmatpush.bf16.msra.mxu0 %v2213
    %2576 = vmatpush.bf16.msra.mxu0 %v2209
    %2577 = vmatpush.bf16.msra.mxu0 %v2205
    %2578 = vmatpush.bf16.msra.mxu0 %v2201
    %2579 = vmatpush.bf16.msra.mxu0 %v2197
    %2580 = vmatpush.bf16.msra.mxu0 %v2193
    %2581 = vmatpush.bf16.msra.mxu0 %v2189
    %2582 = vmatpush.bf16.msra.mxu0 %v2185
    %2583 = vmatmul.bf16.gmra.mxu0 %v317
    %v2584 = vpop.f32.mrf.mxu0
    %v2585 = vadd.f32 %v2572, %v2584
    %v2586 = vpop.f32.mrf.mxu0
    %2587 = vdwg.mxu0
    %2588 = vmatpush.bf16.msra.mxu0 %v2245
    %2589 = vmatpush.bf16.msra.mxu0 %v2241
    %2590 = vmatpush.bf16.msra.mxu0 %v2237
    %2591 = vmatpush.bf16.msra.mxu0 %v2233
    %2592 = vmatpush.bf16.msra.mxu0 %v2229
    %2593 = vmatpush.bf16.msra.mxu0 %v2225
    %2594 = vmatpush.bf16.msra.mxu0 %v2221
    %2595 = vmatpush.bf16.msra.mxu0 %v2217
    %2596 = vmatmul.bf16.gmra.mxu0 %v318
    %v2597 = vpop.f32.mrf.mxu0
    %v2598 = vadd.f32 %v2585, %v2597
    %v2599 = vpop.f32.mrf.mxu0
    %2600 = vdwg.mxu0
    %2601 = vmatpush.bf16.msra.mxu0 %v2277
    %2602 = vmatpush.bf16.msra.mxu0 %v2273
    %2603 = vmatpush.bf16.msra.mxu0 %v2269
    %2604 = vmatpush.bf16.msra.mxu0 %v2265
    %2605 = vmatpush.bf16.msra.mxu0 %v2261
    %2606 = vmatpush.bf16.msra.mxu0 %v2257
    %2607 = vmatpush.bf16.msra.mxu0 %v2253
    %2608 = vmatpush.bf16.msra.mxu0 %v2249
    %2609 = vmatmul.bf16.gmra.mxu0 %v319
    %v2610 = vpop.f32.mrf.mxu0
    %v2611 = vadd.f32 %v2598, %v2610
    %v2612 = vpop.f32.mrf.mxu0
    %2613 = vdwg.mxu0
    %v2614 = vmax.f32 %v2455, 0.0
    %v2615 = vmax.f32 %v2507, 0.0
    %v2616 = vmax.f32 %v2559, 0.0
    %v2617 = vmax.f32 %v2611, 0.0
    %v2618 = vpack.c.bf16 %v2614, %v2614
    %v2619 = vpack.c.bf16 %v2615, %v2615
    %v2620 = vpack.c.bf16 %v2616, %v2616
    %v2621 = vpack.c.bf16 %v2617, %v2617
    %v2622 = vld [vmem:[%s11] sm:$0xf]
    %v2623 = vld [vmem:[%s11 + $0x4] sm:$0xf]
    %v2624 = vld [vmem:[%s11 + $0x8] sm:$0xf]
    %v2625 = vld [vmem:[%s11 + $0xc] sm:$0xf]
    %v2626 = vld [vmem:[%s11 + $0x10] sm:$0xf]
    %v2627 = vld [vmem:[%s11 + $0x14] sm:$0xf]
    %v2628 = vld [vmem:[%s11 + $0x18] sm:$0xf]
    %v2629 = vld [vmem:[%s11 + $0x1c] sm:$0xf]
    %v2630 = vld [vmem:[%s11 + $0x20] sm:$0xf]
    %v2631 = vld [vmem:[%s11 + $0x24] sm:$0xf]
    %v2632 = vld [vmem:[%s11 + $0x28] sm:$0xf]
    %v2633 = vld [vmem:[%s11 + $0x2c] sm:$0xf]
    %v2634 = vld [vmem:[%s11 + $0x30] sm:$0xf]
    %v2635 = vld [vmem:[%s11 + $0x34] sm:$0xf]
    %v2636 = vld [vmem:[%s11 + $0x38] sm:$0xf]
    %v2637 = vld [vmem:[%s11 + $0x3c] sm:$0xf]
    %v2638 = vld [vmem:[%s11 + $0x40] sm:$0xf]
    %v2639 = vld [vmem:[%s11 + $0x44] sm:$0xf]
    %v2640 = vld [vmem:[%s11 + $0x48] sm:$0xf]
    %v2641 = vld [vmem:[%s11 + $0x4c] sm:$0xf]
    %v2642 = vld [vmem:[%s11 + $0x50] sm:$0xf]
    %v2643 = vld [vmem:[%s11 + $0x54] sm:$0xf]
    %v2644 = vld [vmem:[%s11 + $0x58] sm:$0xf]
    %v2645 = vld [vmem:[%s11 + $0x5c] sm:$0xf]
    %v2646 = vld [vmem:[%s11 + $0x60] sm:$0xf]
    %v2647 = vld [vmem:[%s11 + $0x64] sm:$0xf]
    %v2648 = vld [vmem:[%s11 + $0x68] sm:$0xf]
    %v2649 = vld [vmem:[%s11 + $0x6c] sm:$0xf]
    %v2650 = vld [vmem:[%s11 + $0x70] sm:$0xf]
    %v2651 = vld [vmem:[%s11 + $0x74] sm:$0xf]
    %v2652 = vld [vmem:[%s11 + $0x78] sm:$0xf]
    %v2653 = vld [vmem:[%s11 + $0x7c] sm:$0xf]
    %v2654 = vld [vmem:[%s11 + $0x80] sm:$0xf]
    %v2655 = vld [vmem:[%s11 + $0x84] sm:$0xf]
    %v2656 = vld [vmem:[%s11 + $0x88] sm:$0xf]
    %v2657 = vld [vmem:[%s11 + $0x8c] sm:$0xf]
    %v2658 = vld [vmem:[%s11 + $0x90] sm:$0xf]
    %v2659 = vld [vmem:[%s11 + $0x94] sm:$0xf]
    %v2660 = vld [vmem:[%s11 + $0x98] sm:$0xf]
    %v2661 = vld [vmem:[%s11 + $0x9c] sm:$0xf]
    %v2662 = vld [vmem:[%s11 + $0xa0] sm:$0xf]
    %v2663 = vld [vmem:[%s11 + $0xa4] sm:$0xf]
    %v2664 = vld [vmem:[%s11 + $0xa8] sm:$0xf]
    %v2665 = vld [vmem:[%s11 + $0xac] sm:$0xf]
    %v2666 = vld [vmem:[%s11 + $0xb0] sm:$0xf]
    %v2667 = vld [vmem:[%s11 + $0xb4] sm:$0xf]
    %v2668 = vld [vmem:[%s11 + $0xb8] sm:$0xf]
    %v2669 = vld [vmem:[%s11 + $0xbc] sm:$0xf]
    %v2670 = vld [vmem:[%s11 + $0xc0] sm:$0xf]
    %v2671 = vld [vmem:[%s11 + $0xc4] sm:$0xf]
    %v2672 = vld [vmem:[%s11 + $0xc8] sm:$0xf]
    %v2673 = vld [vmem:[%s11 + $0xcc] sm:$0xf]
    %v2674 = vld [vmem:[%s11 + $0xd0] sm:$0xf]
    %v2675 = vld [vmem:[%s11 + $0xd4] sm:$0xf]
    %v2676 = vld [vmem:[%s11 + $0xd8] sm:$0xf]
    %v2677 = vld [vmem:[%s11 + $0xdc] sm:$0xf]
    %v2678 = vld [vmem:[%s11 + $0xe0] sm:$0xf]
    %v2679 = vld [vmem:[%s11 + $0xe4] sm:$0xf]
    %v2680 = vld [vmem:[%s11 + $0xe8] sm:$0xf]
    %v2681 = vld [vmem:[%s11 + $0xec] sm:$0xf]
    %v2682 = vld [vmem:[%s11 + $0xf0] sm:$0xf]
    %v2683 = vld [vmem:[%s11 + $0xf4] sm:$0xf]
    %v2684 = vld [vmem:[%s11 + $0xf8] sm:$0xf]
    %v2685 = vld [vmem:[%s11 + $0xfc] sm:$0xf]
    %v2686 = vld [vmem:[%s12] sm:$0x1]
    %v2688 = vperm.slane %v2686, 0
    %v2754 = vunpack.c.l.b16 %v2622
    %v2755 = vunpack.c.l.b16 %v2623
    %v2756 = vunpack.c.l.b16 %v2624
    %v2757 = vunpack.c.l.b16 %v2625
    %v2758 = vunpack.c.l.b16 %v2626
    %v2759 = vunpack.c.l.b16 %v2627
    %v2760 = vunpack.c.l.b16 %v2628
    %v2761 = vunpack.c.l.b16 %v2629
    %v2762 = vunpack.c.l.b16 %v2630
    %v2763 = vunpack.c.l.b16 %v2631
    %v2764 = vunpack.c.l.b16 %v2632
    %v2765 = vunpack.c.l.b16 %v2633
    %v2766 = vunpack.c.l.b16 %v2634
    %v2767 = vunpack.c.l.b16 %v2635
    %v2768 = vunpack.c.l.b16 %v2636
    %v2769 = vunpack.c.l.b16 %v2637
    %v2770 = vunpack.c.l.b16 %v2638
    %v2771 = vunpack.c.l.b16 %v2639
    %v2772 = vunpack.c.l.b16 %v2640
    %v2773 = vunpack.c.l.b16 %v2641
    %v2774 = vunpack.c.l.b16 %v2642
    %v2775 = vunpack.c.l.b16 %v2643
    %v2776 = vunpack.c.l.b16 %v2644
    %v2777 = vunpack.c.l.b16 %v2645
    %v2778 = vunpack.c.l.b16 %v2646
    %v2779 = vunpack.c.l.b16 %v2647
    %v2780 = vunpack.c.l.b16 %v2648
    %v2781 = vunpack.c.l.b16 %v2649
    %v2782 = vunpack.c.l.b16 %v2650
    %v2783 = vunpack.c.l.b16 %v2651
    %v2784 = vunpack.c.l.b16 %v2652
    %v2785 = vunpack.c.l.b16 %v2653
    %v2786 = vunpack.c.l.b16 %v2654
    %v2787 = vunpack.c.l.b16 %v2655
    %v2788 = vunpack.c.l.b16 %v2656
    %v2789 = vunpack.c.l.b16 %v2657
    %v2790 = vunpack.c.l.b16 %v2658
    %v2791 = vunpack.c.l.b16 %v2659
    %v2792 = vunpack.c.l.b16 %v2660
    %v2793 = vunpack.c.l.b16 %v2661
    %v2794 = vunpack.c.l.b16 %v2662
    %v2795 = vunpack.c.l.b16 %v2663
    %v2796 = vunpack.c.l.b16 %v2664
    %v2797 = vunpack.c.l.b16 %v2665
    %v2798 = vunpack.c.l.b16 %v2666
    %v2799 = vunpack.c.l.b16 %v2667
    %v2800 = vunpack.c.l.b16 %v2668
    %v2801 = vunpack.c.l.b16 %v2669
    %v2802 = vunpack.c.l.b16 %v2670
    %v2803 = vunpack.c.l.b16 %v2671
    %v2804 = vunpack.c.l.b16 %v2672
    %v2805 = vunpack.c.l.b16 %v2673
    %v2806 = vunpack.c.l.b16 %v2674
    %v2807 = vunpack.c.l.b16 %v2675
    %v2808 = vunpack.c.l.b16 %v2676
    %v2809 = vunpack.c.l.b16 %v2677
    %v2810 = vunpack.c.l.b16 %v2678
    %v2811 = vunpack.c.l.b16 %v2679
    %v2812 = vunpack.c.l.b16 %v2680
    %v2813 = vunpack.c.l.b16 %v2681
    %v2814 = vunpack.c.l.b16 %v2682
    %v2815 = vunpack.c.l.b16 %v2683
    %v2816 = vunpack.c.l.b16 %v2684
    %v2817 = vunpack.c.l.b16 %v2685
    %v2818 = vpack.c.b16 %v2755, %v2754
    %v2819 = vpack.c.b16 %v2757, %v2756
    %v2820 = vpack.c.b16 %v2759, %v2758
    %v2821 = vpack.c.b16 %v2761, %v2760
    %v2822 = vpack.c.b16 %v2763, %v2762
    %v2823 = vpack.c.b16 %v2765, %v2764
    %v2824 = vpack.c.b16 %v2767, %v2766
    %v2825 = vpack.c.b16 %v2769, %v2768
    %v2826 = vpack.c.b16 %v2771, %v2770
    %v2827 = vpack.c.b16 %v2773, %v2772
    %v2828 = vpack.c.b16 %v2775, %v2774
    %v2829 = vpack.c.b16 %v2777, %v2776
    %v2830 = vpack.c.b16 %v2779, %v2778
    %v2831 = vpack.c.b16 %v2781, %v2780
    %v2832 = vpack.c.b16 %v2783, %v2782
    %v2833 = vpack.c.b16 %v2785, %v2784
    %v2834 = vpack.c.b16 %v2787, %v2786
    %v2835 = vpack.c.b16 %v2789, %v2788
    %v2836 = vpack.c.b16 %v2791, %v2790
    %v2837 = vpack.c.b16 %v2793, %v2792
    %v2838 = vpack.c.b16 %v2795, %v2794
    %v2839 = vpack.c.b16 %v2797, %v2796
    %v2840 = vpack.c.b16 %v2799, %v2798
    %v2841 = vpack.c.b16 %v2801, %v2800
    %v2842 = vpack.c.b16 %v2803, %v2802
    %v2843 = vpack.c.b16 %v2805, %v2804
    %v2844 = vpack.c.b16 %v2807, %v2806
    %v2845 = vpack.c.b16 %v2809, %v2808
    %v2846 = vpack.c.b16 %v2811, %v2810
    %v2847 = vpack.c.b16 %v2813, %v2812
    %v2848 = vpack.c.b16 %v2815, %v2814
    %v2849 = vpack.c.b16 %v2817, %v2816
    %2882 = vmatpush.bf16.msra.mxu0 %v2825
    %2883 = vmatpush.bf16.msra.mxu0 %v2824
    %2884 = vmatpush.bf16.msra.mxu0 %v2823
    %2885 = vmatpush.bf16.msra.mxu0 %v2822
    %2886 = vmatpush.bf16.msra.mxu0 %v2821
    %2887 = vmatpush.bf16.msra.mxu0 %v2820
    %2888 = vmatpush.bf16.msra.mxu0 %v2819
    %2889 = vmatpush.bf16.msra.mxu0 %v2818
    %2890 = vmatmul.bf16.gmra.mxu0 %v2618
    %v2891 = vpop.f32.mrf.mxu0
    %v2892 = vadd.f32 %v2688, %v2891
    %v2893 = vpop.f32.mrf.mxu0
    %2894 = vdwg.mxu0
    %2895 = vmatpush.bf16.msra.mxu0 %v2833
    %2896 = vmatpush.bf16.msra.mxu0 %v2832
    %2897 = vmatpush.bf16.msra.mxu0 %v2831
    %2898 = vmatpush.bf16.msra.mxu0 %v2830
    %2899 = vmatpush.bf16.msra.mxu0 %v2829
    %2900 = vmatpush.bf16.msra.mxu0 %v2828
    %2901 = vmatpush.bf16.msra.mxu0 %v2827
    %2902 = vmatpush.bf16.msra.mxu0 %v2826
    %2903 = vmatmul.bf16.gmra.mxu0 %v2619
    %v2904 = vpop.f32.mrf.mxu0
    %v2905 = vadd.f32 %v2892, %v2904
    %v2906 = vpop.f32.mrf.mxu0
    %2907 = vdwg.mxu0
    %2908 = vmatpush.bf16.msra.mxu0 %v2841
    %2909 = vmatpush.bf16.msra.mxu0 %v2840
    %2910 = vmatpush.bf16.msra.mxu0 %v2839
    %2911 = vmatpush.bf16.msra.mxu0 %v2838
    %2912 = vmatpush.bf16.msra.mxu0 %v2837
    %2913 = vmatpush.bf16.msra.mxu0 %v2836
    %2914 = vmatpush.bf16.msra.mxu0 %v2835
    %2915 = vmatpush.bf16.msra.mxu0 %v2834
    %2916 = vmatmul.bf16.gmra.mxu0 %v2620
    %v2917 = vpop.f32.mrf.mxu0
    %v2918 = vadd.f32 %v2905, %v2917
    %v2919 = vpop.f32.mrf.mxu0
    %2920 = vdwg.mxu0
    %2921 = vmatpush.bf16.msra.mxu0 %v2849
    %2922 = vmatpush.bf16.msra.mxu0 %v2848
    %2923 = vmatpush.bf16.msra.mxu0 %v2847
    %2924 = vmatpush.bf16.msra.mxu0 %v2846
    %2925 = vmatpush.bf16.msra.mxu0 %v2845
    %2926 = vmatpush.bf16.msra.mxu0 %v2844
    %2927 = vmatpush.bf16.msra.mxu0 %v2843
    %2928 = vmatpush.bf16.msra.mxu0 %v2842
    %2929 = vmatmul.bf16.gmra.mxu0 %v2621
    %v2930 = vpop.f32.mrf.mxu0
    %v2931 = vadd.f32 %v2918, %v2930
    %v2932 = vpop.f32.mrf.mxu0
    %2933 = vdwg.mxu0
    %vm2934 = vcmask 25600
    %v2935 = vsel %vm2934, %v2931, -inf
    %2936 = vmax.xlane.f32.xlu0 %v2935
    %v2937 = vpop.xlane.xlu0 %2936
    %v2938 = vsub.f32 %v2931, %v2937
    %v2939 = vmul.f32 %v2938, 1.442695
    %v2940 = vpow.pop %v2939
    %v2941 = vsel %vm2934, %v2940, 0.0
    %2942 = vadd.xlane.f32.xlu0 %v2941
    %v2943 = vpop.xlane.xlu0 %2942
    %v2944 = vrcp.pop %v2943
    %v2945 = vmul.f32 %v2943, %v2944
    %v2946 = vsub.f32 1.0, %v2945
    %v2947 = vmul.f32 %v2944, %v2946
    %v2948 = vadd.f32 %v2944, %v2947
    %vm2949 = vweird.f32 %v2943
    %vm2950 = vweird.f32 %v2944
    %vm2951 = vmor %vm2949, %vm2950
    %v2952 = vsel %vm2951, %v2944, %v2948
    %v2953 = vand.u32 2147483647, %v2943
    %vm2954 = vcmp.eq.f32.partialorder %v2953, 8.507059e+37
    %v2955 = vand.u32 %v2943, 2147483648
    %v2956 = vor.u32 1.1754944e-38, %v2955
    %v2957 = vsel %vm2954, %v2956, %v2952
    %v2958 = vmul.f32 %v2940, %v2957
    %2959 = vst.msk [vmem:[#allocation7] sm:$0x3] %vm2934, %v2958
    %v2960 = vld [vmem:[%s0] sm:$0x3]
    %v2961 = vadd.f32 %v2931, %v2960
    %v2962 = vlaneseq
    %v2963 = vand.u32 %v2962, 127
    %v2964 = vsel %vm2934, %v2961, -inf
    %2965 = vmax.xlane.f32.xlu0 %v2964
    %v2966 = vpop.xlane.xlu0 %2965
    %vm2967 = vcmp.ge.f32.partialorder %v2961, %v2966
    %v2968 = vsel %vm2967, %v2963, 4
    %v2969 = vsel %vm2934, %v2968, 2147483647
    %v2970 = vand.u32 %v2969, 65535
    %v2971 = vshra.s32 %v2969, 16
    %v2972 = vcvt.s32.f32 %v2970
    %v2973 = vcvt.s32.f32 %v2971
    %2974 = vmin.xlane.f32.xlu0 %v2973
    %v2975 = vpop.xlane.xlu0 %2974
    %vm2976 = vcmp.eq.f32.partialorder %v2973, %v2975
    %v2977 = vsel %vm2976, %v2972, inf
    %2978 = vmin.xlane.f32.xlu0 %v2977
    %v2979 = vpop.xlane.xlu0 %2978
    %v2980 = vcvt.f32.s32 %v2979
    %v2981 = vcvt.f32.s32 %v2975
    %v2982 = vshll.u32 %v2981, 16
    %v2983 = vadd.s32 %v2982, %v2980
    %vm2984 = vcmp.eq.s32.totalorder %v2963, %v2983
    %v2985 = vsel %vm2984, 1, 0
    %v2986 = vcvt.s32.f32 %v2985
    %2987 = vst.msk [vmem:[#allocation6] sm:$0x3] %vm2934, %v2986
    %v2988 = vld [vmem:[%s2] sm:$0x1]
    %v2989 = vld [vmem:[%s13] sm:$0xff]
    %v2990 = vld [vmem:[%s13 + $0x8] sm:$0xff]
    %v2991 = vld [vmem:[%s13 + $0x10] sm:$0xff]
    %v2992 = vld [vmem:[%s13 + $0x18] sm:$0xff]
    %v2993 = vld [vmem:[%s13 + $0x20] sm:$0xff]
    %v2994 = vld [vmem:[%s13 + $0x28] sm:$0xff]
    %v2995 = vld [vmem:[%s13 + $0x30] sm:$0xff]
    %v2996 = vld [vmem:[%s13 + $0x38] sm:$0xff]
    %v2997 = vld [vmem:[%s13 + $0x40] sm:$0xff]
    %v2998 = vld [vmem:[%s13 + $0x48] sm:$0xff]
    %v2999 = vld [vmem:[%s13 + $0x50] sm:$0xff]
    %v3000 = vld [vmem:[%s13 + $0x58] sm:$0xff]
    %v3001 = vld [vmem:[%s13 + $0x60] sm:$0xff]
    %v3002 = vld [vmem:[%s13 + $0x68] sm:$0xff]
    %v3003 = vld [vmem:[%s13 + $0x70] sm:$0xff]
    %v3004 = vld [vmem:[%s13 + $0x78] sm:$0xff]
    %v3005 = vld [vmem:[%s13 + $0x80] sm:$0xff]
    %v3006 = vld [vmem:[%s13 + $0x88] sm:$0xff]
    %v3007 = vld [vmem:[%s13 + $0x90] sm:$0xff]
    %v3008 = vld [vmem:[%s13 + $0x98] sm:$0xff]
    %v3009 = vld [vmem:[%s13 + $0xa0] sm:$0xff]
    %v3010 = vld [vmem:[%s13 + $0xa8] sm:$0xff]
    %v3011 = vld [vmem:[%s13 + $0xb0] sm:$0xff]
    %v3012 = vld [vmem:[%s13 + $0xb8] sm:$0xff]
    %v3013 = vld [vmem:[%s13 + $0xc0] sm:$0xff]
    %v3014 = vld [vmem:[%s13 + $0xc8] sm:$0xff]
    %v3015 = vld [vmem:[%s13 + $0xd0] sm:$0xff]
    %v3016 = vld [vmem:[%s13 + $0xd8] sm:$0xff]
    %v3017 = vld [vmem:[%s13 + $0xe0] sm:$0xff]
    %v3018 = vld [vmem:[%s13 + $0xe8] sm:$0xff]
    %v3019 = vld [vmem:[%s13 + $0xf0] sm:$0xff]
    %v3020 = vld [vmem:[%s13 + $0xf8] sm:$0xff]
    %v3021 = vld [vmem:[%s14] sm:$0xf]
    %v3023 = vperm.slane %v3021, 0
    %v3024 = vperm.slane %v3021, 1
    %v3025 = vperm.slane %v3021, 2
    %v3026 = vperm.slane %v3021, 3
    %v3063 = vunpack.c.l.b16 %v2989
    %v3064 = vunpack.c.h.b16 %v2989
    %v3065 = vunpack.c.l.b16 %v2990
    %v3066 = vunpack.c.h.b16 %v2990
    %v3067 = vunpack.c.l.b16 %v2991
    %v3068 = vunpack.c.h.b16 %v2991
    %v3069 = vunpack.c.l.b16 %v2992
    %v3070 = vunpack.c.h.b16 %v2992
    %v3071 = vunpack.c.l.b16 %v2993
    %v3072 = vunpack.c.h.b16 %v2993
    %v3073 = vunpack.c.l.b16 %v2994
    %v3074 = vunpack.c.h.b16 %v2994
    %v3075 = vunpack.c.l.b16 %v2995
    %v3076 = vunpack.c.h.b16 %v2995
    %v3077 = vunpack.c.l.b16 %v2996
    %v3078 = vunpack.c.h.b16 %v2996
    %v3079 = vunpack.c.l.b16 %v2997
    %v3080 = vunpack.c.h.b16 %v2997
    %v3081 = vunpack.c.l.b16 %v2998
    %v3082 = vunpack.c.h.b16 %v2998
    %v3083 = vunpack.c.l.b16 %v2999
    %v3084 = vunpack.c.h.b16 %v2999
    %v3085 = vunpack.c.l.b16 %v3000
    %v3086 = vunpack.c.h.b16 %v3000
    %v3087 = vunpack.c.l.b16 %v3001
    %v3088 = vunpack.c.h.b16 %v3001
    %v3089 = vunpack.c.l.b16 %v3002
    %v3090 = vunpack.c.h.b16 %v3002
    %v3091 = vunpack.c.l.b16 %v3003
    %v3092 = vunpack.c.h.b16 %v3003
    %v3093 = vunpack.c.l.b16 %v3004
    %v3094 = vunpack.c.h.b16 %v3004
    %v3095 = vunpack.c.l.b16 %v3005
    %v3096 = vunpack.c.h.b16 %v3005
    %v3097 = vunpack.c.l.b16 %v3006
    %v3098 = vunpack.c.h.b16 %v3006
    %v3099 = vunpack.c.l.b16 %v3007
    %v3100 = vunpack.c.h.b16 %v3007
    %v3101 = vunpack.c.l.b16 %v3008
    %v3102 = vunpack.c.h.b16 %v3008
    %v3103 = vunpack.c.l.b16 %v3009
    %v3104 = vunpack.c.h.b16 %v3009
    %v3105 = vunpack.c.l.b16 %v3010
    %v3106 = vunpack.c.h.b16 %v3010
    %v3107 = vunpack.c.l.b16 %v3011
    %v3108 = vunpack.c.h.b16 %v3011
    %v3109 = vunpack.c.l.b16 %v3012
    %v3110 = vunpack.c.h.b16 %v3012
    %v3111 = vunpack.c.l.b16 %v3013
    %v3112 = vunpack.c.h.b16 %v3013
    %v3113 = vunpack.c.l.b16 %v3014
    %v3114 = vunpack.c.h.b16 %v3014
    %v3115 = vunpack.c.l.b16 %v3015
    %v3116 = vunpack.c.h.b16 %v3015
    %v3117 = vunpack.c.l.b16 %v3016
    %v3118 = vunpack.c.h.b16 %v3016
    %v3119 = vunpack.c.l.b16 %v3017
    %v3120 = vunpack.c.h.b16 %v3017
    %v3121 = vunpack.c.l.b16 %v3018
    %v3122 = vunpack.c.h.b16 %v3018
    %v3123 = vunpack.c.l.b16 %v3019
    %v3124 = vunpack.c.h.b16 %v3019
    %v3125 = vunpack.c.l.b16 %v3020
    %v3126 = vunpack.c.h.b16 %v3020
    %v3127 = vpack.c.b16 %v3067, %v3063
    %v3128 = vpack.c.b16 %v3068, %v3064
    %v3129 = vpack.c.b16 %v3069, %v3065
    %v3130 = vpack.c.b16 %v3070, %v3066
    %v3131 = vpack.c.b16 %v3075, %v3071
    %v3132 = vpack.c.b16 %v3076, %v3072
    %v3133 = vpack.c.b16 %v3077, %v3073
    %v3134 = vpack.c.b16 %v3078, %v3074
    %v3135 = vpack.c.b16 %v3083, %v3079
    %v3136 = vpack.c.b16 %v3084, %v3080
    %v3137 = vpack.c.b16 %v3085, %v3081
    %v3138 = vpack.c.b16 %v3086, %v3082
    %v3139 = vpack.c.b16 %v3091, %v3087
    %v3140 = vpack.c.b16 %v3092, %v3088
    %v3141 = vpack.c.b16 %v3093, %v3089
    %v3142 = vpack.c.b16 %v3094, %v3090
    %v3143 = vpack.c.b16 %v3099, %v3095
    %v3144 = vpack.c.b16 %v3100, %v3096
    %v3145 = vpack.c.b16 %v3101, %v3097
    %v3146 = vpack.c.b16 %v3102, %v3098
    %v3147 = vpack.c.b16 %v3107, %v3103
    %v3148 = vpack.c.b16 %v3108, %v3104
    %v3149 = vpack.c.b16 %v3109, %v3105
    %v3150 = vpack.c.b16 %v3110, %v3106
    %v3151 = vpack.c.b16 %v3115, %v3111
    %v3152 = vpack.c.b16 %v3116, %v3112
    %v3153 = vpack.c.b16 %v3117, %v3113
    %v3154 = vpack.c.b16 %v3118, %v3114
    %v3155 = vpack.c.b16 %v3123, %v3119
    %v3156 = vpack.c.b16 %v3124, %v3120
    %v3157 = vpack.c.b16 %v3125, %v3121
    %v3158 = vpack.c.b16 %v3126, %v3122
    %3191 = vmatpush.bf16.msra.mxu0 %v3155
    %3192 = vmatpush.bf16.msra.mxu0 %v3151
    %3193 = vmatpush.bf16.msra.mxu0 %v3147
    %3194 = vmatpush.bf16.msra.mxu0 %v3143
    %3195 = vmatpush.bf16.msra.mxu0 %v3139
    %3196 = vmatpush.bf16.msra.mxu0 %v3135
    %3197 = vmatpush.bf16.msra.mxu0 %v3131
    %3198 = vmatpush.bf16.msra.mxu0 %v3127
    %3199 = vmatmul.bf16.gmra.mxu0 %v2988
    %v3200 = vpop.f32.mrf.mxu0
    %v3201 = vadd.f32 %v3023, %v3200
    %v3202 = vpop.f32.mrf.mxu0
    %3203 = vdwg.mxu0
    %3204 = vmatpush.bf16.msra.mxu0 %v3156
    %3205 = vmatpush.bf16.msra.mxu0 %v3152
    %3206 = vmatpush.bf16.msra.mxu0 %v3148
    %3207 = vmatpush.bf16.msra.mxu0 %v3144
    %3208 = vmatpush.bf16.msra.mxu0 %v3140
    %3209 = vmatpush.bf16.msra.mxu0 %v3136
    %3210 = vmatpush.bf16.msra.mxu0 %v3132
    %3211 = vmatpush.bf16.msra.mxu0 %v3128
    %3212 = vmatmul.bf16.gmra.mxu0 %v2988
    %v3213 = vpop.f32.mrf.mxu0
    %v3214 = vadd.f32 %v3024, %v3213
    %v3215 = vpop.f32.mrf.mxu0
    %3216 = vdwg.mxu0
    %3217 = vmatpush.bf16.msra.mxu0 %v3157
    %3218 = vmatpush.bf16.msra.mxu0 %v3153
    %3219 = vmatpush.bf16.msra.mxu0 %v3149
    %3220 = vmatpush.bf16.msra.mxu0 %v3145
    %3221 = vmatpush.bf16.msra.mxu0 %v3141
    %3222 = vmatpush.bf16.msra.mxu0 %v3137
    %3223 = vmatpush.bf16.msra.mxu0 %v3133
    %3224 = vmatpush.bf16.msra.mxu0 %v3129
    %3225 = vmatmul.bf16.gmra.mxu0 %v2988
    %v3226 = vpop.f32.mrf.mxu0
    %v3227 = vadd.f32 %v3025, %v3226
    %v3228 = vpop.f32.mrf.mxu0
    %3229 = vdwg.mxu0
    %3230 = vmatpush.bf16.msra.mxu0 %v3158
    %3231 = vmatpush.bf16.msra.mxu0 %v3154
    %3232 = vmatpush.bf16.msra.mxu0 %v3150
    %3233 = vmatpush.bf16.msra.mxu0 %v3146
    %3234 = vmatpush.bf16.msra.mxu0 %v3142
    %3235 = vmatpush.bf16.msra.mxu0 %v3138
    %3236 = vmatpush.bf16.msra.mxu0 %v3134
    %3237 = vmatpush.bf16.msra.mxu0 %v3130
    %3238 = vmatmul.bf16.gmra.mxu0 %v2988
    %v3239 = vpop.f32.mrf.mxu0
    %v3240 = vadd.f32 %v3026, %v3239
    %v3241 = vpop.f32.mrf.mxu0
    %3242 = vdwg.mxu0
    %v3247 = vrot.slane %v3214, 6
    %v3248 = vrot.slane %v3227, 4
    %v3249 = vrot.slane %v3240, 2
    %vm3250 = vcmask 1041408
    %v3251 = vsel %vm3250, %v3201, %v3247
    %vm3252 = vcmask 1045508
    %v3253 = vsel %vm3252, %v3248, %v3249
    %vm3254 = vcmask 1043456
    %v3255 = vsel %vm3254, %v3251, %v3253
    %3257 = vst [vmem:[#allocation2] sm:$0xff] %v3255
    // Predicated region
    $region62: #{ppo_atari_snd_forward.17} parent=1 // pred_check
      _
    $region63: #{ppo_atari_snd_forward.17} parent=1 // pred_check_branch
      %3259 = sbr.rel (0) target = $region65
    $region64: #{ppo_atari_snd_forward.17} parent=1 // pred_region
      %3261 = vsyncadd [#allocation3], 0
      %s3263 = sshll.u32 [#allocation2], 4
      %s3264 = int_to_ptr.vmem [resolvable:$true] %s3263
      %s3265 = sshll.u32 %s15, 4
      %s3266 = int_to_ptr.hbm [resolvable:$true] %s3265
      %3268 = dma.vmem_to_hbm [thread:$0]  %s3264, 128, %s3266, [#allocation3]
    $region65: #{ppo_atari_snd_forward.17} parent=1 // pred_fallthru
      _
    // Predicated region
    $region66: #{ppo_atari_snd_forward.17} parent=1 // pred_check
      _
    $region67: #{ppo_atari_snd_forward.17} parent=1 // pred_check_branch
      %3270 = sbr.rel (0) target = $region69
    $region68: #{ppo_atari_snd_forward.17} parent=1 // pred_region
      %3272 = vsyncadd [#allocation5], 0
      %s3274 = sshll.u32 [#allocation4], 4
      %s3275 = int_to_ptr.vmem [resolvable:$true] %s3274
      %s3276 = sshll.u32 %s16, 4
      %s3277 = int_to_ptr.hbm [resolvable:$true] %s3276
      %3279 = dma.vmem_to_hbm [thread:$0]  %s3275, 32, %s3277, [#allocation5]
    $region69: #{ppo_atari_snd_forward.17} parent=1 // pred_fallthru
      _
    // Predicated region
    $region70: #{ppo_atari_snd_forward.17} parent=1 // pred_check
      _
    $region71: #{ppo_atari_snd_forward.17} parent=1 // pred_check_branch
      %3281 = sbr.rel (0) target = $region73
    $region72: #{ppo_atari_snd_forward.17} parent=1 // pred_region
      %3283 = vsyncadd [#allocation5], 0
      %s3285 = sshll.u32 [#allocation6], 4
      %s3286 = int_to_ptr.vmem [resolvable:$true] %s3285
      %s3287 = sshll.u32 %s17, 4
      %s3288 = int_to_ptr.hbm [resolvable:$true] %s3287
      %3290 = dma.vmem_to_hbm [thread:$0]  %s3286, 32, %s3288, [#allocation5]
    $region73: #{ppo_atari_snd_forward.17} parent=1 // pred_fallthru
      _
    // Predicated region
    $region74: #{ppo_atari_snd_forward.17} parent=1 // pred_check
      _
    $region75: #{ppo_atari_snd_forward.17} parent=1 // pred_check_branch
      %3292 = sbr.rel (0) target = $region77
    $region76: #{ppo_atari_snd_forward.17} parent=1 // pred_region
      %3294 = vsyncadd [#allocation8], 0
      %s3296 = sshll.u32 [#allocation7], 4
      %s3297 = int_to_ptr.vmem [resolvable:$true] %s3296
      %s3298 = sshll.u32 %s18, 4
      %s3299 = int_to_ptr.hbm [resolvable:$true] %s3298
      %3301 = dma.vmem_to_hbm [thread:$0]  %s3297, 32, %s3299, [#allocation8]
    $region77: #{ppo_atari_snd_forward.17} parent=1 // pred_fallthru
      _
    // Predicated region
    $region78: #{ppo_atari_snd_forward.17} parent=1 // pred_check
      _
    $region79: #{ppo_atari_snd_forward.17} parent=1 // pred_check_branch
      %3303 = sbr.rel (0) target = $region81
    $region80: #{ppo_atari_snd_forward.17} parent=1 // pred_region
      %3305 = dma.done [#allocation3], 128
    $region81: #{ppo_atari_snd_forward.17} parent=1 // pred_fallthru
      _
    // Predicated region
    $region82: #{ppo_atari_snd_forward.17} parent=1 // pred_check
      _
    $region83: #{ppo_atari_snd_forward.17} parent=1 // pred_check_branch
      %3307 = sbr.rel (0) target = $region85
    $region84: #{ppo_atari_snd_forward.17} parent=1 // pred_region
      %3309 = dma.done [#allocation5], 32
    $region85: #{ppo_atari_snd_forward.17} parent=1 // pred_fallthru
      _
    // Predicated region
    $region86: #{ppo_atari_snd_forward.17} parent=1 // pred_check
      _
    $region87: #{ppo_atari_snd_forward.17} parent=1 // pred_check_branch
      %3311 = sbr.rel (0) target = $region89
    $region88: #{ppo_atari_snd_forward.17} parent=1 // pred_region
      %3313 = dma.done [#allocation5], 32
    $region89: #{ppo_atari_snd_forward.17} parent=1 // pred_fallthru
      _
    // Predicated region
    $region90: #{ppo_atari_snd_forward.17} parent=1 // pred_check
      _
    $region91: #{ppo_atari_snd_forward.17} parent=1 // pred_check_branch
      %3315 = sbr.rel (0) target = $region93
    $region92: #{ppo_atari_snd_forward.17} parent=1 // pred_region
      %3317 = dma.done [#allocation8], 32
    $region93: #{ppo_atari_snd_forward.17} parent=1 // pred_fallthru
      _
    %3318 = vsyncpa [#allocation3], 1
    %3319 = vsyncpa [#allocation5], 1
    %3320 = vsyncpa [#allocation8], 1

</llo_original>
